<compile_context>
chip_gen: v5e
topology: v5e:2x2
jax: 0.10.0
libtpu: 0.0.40
codegen_flags: <defaults>
</compile_context>

<pallas_src>
import math

import jax
import jax.numpy as jnp
from jax import lax
from jax.experimental import pallas as pl
from jax.experimental.pallas import tpu as pltpu  # noqa: F401

# ----------------------------- config (shrunk) -------------------------------
VISION_EMBED = 128        # vision_embed_dim
TEXT_EMBED = 128          # text_embed_dim
AUDIO_EMBED = 128         # audio_embed_dim
FUSION_EMBED = 128        # fusion_embed_dim
HIDDEN = 64               # hidden_dim
FRAME_H = FRAME_W = 16    # target_frame_size
FRAME_DIM = 3 * FRAME_H * FRAME_W            # 768
NUM_FRAMES = 8
NUM_HEADS = 4
HEAD_DIM_VID = VISION_EMBED // NUM_HEADS     # 32
HEAD_DIM_FUS = FUSION_EMBED // NUM_HEADS     # 32
FFN_DIM = FUSION_EMBED * 2                   # 256
NUM_FUSION_LAYERS = 2
NUM_MODALITIES = 4
META_DIM = 5
META_PAD = 128                               # metadata padded width in feature slab
FEAT_WIDTH = AUDIO_EMBED + TEXT_EMBED + META_PAD   # 384
HEADS_PAD = 128                              # lane-dense padded head output
LN_EPS = 1e-5
BATCH = 2

BF16 = jnp.bfloat16
F32 = jnp.float32

# ----------------------------- weight-slab layout ----------------------------
# W128 slab (bf16, 128 columns)
OFF_V_WF = 0
OFF_V_WO = OFF_V_WF + FRAME_DIM
OFF_V_WP = OFF_V_WO + VISION_EMBED
OFF_A_W2 = OFF_V_WP + VISION_EMBED
OFF_T_W2 = OFF_A_W2 + HIDDEN
OFF_M_W2 = OFF_T_W2 + HIDDEN
OFF_F_WO = OFF_M_W2 + HIDDEN                               # + l * FUSION_EMBED
OFF_F_W2 = OFF_F_WO + NUM_FUSION_LAYERS * FUSION_EMBED     # + l * FFN_DIM
OFF_H_W2 = OFF_F_W2 + NUM_FUSION_LAYERS * FFN_DIM
W128_ROWS = OFF_H_W2 + 4 * HIDDEN

# W256 slab (bf16, 256 columns)
OFF_F_W1 = 0                                               # + l * FUSION_EMBED
OFF_H_W1 = NUM_FUSION_LAYERS * FUSION_EMBED                # + s * FUSION_EMBED
W256_ROWS = OFF_H_W1 + NUM_MODALITIES * FUSION_EMBED

# W384 slab (bf16, 384 columns) -- fused QKV projections
OFF_V_WQKV = 0
OFF_F_WQKV = VISION_EMBED                                  # + l * FUSION_EMBED
W384_ROWS = OFF_F_WQKV + NUM_FUSION_LAYERS * FUSION_EMBED

# W64 slab (bf16, 64 columns)
OFF_A_W1 = 0
OFF_T_W1 = AUDIO_EMBED
OFF_M_W1 = OFF_T_W1 + TEXT_EMBED
W64_ROWS = OFF_M_W1 + META_PAD

# BIAS slab (f32, 384 columns) -- one bias / LayerNorm vector per row
BR_V_BF, BR_V_BQKV, BR_V_BO, BR_V_BP = 0, 1, 2, 3
BR_A_B1, BR_A_B2, BR_T_B1, BR_T_B2 = 4, 5, 6, 7
BR_M_B1, BR_M_B2 = 8, 9
BR_F_BQKV, BR_F_BO, BR_F_B1, BR_F_B2 = 10, 12, 14, 16      # + layer index
BR_F_G1, BR_F_BE1, BR_F_G2, BR_F_BE2 = 18, 20, 22, 24      # + layer index
BR_H_B1, BR_H_B2 = 26, 27
BIAS_ROWS = 32
BIAS_COLS = 384


# ----------------------------- fused kernel ----------------------------------
def _fused_kernel(frames_ref, feat_ref,
                  w64_ref, w128_ref, w256_ref, w384_ref, bias_ref,
                  fused_ref, heads_ref):
    B = frames_ref.shape[0] // NUM_FRAMES
    S = NUM_MODALITIES
    D = FUSION_EMBED
    E = VISION_EMBED

    def bias(row, width):
        return bias_ref[row:row + 1, 0:width]                         # (1, width) f32

    def dense(x, w_ref, row0, nrows, b_row):
        """x @ W + b with bf16 MXU operands and f32 accumulation."""
        w = w_ref[row0:row0 + nrows, :]                                # (nrows, width) bf16
        return (jnp.dot(x.astype(BF16), w, preferred_element_type=F32)
                + bias(b_row, w.shape[1]))

    def layer_norm(y, g_row, b_row):
        mu = jnp.mean(y, axis=-1, keepdims=True)
        var = jnp.mean((y - mu) ** 2, axis=-1, keepdims=True)
        return ((y - mu) * lax.rsqrt(var + LN_EPS) * bias(g_row, D)
                + bias(b_row, D))

    def mha(q3, k3, v2, wo_off, bo_row, head_dim):
        """Self-attention.  q3/k3: (b, s, E) with q3 pre-scaled; v2: (b*s, E).

        Per head h: out += softmax(Q_h K_h^T) (V_h W_o[h]) -- the value slice
        is projected through its W_o row-block first so head outputs are
        accumulated (VPU adds) instead of lane-concatenated (XLU relayout)."""
        nb, ns, _ = q3.shape
        out3 = None
        for h in range(NUM_HEADS):
            c0 = h * head_dim
            qh = q3[:, :, c0:c0 + head_dim].astype(BF16)
            kh = k3[:, :, c0:c0 + head_dim].astype(BF16)
            wo_h = w128_ref[wo_off + c0:wo_off + c0 + head_dim, :]     # (hd, E) bf16
            vproj = jnp.dot(v2[:, c0:c0 + head_dim].astype(BF16), wo_h,
                            preferred_element_type=F32)                # (nb*ns, E)
            vproj3 = vproj.reshape(nb, ns, E).astype(BF16)
            s = jnp.einsum('bqd,bkd->bqk', qh, kh, preferred_element_type=F32)
            s = s - jnp.max(s, axis=-1, keepdims=True)
            p = jnp.exp(s)
            p = p * pl.reciprocal(jnp.sum(p, axis=-1, keepdims=True), approx=True)
            oh = jnp.einsum('bqk,bkd->bqd', p.astype(BF16), vproj3,
                            preferred_element_type=F32)                # (nb, ns, E)
            out3 = oh if out3 is None else out3 + oh
        return out3.reshape(nb * ns, E) + bias(bo_row, E)

    # ---------------- TemporalVideoEncoder (whole batch at once) -------------
    frames = frames_ref[...]                                           # (B*F, 768) bf16
    hframe = jnp.maximum(dense(frames, w128_ref, OFF_V_WF, FRAME_DIM, BR_V_BF), 0.0)
    qkv = dense(hframe, w384_ref, OFF_V_WQKV, VISION_EMBED, BR_V_BQKV)  # (B*F, 3E)
    q3 = (qkv[:, 0:E] * (1.0 / math.sqrt(HEAD_DIM_VID))).reshape(B, NUM_FRAMES, E)
    k3 = qkv[:, E:2 * E].reshape(B, NUM_FRAMES, E)
    v2 = qkv[:, 2 * E:3 * E]                                           # (B*F, E)
    attn = mha(q3, k3, v2, OFF_V_WO, BR_V_BO, HEAD_DIM_VID)            # (B*F, E)
    pooled = jnp.mean(attn.reshape(B, NUM_FRAMES, E), axis=1)          # (B, E)
    video_emb = dense(pooled, w128_ref, OFF_V_WP, VISION_EMBED, BR_V_BP)  # (B, D)

    # ---------------- Audio / Text / Metadata encoders -----------------------
    audio_x = feat_ref[:, 0:AUDIO_EMBED]
    text_x = feat_ref[:, AUDIO_EMBED:AUDIO_EMBED + TEXT_EMBED]
    meta_x = feat_ref[:, AUDIO_EMBED + TEXT_EMBED:FEAT_WIDTH]          # zero-padded

    audio_emb = dense(
        jnp.maximum(dense(audio_x, w64_ref, OFF_A_W1, AUDIO_EMBED, BR_A_B1), 0.0),
        w128_ref, OFF_A_W2, HIDDEN, BR_A_B2)
    text_emb = dense(
        jnp.maximum(dense(text_x, w64_ref, OFF_T_W1, TEXT_EMBED, BR_T_B1), 0.0),
        w128_ref, OFF_T_W2, HIDDEN, BR_T_B2)
    meta_emb = dense(
        jnp.maximum(dense(meta_x, w64_ref, OFF_M_W1, META_PAD, BR_M_B1), 0.0),
        w128_ref, OFF_M_W2, HIDDEN, BR_M_B2)

    # ---------------- modality token rows (token-major, (B*S, D)) ------------
    # direct row stores into the lane/sublane-dense output tile (no axis-1
    # concat / sublane interleave).
    embs = (video_emb, audio_emb, text_emb, meta_emb)
    for b in range(B):
        for s_idx in range(S):
            r = b * S + s_idx
            fused_ref[r:r + 1, :] = embs[s_idx][b:b + 1, :]
    x2 = fused_ref[...]                                                # (B*S, D) f32

    # ---------------- 2-layer post-norm TransformerEncoder -------------------
    scale_f = 1.0 / math.sqrt(HEAD_DIM_FUS)
    for l in range(NUM_FUSION_LAYERS):                                 # static unroll
        qkv = dense(x2, w384_ref, OFF_F_WQKV + l * D, D, BR_F_BQKV + l)  # (B*S, 3D)
        q3 = (qkv[:, 0:D] * scale_f).reshape(B, S, D)
        k3 = qkv[:, D:2 * D].reshape(B, S, D)
        v2 = qkv[:, 2 * D:3 * D]
        attn = mha(q3, k3, v2, OFF_F_WO + l * D, BR_F_BO + l, HEAD_DIM_FUS)
        x2 = layer_norm(x2 + attn, BR_F_G1 + l, BR_F_BE1 + l)
        hmid = jnp.maximum(dense(x2, w256_ref, OFF_F_W1 + l * D, D, BR_F_B1 + l), 0.0)
        ff = dense(hmid, w128_ref, OFF_F_W2 + l * FFN_DIM, FFN_DIM, BR_F_B2 + l)
        x2 = layer_norm(x2 + ff, BR_F_G2 + l, BR_F_BE2 + l)

    fused_ref[...] = x2                                                # (8, 128) f32

    # ---------------- fused prediction heads (lane-dense, padded) ------------
    # fused_flat @ W1 == sum_s x3[:, s, :] @ W1[s*D:(s+1)*D, :]
    x3 = x2.reshape(B, S, D)
    h1 = bias(BR_H_B1, 4 * HIDDEN)                                     # (1, 4H)
    for s_idx in range(S):
        w1_s = w256_ref[OFF_H_W1 + s_idx * D:OFF_H_W1 + (s_idx + 1) * D, :]
        h1 = h1 + jnp.dot(x3[:, s_idx, :].astype(BF16), w1_s,
                          preferred_element_type=F32)
    hact = jnp.maximum(h1, 0.0)                                        # (B, 4H)
    z = dense(hact, w128_ref, OFF_H_W2, 4 * HIDDEN, BR_H_B2)           # (B, 128)
    # sigmoid only on virality / quality / sentiment lanes (cols 3..5)
    col = lax.broadcasted_iota(jnp.int32, z.shape, 1)
    heads_ref[...] = jnp.where((col >= 3) & (col < 6), jax.nn.sigmoid(z), z)


# ----------------------------- wrapper ----------------------------------------
@jax.jit
def forward(params, video_frames, audio_features, text_features, metadata_features):
    B, F = video_frames.shape[:2]
    frames_flat = video_frames.reshape(B * F, -1).astype(BF16)         # (B*F, 768) bf16
    meta_pad = jnp.pad(metadata_features,
                       ((0, 0), (0, META_PAD - metadata_features.shape[1])))
    feat = jnp.concatenate([audio_features, text_features, meta_pad],
                           axis=1).astype(BF16)                        # (B, 384) bf16

    fused2, heads = pl.pallas_call(
        _fused_kernel,
        out_shape=(
            jax.ShapeDtypeStruct((B * NUM_MODALITIES, FUSION_EMBED), jnp.float32),
            jax.ShapeDtypeStruct((B, HEADS_PAD), jnp.float32),
        ),
    )(frames_flat, feat,
      params["w64"], params["w128"], params["w256"], params["w384"],
      params["bias"])

    fused_flat = fused2.reshape(B, NUM_MODALITIES * FUSION_EMBED)
    return {
        "engagement": heads[:, 0:3],       # (B, 3)
        "virality": heads[:, 3],           # (B,)
        "quality": heads[:, 4],            # (B,)
        "sentiment": heads[:, 5],          # (B,)
        "embeddings": fused_flat,          # (B, 4*D)
    }


# ----------------------------- parameters -------------------------------------
def init_params(key):
    keys = iter(jax.random.split(key, 128))

    def lin(in_dim, out_dim):
        w = (jax.random.normal(next(keys), (in_dim, out_dim), jnp.float32)
             / math.sqrt(in_dim))
        b = 0.01 * jax.random.normal(next(keys), (1, out_dim), jnp.float32)
        return w, b

    # --- temporal video encoder ---
    v_wf, v_bf = lin(FRAME_DIM, VISION_EMBED)
    wq, bq = lin(VISION_EMBED, VISION_EMBED)
    wk, bk = lin(VISION_EMBED, VISION_EMBED)
    wv, bv = lin(VISION_EMBED, VISION_EMBED)
    v_wqkv = jnp.concatenate([wq, wk, wv], axis=1)                     # (E, 3E)
    v_bqkv = jnp.concatenate([bq, bk, bv], axis=1)                     # (1, 3E)
    v_wo, v_bo = lin(VISION_EMBED, VISION_EMBED)
    v_wp, v_bp = lin(VISION_EMBED, FUSION_EMBED)

    # --- audio / text / metadata encoders ---
    a_w1, a_b1 = lin(AUDIO_EMBED, HIDDEN)
    a_w2, a_b2 = lin(HIDDEN, FUSION_EMBED)
    t_w1, t_b1 = lin(TEXT_EMBED, HIDDEN)
    t_w2, t_b2 = lin(HIDDEN, FUSION_EMBED)
    m_w1, m_b1 = lin(META_DIM, HIDDEN // 2)
    m_w2, m_b2 = lin(HIDDEN // 2, FUSION_EMBED)
    # zero-pad metadata weights to the slab widths (extra rows/cols inert)
    m_w1_pad = jnp.zeros((META_PAD, HIDDEN), jnp.float32).at[:META_DIM, :HIDDEN // 2].set(m_w1)
    m_b1_pad = jnp.zeros((1, HIDDEN), jnp.float32).at[:, :HIDDEN // 2].set(m_b1)
    m_w2_pad = jnp.zeros((HIDDEN, FUSION_EMBED), jnp.float32).at[:HIDDEN // 2, :].set(m_w2)

    # --- fusion transformer (per layer, QKV fused) ---
    f = {k: [] for k in ("wqkv", "bqkv", "wo", "bo", "w1", "b1", "w2", "b2")}
    for _ in range(NUM_FUSION_LAYERS):
        wq, bq = lin(FUSION_EMBED, FUSION_EMBED)
        wk, bk = lin(FUSION_EMBED, FUSION_EMBED)
        wv, bv = lin(FUSION_EMBED, FUSION_EMBED)
        f["wqkv"].append(jnp.concatenate([wq, wk, wv], axis=1))
        f["bqkv"].append(jnp.concatenate([bq, bk, bv], axis=1))
        wo, bo = lin(FUSION_EMBED, FUSION_EMBED); f["wo"].append(wo); f["bo"].append(bo)
        w1, b1 = lin(FUSION_EMBED, FFN_DIM); f["w1"].append(w1); f["b1"].append(b1)
        w2, b2 = lin(FFN_DIM, FUSION_EMBED); f["w2"].append(w2); f["b2"].append(b2)

    # --- prediction heads fused into one padded lane-dense MLP ---
    ew1, eb1 = lin(FUSION_EMBED * 4, HIDDEN)
    vw1, vb1 = lin(FUSION_EMBED * 4, HIDDEN)
    qw1, qb1 = lin(FUSION_EMBED * 4, HIDDEN)
    sw1, sb1 = lin(FUSION_EMBED * 4, HIDDEN)
    h_w1 = jnp.concatenate([ew1, vw1, qw1, sw1], axis=1)               # (4D, 4H)
    h_b1 = jnp.concatenate([eb1, vb1, qb1, sb1], axis=1)               # (1, 4H)

    ew2, eb2 = lin(HIDDEN, 3)
    vw2, vb2 = lin(HIDDEN, 1)
    qw2, qb2 = lin(HIDDEN, 1)
    sw2, sb2 = lin(HIDDEN, 1)
    h_w2 = jnp.zeros((4 * HIDDEN, HEADS_PAD), jnp.float32)
    h_w2 = h_w2.at[0 * HIDDEN:1 * HIDDEN, 0:3].set(ew2)                # engagement -> 0..2
    h_w2 = h_w2.at[1 * HIDDEN:2 * HIDDEN, 3:4].set(vw2)                # virality   -> 3
    h_w2 = h_w2.at[2 * HIDDEN:3 * HIDDEN, 4:5].set(qw2)                # quality    -> 4
    h_w2 = h_w2.at[3 * HIDDEN:4 * HIDDEN, 5:6].set(sw2)                # sentiment  -> 5
    h_b2 = jnp.zeros((1, HEADS_PAD), jnp.float32)
    h_b2 = h_b2.at[:, 0:3].set(eb2).at[:, 3:4].set(vb2)
    h_b2 = h_b2.at[:, 4:5].set(qb2).at[:, 5:6].set(sb2)

    # --- pack into slabs (few big DMAs instead of ~40 small ones) ---
    w128 = jnp.concatenate(
        [v_wf, v_wo, v_wp, a_w2, t_w2, m_w2_pad,
         f["wo"][0], f["wo"][1], f["w2"][0], f["w2"][1], h_w2], axis=0).astype(BF16)
    w256 = jnp.concatenate([f["w1"][0], f["w1"][1], h_w1], axis=0).astype(BF16)
    w384 = jnp.concatenate([v_wqkv, f["wqkv"][0], f["wqkv"][1]], axis=0).astype(BF16)
    w64 = jnp.concatenate([a_w1, t_w1, m_w1_pad], axis=0).astype(BF16)
    assert w128.shape == (W128_ROWS, 128)
    assert w256.shape == (W256_ROWS, 256)
    assert w384.shape == (W384_ROWS, 384)
    assert w64.shape == (W64_ROWS, 64)

    bias_slab = jnp.zeros((BIAS_ROWS, BIAS_COLS), jnp.float32)

    def put(slab, row, vec):
        return slab.at[row, :vec.shape[1]].set(vec[0])

    bias_slab = put(bias_slab, BR_V_BF, v_bf)
    bias_slab = put(bias_slab, BR_V_BQKV, v_bqkv)
    bias_slab = put(bias_slab, BR_V_BO, v_bo)
    bias_slab = put(bias_slab, BR_V_BP, v_bp)
    bias_slab = put(bias_slab, BR_A_B1, a_b1)
    bias_slab = put(bias_slab, BR_A_B2, a_b2)
    bias_slab = put(bias_slab, BR_T_B1, t_b1)
    bias_slab = put(bias_slab, BR_T_B2, t_b2)
    bias_slab = put(bias_slab, BR_M_B1, m_b1_pad)
    bias_slab = put(bias_slab, BR_M_B2, m_b2)
    ones_d = jnp.ones((1, FUSION_EMBED), jnp.float32)
    zeros_d = jnp.zeros((1, FUSION_EMBED), jnp.float32)
    for l in range(NUM_FUSION_LAYERS):
        bias_slab = put(bias_slab, BR_F_BQKV + l, f["bqkv"][l])
        bias_slab = put(bias_slab, BR_F_BO + l, f["bo"][l])
        bias_slab = put(bias_slab, BR_F_B1 + l, f["b1"][l])
        bias_slab = put(bias_slab, BR_F_B2 + l, f["b2"][l])
        bias_slab = put(bias_slab, BR_F_G1 + l, ones_d)
        bias_slab = put(bias_slab, BR_F_BE1 + l, zeros_d)
        bias_slab = put(bias_slab, BR_F_G2 + l, ones_d)
        bias_slab = put(bias_slab, BR_F_BE2 + l, zeros_d)
    bias_slab = put(bias_slab, BR_H_B1, h_b1)
    bias_slab = put(bias_slab, BR_H_B2, h_b2)

    return {"w64": w64, "w128": w128, "w256": w256, "w384": w384, "bias": bias_slab}


# ----------------------------- main ---------------------------------------------
if __name__ == "__main__":
    key = jax.random.PRNGKey(0)
    k_par, k_vid, k_aud, k_txt, k_met = jax.random.split(key, 5)

    params = init_params(k_par)

    video_frames = jax.random.normal(
        k_vid, (BATCH, NUM_FRAMES, 3, FRAME_H, FRAME_W), jnp.float32)
    audio_features = jax.random.normal(k_aud, (BATCH, AUDIO_EMBED), jnp.float32)
    text_features = jax.random.normal(k_txt, (BATCH, TEXT_EMBED), jnp.float32)
    metadata_features = jax.random.normal(k_met, (BATCH, META_DIM), jnp.float32)

    out = forward(params, video_frames, audio_features, text_features,
                  metadata_features)
    out = jax.block_until_ready(out)

    assert out["engagement"].shape == (BATCH, 3)
    assert out["virality"].shape == (BATCH,)
    assert out["quality"].shape == (BATCH,)
    assert out["sentiment"].shape == (BATCH,)
    assert out["embeddings"].shape == (BATCH, NUM_MODALITIES * FUSION_EMBED)
    assert all(bool(jnp.all(jnp.isfinite(v))) for v in out.values())

    print("KERNEL_OK")
</pallas_src>

<mosaic_0001>
module attributes {stable_mosaic.version = 11 : i64} {
  func.func @_fused_kernel(%arg0: memref<16x768xbf16, #tpu.memory_space<vmem>>, %arg1: memref<2x384xbf16, #tpu.memory_space<vmem>>, %arg2: memref<384x64xbf16, #tpu.memory_space<vmem>>, %arg3: memref<2240x128xbf16, #tpu.memory_space<vmem>>, %arg4: memref<768x256xbf16, #tpu.memory_space<vmem>>, %arg5: memref<384x384xbf16, #tpu.memory_space<vmem>>, %arg6: memref<32x384xf32, #tpu.memory_space<vmem>>, %arg7: memref<8x128xf32, #tpu.memory_space<vmem>>, %arg8: memref<2x128xf32, #tpu.memory_space<vmem>>) attributes {dimension_semantics = [], scalar_prefetch = 0 : i64, scratch_operands = 0 : i64, tpu.core_type = #tpu.core_type<tc>} {
    %c0 = arith.constant 0 : index
    %c0_0 = arith.constant 0 : index
    %0 = vector.load %arg0[%c0, %c0_0] : memref<16x768xbf16, #tpu.memory_space<vmem>>, vector<16x768xbf16>
    %c0_1 = arith.constant 0 : index
    %c0_2 = arith.constant 0 : index
    %1 = vector.load %arg3[%c0_1, %c0_2] : memref<2240x128xbf16, #tpu.memory_space<vmem>>, vector<768x128xbf16>
    %cst = arith.constant dense<0.000000e+00> : vector<16x128xf32>
    %2 = tpu.matmul %0, %1, %cst {dimension_numbers = #tpu.dot_dimension_numbers<[1], [0], [0], [1], [0, 0, 1, 1], [], []>} : vector<16x768xbf16>, vector<768x128xbf16>, vector<16x128xf32> -> vector<16x128xf32>
    %c0_3 = arith.constant 0 : index
    %c0_4 = arith.constant 0 : index
    %3 = vector.load %arg6[%c0_3, %c0_4] : memref<32x384xf32, #tpu.memory_space<vmem>>, vector<1x128xf32>
    %4 = vector.broadcast %3 : vector<1x128xf32> to vector<16x128xf32>
    %5 = arith.addf %2, %4 : vector<16x128xf32>
    %cst_5 = arith.constant 0.000000e+00 : f32
    %6 = vector.broadcast %cst_5 : f32 to vector<16x128xf32>
    %7 = arith.maximumf %5, %6 : vector<16x128xf32>
    %c0_6 = arith.constant 0 : index
    %c0_7 = arith.constant 0 : index
    %8 = vector.load %arg5[%c0_6, %c0_7] : memref<384x384xbf16, #tpu.memory_space<vmem>>, vector<128x384xbf16>
    %9 = arith.truncf %7 : vector<16x128xf32> to vector<16x128xbf16>
    %cst_8 = arith.constant dense<0.000000e+00> : vector<16x384xf32>
    %10 = tpu.matmul %9, %8, %cst_8 {dimension_numbers = #tpu.dot_dimension_numbers<[1], [0], [0], [1], [0, 0, 1, 1], [], []>} : vector<16x128xbf16>, vector<128x384xbf16>, vector<16x384xf32> -> vector<16x384xf32>
    %c1 = arith.constant 1 : index
    %c0_9 = arith.constant 0 : index
    %11 = vector.load %arg6[%c1, %c0_9] : memref<32x384xf32, #tpu.memory_space<vmem>>, vector<1x384xf32>
    %12 = vector.broadcast %11 : vector<1x384xf32> to vector<16x384xf32>
    %13 = arith.addf %10, %12 : vector<16x384xf32>
    %14 = vector.extract_strided_slice %13 {offsets = [0, 0], sizes = [16, 128], strides = [1, 1]} : vector<16x384xf32> to vector<16x128xf32>
    %cst_10 = arith.constant 0.176776692 : f32
    %15 = vector.broadcast %cst_10 : f32 to vector<16x128xf32>
    %16 = arith.mulf %14, %15 : vector<16x128xf32>
    %17 = vector.shape_cast %16 : vector<16x128xf32> to vector<2x8x128xf32>
    %18 = vector.extract_strided_slice %13 {offsets = [0, 128], sizes = [16, 128], strides = [1, 1]} : vector<16x384xf32> to vector<16x128xf32>
    %19 = vector.shape_cast %18 : vector<16x128xf32> to vector<2x8x128xf32>
    %20 = vector.extract_strided_slice %13 {offsets = [0, 256], sizes = [16, 128], strides = [1, 1]} : vector<16x384xf32> to vector<16x128xf32>
    %21 = vector.extract_strided_slice %17 {offsets = [0, 0, 0], sizes = [2, 8, 32], strides = [1, 1, 1]} : vector<2x8x128xf32> to vector<2x8x32xf32>
    %22 = arith.truncf %21 : vector<2x8x32xf32> to vector<2x8x32xbf16>
    %23 = vector.extract_strided_slice %19 {offsets = [0, 0, 0], sizes = [2, 8, 32], strides = [1, 1, 1]} : vector<2x8x128xf32> to vector<2x8x32xf32>
    %24 = arith.truncf %23 : vector<2x8x32xf32> to vector<2x8x32xbf16>
    %c768 = arith.constant 768 : index
    %c0_11 = arith.constant 0 : index
    %25 = vector.load %arg3[%c768, %c0_11] : memref<2240x128xbf16, #tpu.memory_space<vmem>>, vector<32x128xbf16>
    %26 = vector.extract_strided_slice %20 {offsets = [0, 0], sizes = [16, 32], strides = [1, 1]} : vector<16x128xf32> to vector<16x32xf32>
    %27 = arith.truncf %26 : vector<16x32xf32> to vector<16x32xbf16>
    %cst_12 = arith.constant dense<0.000000e+00> : vector<16x128xf32>
    %28 = tpu.matmul %27, %25, %cst_12 {dimension_numbers = #tpu.dot_dimension_numbers<[1], [0], [0], [1], [0, 0, 1, 1], [], []>} : vector<16x32xbf16>, vector<32x128xbf16>, vector<16x128xf32> -> vector<16x128xf32>
    %29 = vector.shape_cast %28 : vector<16x128xf32> to vector<2x8x128xf32>
    %30 = arith.truncf %29 : vector<2x8x128xf32> to vector<2x8x128xbf16>
    "tpu.trace_start"() <{level = 10 : i32, message = "bqd,bkd->bqk"}> : () -> ()
    %cst_13 = arith.constant dense<0.000000e+00> : vector<2x8x8xf32>
    %31 = tpu.matmul %22, %24, %cst_13 {dimension_numbers = #tpu.dot_dimension_numbers<[2], [2], [1], [1], [0, 0, 0, 1, 1, 1], [0], [0]>} : vector<2x8x32xbf16>, vector<2x8x32xbf16>, vector<2x8x8xf32> -> vector<2x8x8xf32>
    "tpu.trace_stop"() : () -> ()
    %cst_14 = arith.constant dense<0xFF800000> : vector<2x8xf32>
    %32 = vector.multi_reduction <maximumf>, %31, %cst_14 [2] : vector<2x8x8xf32> to vector<2x8xf32>
    %33 = vector.shape_cast %32 : vector<2x8xf32> to vector<2x8x1xf32>
    %34 = vector.broadcast %33 : vector<2x8x1xf32> to vector<2x8x8xf32>
    %35 = arith.subf %31, %34 : vector<2x8x8xf32>
    %36 = math.exp %35 : vector<2x8x8xf32>
    %cst_15 = arith.constant dense<0.000000e+00> : vector<2x8xf32>
    %37 = vector.multi_reduction <add>, %36, %cst_15 [2] : vector<2x8x8xf32> to vector<2x8xf32>
    %38 = vector.shape_cast %37 : vector<2x8xf32> to vector<2x8x1xf32>
    %39 = tpu.reciprocal %38 {approx = true} : vector<2x8x1xf32> -> vector<2x8x1xf32>
    %40 = vector.broadcast %39 : vector<2x8x1xf32> to vector<2x8x8xf32>
    %41 = arith.mulf %36, %40 : vector<2x8x8xf32>
    %42 = arith.truncf %41 : vector<2x8x8xf32> to vector<2x8x8xbf16>
    "tpu.trace_start"() <{level = 10 : i32, message = "bqk,bkd->bqd"}> : () -> ()
    %cst_16 = arith.constant dense<0.000000e+00> : vector<2x8x128xf32>
    %43 = tpu.matmul %42, %30, %cst_16 {dimension_numbers = #tpu.dot_dimension_numbers<[2], [1], [1], [2], [0, 0, 0, 1, 1, 2], [0], [0]>} : vector<2x8x8xbf16>, vector<2x8x128xbf16>, vector<2x8x128xf32> -> vector<2x8x128xf32>
    "tpu.trace_stop"() : () -> ()
    %44 = vector.extract_strided_slice %17 {offsets = [0, 0, 32], sizes = [2, 8, 32], strides = [1, 1, 1]} : vector<2x8x128xf32> to vector<2x8x32xf32>
    %45 = arith.truncf %44 : vector<2x8x32xf32> to vector<2x8x32xbf16>
    %46 = vector.extract_strided_slice %19 {offsets = [0, 0, 32], sizes = [2, 8, 32], strides = [1, 1, 1]} : vector<2x8x128xf32> to vector<2x8x32xf32>
    %47 = arith.truncf %46 : vector<2x8x32xf32> to vector<2x8x32xbf16>
    %c800 = arith.constant 800 : index
    %c0_17 = arith.constant 0 : index
    %48 = vector.load %arg3[%c800, %c0_17] : memref<2240x128xbf16, #tpu.memory_space<vmem>>, vector<32x128xbf16>
    %49 = vector.extract_strided_slice %20 {offsets = [0, 32], sizes = [16, 32], strides = [1, 1]} : vector<16x128xf32> to vector<16x32xf32>
    %50 = arith.truncf %49 : vector<16x32xf32> to vector<16x32xbf16>
    %cst_18 = arith.constant dense<0.000000e+00> : vector<16x128xf32>
    %51 = tpu.matmul %50, %48, %cst_18 {dimension_numbers = #tpu.dot_dimension_numbers<[1], [0], [0], [1], [0, 0, 1, 1], [], []>} : vector<16x32xbf16>, vector<32x128xbf16>, vector<16x128xf32> -> vector<16x128xf32>
    %52 = vector.shape_cast %51 : vector<16x128xf32> to vector<2x8x128xf32>
    %53 = arith.truncf %52 : vector<2x8x128xf32> to vector<2x8x128xbf16>
    "tpu.trace_start"() <{level = 10 : i32, message = "bqd,bkd->bqk"}> : () -> ()
    %cst_19 = arith.constant dense<0.000000e+00> : vector<2x8x8xf32>
    %54 = tpu.matmul %45, %47, %cst_19 {dimension_numbers = #tpu.dot_dimension_numbers<[2], [2], [1], [1], [0, 0, 0, 1, 1, 1], [0], [0]>} : vector<2x8x32xbf16>, vector<2x8x32xbf16>, vector<2x8x8xf32> -> vector<2x8x8xf32>
    "tpu.trace_stop"() : () -> ()
    %cst_20 = arith.constant dense<0xFF800000> : vector<2x8xf32>
    %55 = vector.multi_reduction <maximumf>, %54, %cst_20 [2] : vector<2x8x8xf32> to vector<2x8xf32>
    %56 = vector.shape_cast %55 : vector<2x8xf32> to vector<2x8x1xf32>
    %57 = vector.broadcast %56 : vector<2x8x1xf32> to vector<2x8x8xf32>
    %58 = arith.subf %54, %57 : vector<2x8x8xf32>
    %59 = math.exp %58 : vector<2x8x8xf32>
    %cst_21 = arith.constant dense<0.000000e+00> : vector<2x8xf32>
    %60 = vector.multi_reduction <add>, %59, %cst_21 [2] : vector<2x8x8xf32> to vector<2x8xf32>
    %61 = vector.shape_cast %60 : vector<2x8xf32> to vector<2x8x1xf32>
    %62 = tpu.reciprocal %61 {approx = true} : vector<2x8x1xf32> -> vector<2x8x1xf32>
    %63 = vector.broadcast %62 : vector<2x8x1xf32> to vector<2x8x8xf32>
    %64 = arith.mulf %59, %63 : vector<2x8x8xf32>
    %65 = arith.truncf %64 : vector<2x8x8xf32> to vector<2x8x8xbf16>
    "tpu.trace_start"() <{level = 10 : i32, message = "bqk,bkd->bqd"}> : () -> ()
    %cst_22 = arith.constant dense<0.000000e+00> : vector<2x8x128xf32>
    %66 = tpu.matmul %65, %53, %cst_22 {dimension_numbers = #tpu.dot_dimension_numbers<[2], [1], [1], [2], [0, 0, 0, 1, 1, 2], [0], [0]>} : vector<2x8x8xbf16>, vector<2x8x128xbf16>, vector<2x8x128xf32> -> vector<2x8x128xf32>
    "tpu.trace_stop"() : () -> ()
    %67 = arith.addf %43, %66 : vector<2x8x128xf32>
    %68 = vector.extract_strided_slice %17 {offsets = [0, 0, 64], sizes = [2, 8, 32], strides = [1, 1, 1]} : vector<2x8x128xf32> to vector<2x8x32xf32>
    %69 = arith.truncf %68 : vector<2x8x32xf32> to vector<2x8x32xbf16>
    %70 = vector.extract_strided_slice %19 {offsets = [0, 0, 64], sizes = [2, 8, 32], strides = [1, 1, 1]} : vector<2x8x128xf32> to vector<2x8x32xf32>
    %71 = arith.truncf %70 : vector<2x8x32xf32> to vector<2x8x32xbf16>
    %c832 = arith.constant 832 : index
    %c0_23 = arith.constant 0 : index
    %72 = vector.load %arg3[%c832, %c0_23] : memref<2240x128xbf16, #tpu.memory_space<vmem>>, vector<32x128xbf16>
    %73 = vector.extract_strided_slice %20 {offsets = [0, 64], sizes = [16, 32], strides = [1, 1]} : vector<16x128xf32> to vector<16x32xf32>
    %74 = arith.truncf %73 : vector<16x32xf32> to vector<16x32xbf16>
    %cst_24 = arith.constant dense<0.000000e+00> : vector<16x128xf32>
    %75 = tpu.matmul %74, %72, %cst_24 {dimension_numbers = #tpu.dot_dimension_numbers<[1], [0], [0], [1], [0, 0, 1, 1], [], []>} : vector<16x32xbf16>, vector<32x128xbf16>, vector<16x128xf32> -> vector<16x128xf32>
    %76 = vector.shape_cast %75 : vector<16x128xf32> to vector<2x8x128xf32>
    %77 = arith.truncf %76 : vector<2x8x128xf32> to vector<2x8x128xbf16>
    "tpu.trace_start"() <{level = 10 : i32, message = "bqd,bkd->bqk"}> : () -> ()
    %cst_25 = arith.constant dense<0.000000e+00> : vector<2x8x8xf32>
    %78 = tpu.matmul %69, %71, %cst_25 {dimension_numbers = #tpu.dot_dimension_numbers<[2], [2], [1], [1], [0, 0, 0, 1, 1, 1], [0], [0]>} : vector<2x8x32xbf16>, vector<2x8x32xbf16>, vector<2x8x8xf32> -> vector<2x8x8xf32>
    "tpu.trace_stop"() : () -> ()
    %cst_26 = arith.constant dense<0xFF800000> : vector<2x8xf32>
    %79 = vector.multi_reduction <maximumf>, %78, %cst_26 [2] : vector<2x8x8xf32> to vector<2x8xf32>
    %80 = vector.shape_cast %79 : vector<2x8xf32> to vector<2x8x1xf32>
    %81 = vector.broadcast %80 : vector<2x8x1xf32> to vector<2x8x8xf32>
    %82 = arith.subf %78, %81 : vector<2x8x8xf32>
    %83 = math.exp %82 : vector<2x8x8xf32>
    %cst_27 = arith.constant dense<0.000000e+00> : vector<2x8xf32>
    %84 = vector.multi_reduction <add>, %83, %cst_27 [2] : vector<2x8x8xf32> to vector<2x8xf32>
    %85 = vector.shape_cast %84 : vector<2x8xf32> to vector<2x8x1xf32>
    %86 = tpu.reciprocal %85 {approx = true} : vector<2x8x1xf32> -> vector<2x8x1xf32>
    %87 = vector.broadcast %86 : vector<2x8x1xf32> to vector<2x8x8xf32>
    %88 = arith.mulf %83, %87 : vector<2x8x8xf32>
    %89 = arith.truncf %88 : vector<2x8x8xf32> to vector<2x8x8xbf16>
    "tpu.trace_start"() <{level = 10 : i32, message = "bqk,bkd->bqd"}> : () -> ()
    %cst_28 = arith.constant dense<0.000000e+00> : vector<2x8x128xf32>
    %90 = tpu.matmul %89, %77, %cst_28 {dimension_numbers = #tpu.dot_dimension_numbers<[2], [1], [1], [2], [0, 0, 0, 1, 1, 2], [0], [0]>} : vector<2x8x8xbf16>, vector<2x8x128xbf16>, vector<2x8x128xf32> -> vector<2x8x128xf32>
    "tpu.trace_stop"() : () -> ()
    %91 = arith.addf %67, %90 : vector<2x8x128xf32>
    %92 = vector.extract_strided_slice %17 {offsets = [0, 0, 96], sizes = [2, 8, 32], strides = [1, 1, 1]} : vector<2x8x128xf32> to vector<2x8x32xf32>
    %93 = arith.truncf %92 : vector<2x8x32xf32> to vector<2x8x32xbf16>
    %94 = vector.extract_strided_slice %19 {offsets = [0, 0, 96], sizes = [2, 8, 32], strides = [1, 1, 1]} : vector<2x8x128xf32> to vector<2x8x32xf32>
    %95 = arith.truncf %94 : vector<2x8x32xf32> to vector<2x8x32xbf16>
    %c864 = arith.constant 864 : index
    %c0_29 = arith.constant 0 : index
    %96 = vector.load %arg3[%c864, %c0_29] : memref<2240x128xbf16, #tpu.memory_space<vmem>>, vector<32x128xbf16>
    %97 = vector.extract_strided_slice %20 {offsets = [0, 96], sizes = [16, 32], strides = [1, 1]} : vector<16x128xf32> to vector<16x32xf32>
    %98 = arith.truncf %97 : vector<16x32xf32> to vector<16x32xbf16>
    %cst_30 = arith.constant dense<0.000000e+00> : vector<16x128xf32>
    %99 = tpu.matmul %98, %96, %cst_30 {dimension_numbers = #tpu.dot_dimension_numbers<[1], [0], [0], [1], [0, 0, 1, 1], [], []>} : vector<16x32xbf16>, vector<32x128xbf16>, vector<16x128xf32> -> vector<16x128xf32>
    %100 = vector.shape_cast %99 : vector<16x128xf32> to vector<2x8x128xf32>
    %101 = arith.truncf %100 : vector<2x8x128xf32> to vector<2x8x128xbf16>
    "tpu.trace_start"() <{level = 10 : i32, message = "bqd,bkd->bqk"}> : () -> ()
    %cst_31 = arith.constant dense<0.000000e+00> : vector<2x8x8xf32>
    %102 = tpu.matmul %93, %95, %cst_31 {dimension_numbers = #tpu.dot_dimension_numbers<[2], [2], [1], [1], [0, 0, 0, 1, 1, 1], [0], [0]>} : vector<2x8x32xbf16>, vector<2x8x32xbf16>, vector<2x8x8xf32> -> vector<2x8x8xf32>
    "tpu.trace_stop"() : () -> ()
    %cst_32 = arith.constant dense<0xFF800000> : vector<2x8xf32>
    %103 = vector.multi_reduction <maximumf>, %102, %cst_32 [2] : vector<2x8x8xf32> to vector<2x8xf32>
    %104 = vector.shape_cast %103 : vector<2x8xf32> to vector<2x8x1xf32>
    %105 = vector.broadcast %104 : vector<2x8x1xf32> to vector<2x8x8xf32>
    %106 = arith.subf %102, %105 : vector<2x8x8xf32>
    %107 = math.exp %106 : vector<2x8x8xf32>
    %cst_33 = arith.constant dense<0.000000e+00> : vector<2x8xf32>
    %108 = vector.multi_reduction <add>, %107, %cst_33 [2] : vector<2x8x8xf32> to vector<2x8xf32>
    %109 = vector.shape_cast %108 : vector<2x8xf32> to vector<2x8x1xf32>
    %110 = tpu.reciprocal %109 {approx = true} : vector<2x8x1xf32> -> vector<2x8x1xf32>
    %111 = vector.broadcast %110 : vector<2x8x1xf32> to vector<2x8x8xf32>
    %112 = arith.mulf %107, %111 : vector<2x8x8xf32>
    %113 = arith.truncf %112 : vector<2x8x8xf32> to vector<2x8x8xbf16>
    "tpu.trace_start"() <{level = 10 : i32, message = "bqk,bkd->bqd"}> : () -> ()
    %cst_34 = arith.constant dense<0.000000e+00> : vector<2x8x128xf32>
    %114 = tpu.matmul %113, %101, %cst_34 {dimension_numbers = #tpu.dot_dimension_numbers<[2], [1], [1], [2], [0, 0, 0, 1, 1, 2], [0], [0]>} : vector<2x8x8xbf16>, vector<2x8x128xbf16>, vector<2x8x128xf32> -> vector<2x8x128xf32>
    "tpu.trace_stop"() : () -> ()
    %115 = arith.addf %91, %114 : vector<2x8x128xf32>
    %116 = vector.shape_cast %115 : vector<2x8x128xf32> to vector<16x128xf32>
    %c2 = arith.constant 2 : index
    %c0_35 = arith.constant 0 : index
    %117 = vector.load %arg6[%c2, %c0_35] : memref<32x384xf32, #tpu.memory_space<vmem>>, vector<1x128xf32>
    %118 = vector.broadcast %117 : vector<1x128xf32> to vector<16x128xf32>
    %119 = arith.addf %116, %118 : vector<16x128xf32>
    %120 = vector.shape_cast %119 : vector<16x128xf32> to vector<2x8x128xf32>
    %cst_36 = arith.constant dense<0.000000e+00> : vector<2x128xf32>
    %121 = vector.multi_reduction <add>, %120, %cst_36 [1] : vector<2x8x128xf32> to vector<2x128xf32>
    %cst_37 = arith.constant 8.000000e+00 : f32
    %122 = vector.broadcast %cst_37 : f32 to vector<2x128xf32>
    %123 = arith.divf %121, %122 : vector<2x128xf32>
    %c896 = arith.constant 896 : index
    %c0_38 = arith.constant 0 : index
    %124 = vector.load %arg3[%c896, %c0_38] : memref<2240x128xbf16, #tpu.memory_space<vmem>>, vector<128x128xbf16>
    %125 = arith.truncf %123 : vector<2x128xf32> to vector<2x128xbf16>
    %cst_39 = arith.constant dense<0.000000e+00> : vector<2x128xf32>
    %126 = tpu.matmul %125, %124, %cst_39 {dimension_numbers = #tpu.dot_dimension_numbers<[1], [0], [0], [1], [0, 0, 1, 1], [], []>} : vector<2x128xbf16>, vector<128x128xbf16>, vector<2x128xf32> -> vector<2x128xf32>
    %c3 = arith.constant 3 : index
    %c0_40 = arith.constant 0 : index
    %127 = vector.load %arg6[%c3, %c0_40] : memref<32x384xf32, #tpu.memory_space<vmem>>, vector<1x128xf32>
    %128 = vector.broadcast %127 : vector<1x128xf32> to vector<2x128xf32>
    %129 = arith.addf %126, %128 : vector<2x128xf32>
    %c0_41 = arith.constant 0 : index
    %c0_42 = arith.constant 0 : index
    %130 = vector.load %arg1[%c0_41, %c0_42] : memref<2x384xbf16, #tpu.memory_space<vmem>>, vector<2x128xbf16>
    %c0_43 = arith.constant 0 : index
    %c128 = arith.constant 128 : index
    %131 = vector.load %arg1[%c0_43, %c128] : memref<2x384xbf16, #tpu.memory_space<vmem>>, vector<2x128xbf16>
    %c0_44 = arith.constant 0 : index
    %c256 = arith.constant 256 : index
    %132 = vector.load %arg1[%c0_44, %c256] : memref<2x384xbf16, #tpu.memory_space<vmem>>, vector<2x128xbf16>
    %c0_45 = arith.constant 0 : index
    %c0_46 = arith.constant 0 : index
    %133 = vector.load %arg2[%c0_45, %c0_46] : memref<384x64xbf16, #tpu.memory_space<vmem>>, vector<128x64xbf16>
    %cst_47 = arith.constant dense<0.000000e+00> : vector<2x64xf32>
    %134 = tpu.matmul %130, %133, %cst_47 {dimension_numbers = #tpu.dot_dimension_numbers<[1], [0], [0], [1], [0, 0, 1, 1], [], []>} : vector<2x128xbf16>, vector<128x64xbf16>, vector<2x64xf32> -> vector<2x64xf32>
    %c4 = arith.constant 4 : index
    %c0_48 = arith.constant 0 : index
    %135 = vector.load %arg6[%c4, %c0_48] : memref<32x384xf32, #tpu.memory_space<vmem>>, vector<1x64xf32>
    %136 = vector.broadcast %135 : vector<1x64xf32> to vector<2x64xf32>
    %137 = arith.addf %134, %136 : vector<2x64xf32>
    %cst_49 = arith.constant 0.000000e+00 : f32
    %138 = vector.broadcast %cst_49 : f32 to vector<2x64xf32>
    %139 = arith.maximumf %137, %138 : vector<2x64xf32>
    %c1024 = arith.constant 1024 : index
    %c0_50 = arith.constant 0 : index
    %140 = vector.load %arg3[%c1024, %c0_50] : memref<2240x128xbf16, #tpu.memory_space<vmem>>, vector<64x128xbf16>
    %141 = arith.truncf %139 : vector<2x64xf32> to vector<2x64xbf16>
    %cst_51 = arith.constant dense<0.000000e+00> : vector<2x128xf32>
    %142 = tpu.matmul %141, %140, %cst_51 {dimension_numbers = #tpu.dot_dimension_numbers<[1], [0], [0], [1], [0, 0, 1, 1], [], []>} : vector<2x64xbf16>, vector<64x128xbf16>, vector<2x128xf32> -> vector<2x128xf32>
    %c5 = arith.constant 5 : index
    %c0_52 = arith.constant 0 : index
    %143 = vector.load %arg6[%c5, %c0_52] : memref<32x384xf32, #tpu.memory_space<vmem>>, vector<1x128xf32>
    %144 = vector.broadcast %143 : vector<1x128xf32> to vector<2x128xf32>
    %145 = arith.addf %142, %144 : vector<2x128xf32>
    %c128_53 = arith.constant 128 : index
    %c0_54 = arith.constant 0 : index
    %146 = vector.load %arg2[%c128_53, %c0_54] : memref<384x64xbf16, #tpu.memory_space<vmem>>, vector<128x64xbf16>
    %cst_55 = arith.constant dense<0.000000e+00> : vector<2x64xf32>
    %147 = tpu.matmul %131, %146, %cst_55 {dimension_numbers = #tpu.dot_dimension_numbers<[1], [0], [0], [1], [0, 0, 1, 1], [], []>} : vector<2x128xbf16>, vector<128x64xbf16>, vector<2x64xf32> -> vector<2x64xf32>
    %c6 = arith.constant 6 : index
    %c0_56 = arith.constant 0 : index
    %148 = vector.load %arg6[%c6, %c0_56] : memref<32x384xf32, #tpu.memory_space<vmem>>, vector<1x64xf32>
    %149 = vector.broadcast %148 : vector<1x64xf32> to vector<2x64xf32>
    %150 = arith.addf %147, %149 : vector<2x64xf32>
    %cst_57 = arith.constant 0.000000e+00 : f32
    %151 = vector.broadcast %cst_57 : f32 to vector<2x64xf32>
    %152 = arith.maximumf %150, %151 : vector<2x64xf32>
    %c1088 = arith.constant 1088 : index
    %c0_58 = arith.constant 0 : index
    %153 = vector.load %arg3[%c1088, %c0_58] : memref<2240x128xbf16, #tpu.memory_space<vmem>>, vector<64x128xbf16>
    %154 = arith.truncf %152 : vector<2x64xf32> to vector<2x64xbf16>
    %cst_59 = arith.constant dense<0.000000e+00> : vector<2x128xf32>
    %155 = tpu.matmul %154, %153, %cst_59 {dimension_numbers = #tpu.dot_dimension_numbers<[1], [0], [0], [1], [0, 0, 1, 1], [], []>} : vector<2x64xbf16>, vector<64x128xbf16>, vector<2x128xf32> -> vector<2x128xf32>
    %c7 = arith.constant 7 : index
    %c0_60 = arith.constant 0 : index
    %156 = vector.load %arg6[%c7, %c0_60] : memref<32x384xf32, #tpu.memory_space<vmem>>, vector<1x128xf32>
    %157 = vector.broadcast %156 : vector<1x128xf32> to vector<2x128xf32>
    %158 = arith.addf %155, %157 : vector<2x128xf32>
    %c256_61 = arith.constant 256 : index
    %c0_62 = arith.constant 0 : index
    %159 = vector.load %arg2[%c256_61, %c0_62] : memref<384x64xbf16, #tpu.memory_space<vmem>>, vector<128x64xbf16>
    %cst_63 = arith.constant dense<0.000000e+00> : vector<2x64xf32>
    %160 = tpu.matmul %132, %159, %cst_63 {dimension_numbers = #tpu.dot_dimension_numbers<[1], [0], [0], [1], [0, 0, 1, 1], [], []>} : vector<2x128xbf16>, vector<128x64xbf16>, vector<2x64xf32> -> vector<2x64xf32>
    %c8 = arith.constant 8 : index
    %c0_64 = arith.constant 0 : index
    %161 = vector.load %arg6[%c8, %c0_64] : memref<32x384xf32, #tpu.memory_space<vmem>>, vector<1x64xf32>
    %162 = vector.broadcast %161 : vector<1x64xf32> to vector<2x64xf32>
    %163 = arith.addf %160, %162 : vector<2x64xf32>
    %cst_65 = arith.constant 0.000000e+00 : f32
    %164 = vector.broadcast %cst_65 : f32 to vector<2x64xf32>
    %165 = arith.maximumf %163, %164 : vector<2x64xf32>
    %c1152 = arith.constant 1152 : index
    %c0_66 = arith.constant 0 : index
    %166 = vector.load %arg3[%c1152, %c0_66] : memref<2240x128xbf16, #tpu.memory_space<vmem>>, vector<64x128xbf16>
    %167 = arith.truncf %165 : vector<2x64xf32> to vector<2x64xbf16>
    %cst_67 = arith.constant dense<0.000000e+00> : vector<2x128xf32>
    %168 = tpu.matmul %167, %166, %cst_67 {dimension_numbers = #tpu.dot_dimension_numbers<[1], [0], [0], [1], [0, 0, 1, 1], [], []>} : vector<2x64xbf16>, vector<64x128xbf16>, vector<2x128xf32> -> vector<2x128xf32>
    %c9 = arith.constant 9 : index
    %c0_68 = arith.constant 0 : index
    %169 = vector.load %arg6[%c9, %c0_68] : memref<32x384xf32, #tpu.memory_space<vmem>>, vector<1x128xf32>
    %170 = vector.broadcast %169 : vector<1x128xf32> to vector<2x128xf32>
    %171 = arith.addf %168, %170 : vector<2x128xf32>
    %172 = vector.extract_strided_slice %129 {offsets = [0, 0], sizes = [1, 128], strides = [1, 1]} : vector<2x128xf32> to vector<1x128xf32>
    %c0_69 = arith.constant 0 : index
    %c0_70 = arith.constant 0 : index
    %173 = vector.load %arg7[%c0_69, %c0_70] : memref<8x128xf32, #tpu.memory_space<vmem>>, vector<1x128xf32>
    tpu.vector_store %arg7[%c0_69, %c0_70], %172 {strides = array<i32>} : memref<8x128xf32, #tpu.memory_space<vmem>>, vector<1x128xf32>,
    %174 = vector.extract_strided_slice %145 {offsets = [0, 0], sizes = [1, 128], strides = [1, 1]} : vector<2x128xf32> to vector<1x128xf32>
    %c1_71 = arith.constant 1 : index
    %c0_72 = arith.constant 0 : index
    %175 = vector.load %arg7[%c1_71, %c0_72] : memref<8x128xf32, #tpu.memory_space<vmem>>, vector<1x128xf32>
    tpu.vector_store %arg7[%c1_71, %c0_72], %174 {strides = array<i32>} : memref<8x128xf32, #tpu.memory_space<vmem>>, vector<1x128xf32>,
    %176 = vector.extract_strided_slice %158 {offsets = [0, 0], sizes = [1, 128], strides = [1, 1]} : vector<2x128xf32> to vector<1x128xf32>
    %c2_73 = arith.constant 2 : index
    %c0_74 = arith.constant 0 : index
    %177 = vector.load %arg7[%c2_73, %c0_74] : memref<8x128xf32, #tpu.memory_space<vmem>>, vector<1x128xf32>
    tpu.vector_store %arg7[%c2_73, %c0_74], %176 {strides = array<i32>} : memref<8x128xf32, #tpu.memory_space<vmem>>, vector<1x128xf32>,
    %178 = vector.extract_strided_slice %171 {offsets = [0, 0], sizes = [1, 128], strides = [1, 1]} : vector<2x128xf32> to vector<1x128xf32>
    %c3_75 = arith.constant 3 : index
    %c0_76 = arith.constant 0 : index
    %179 = vector.load %arg7[%c3_75, %c0_76] : memref<8x128xf32, #tpu.memory_space<vmem>>, vector<1x128xf32>
    tpu.vector_store %arg7[%c3_75, %c0_76], %178 {strides = array<i32>} : memref<8x128xf32, #tpu.memory_space<vmem>>, vector<1x128xf32>,
    %180 = vector.extract_strided_slice %129 {offsets = [1, 0], sizes = [1, 128], strides = [1, 1]} : vector<2x128xf32> to vector<1x128xf32>
    %c4_77 = arith.constant 4 : index
    %c0_78 = arith.constant 0 : index
    %181 = vector.load %arg7[%c4_77, %c0_78] : memref<8x128xf32, #tpu.memory_space<vmem>>, vector<1x128xf32>
    tpu.vector_store %arg7[%c4_77, %c0_78], %180 {strides = array<i32>} : memref<8x128xf32, #tpu.memory_space<vmem>>, vector<1x128xf32>,
    %182 = vector.extract_strided_slice %145 {offsets = [1, 0], sizes = [1, 128], strides = [1, 1]} : vector<2x128xf32> to vector<1x128xf32>
    %c5_79 = arith.constant 5 : index
    %c0_80 = arith.constant 0 : index
    %183 = vector.load %arg7[%c5_79, %c0_80] : memref<8x128xf32, #tpu.memory_space<vmem>>, vector<1x128xf32>
    tpu.vector_store %arg7[%c5_79, %c0_80], %182 {strides = array<i32>} : memref<8x128xf32, #tpu.memory_space<vmem>>, vector<1x128xf32>,
    %184 = vector.extract_strided_slice %158 {offsets = [1, 0], sizes = [1, 128], strides = [1, 1]} : vector<2x128xf32> to vector<1x128xf32>
    %c6_81 = arith.constant 6 : index
    %c0_82 = arith.constant 0 : index
    %185 = vector.load %arg7[%c6_81, %c0_82] : memref<8x128xf32, #tpu.memory_space<vmem>>, vector<1x128xf32>
    tpu.vector_store %arg7[%c6_81, %c0_82], %184 {strides = array<i32>} : memref<8x128xf32, #tpu.memory_space<vmem>>, vector<1x128xf32>,
    %186 = vector.extract_strided_slice %171 {offsets = [1, 0], sizes = [1, 128], strides = [1, 1]} : vector<2x128xf32> to vector<1x128xf32>
    %c7_83 = arith.constant 7 : index
    %c0_84 = arith.constant 0 : index
    %187 = vector.load %arg7[%c7_83, %c0_84] : memref<8x128xf32, #tpu.memory_space<vmem>>, vector<1x128xf32>
    tpu.vector_store %arg7[%c7_83, %c0_84], %186 {strides = array<i32>} : memref<8x128xf32, #tpu.memory_space<vmem>>, vector<1x128xf32>,
    %c0_85 = arith.constant 0 : index
    %c0_86 = arith.constant 0 : index
    %188 = vector.load %arg7[%c0_85, %c0_86] : memref<8x128xf32, #tpu.memory_space<vmem>>, vector<8x128xf32>
    %c128_87 = arith.constant 128 : index
    %c0_88 = arith.constant 0 : index
    %189 = vector.load %arg5[%c128_87, %c0_88] : memref<384x384xbf16, #tpu.memory_space<vmem>>, vector<128x384xbf16>
    %190 = arith.truncf %188 : vector<8x128xf32> to vector<8x128xbf16>
    %cst_89 = arith.constant dense<0.000000e+00> : vector<8x384xf32>
    %191 = tpu.matmul %190, %189, %cst_89 {dimension_numbers = #tpu.dot_dimension_numbers<[1], [0], [0], [1], [0, 0, 1, 1], [], []>} : vector<8x128xbf16>, vector<128x384xbf16>, vector<8x384xf32> -> vector<8x384xf32>
    %c10 = arith.constant 10 : index
    %c0_90 = arith.constant 0 : index
    %192 = vector.load %arg6[%c10, %c0_90] : memref<32x384xf32, #tpu.memory_space<vmem>>, vector<1x384xf32>
    %193 = vector.broadcast %192 : vector<1x384xf32> to vector<8x384xf32>
    %194 = arith.addf %191, %193 : vector<8x384xf32>
    %195 = vector.extract_strided_slice %194 {offsets = [0, 0], sizes = [8, 128], strides = [1, 1]} : vector<8x384xf32> to vector<8x128xf32>
    %cst_91 = arith.constant 0.176776692 : f32
    %196 = vector.broadcast %cst_91 : f32 to vector<8x128xf32>
    %197 = arith.mulf %195, %196 : vector<8x128xf32>
    %198 = vector.shape_cast %197 : vector<8x128xf32> to vector<2x4x128xf32>
    %199 = vector.extract_strided_slice %194 {offsets = [0, 128], sizes = [8, 128], strides = [1, 1]} : vector<8x384xf32> to vector<8x128xf32>
    %200 = vector.shape_cast %199 : vector<8x128xf32> to vector<2x4x128xf32>
    %201 = vector.extract_strided_slice %194 {offsets = [0, 256], sizes = [8, 128], strides = [1, 1]} : vector<8x384xf32> to vector<8x128xf32>
    %202 = vector.extract_strided_slice %198 {offsets = [0, 0, 0], sizes = [2, 4, 32], strides = [1, 1, 1]} : vector<2x4x128xf32> to vector<2x4x32xf32>
    %203 = arith.truncf %202 : vector<2x4x32xf32> to vector<2x4x32xbf16>
    %204 = vector.extract_strided_slice %200 {offsets = [0, 0, 0], sizes = [2, 4, 32], strides = [1, 1, 1]} : vector<2x4x128xf32> to vector<2x4x32xf32>
    %205 = arith.truncf %204 : vector<2x4x32xf32> to vector<2x4x32xbf16>
    %c1216 = arith.constant 1216 : index
    %c0_92 = arith.constant 0 : index
    %206 = vector.load %arg3[%c1216, %c0_92] : memref<2240x128xbf16, #tpu.memory_space<vmem>>, vector<32x128xbf16>
    %207 = vector.extract_strided_slice %201 {offsets = [0, 0], sizes = [8, 32], strides = [1, 1]} : vector<8x128xf32> to vector<8x32xf32>
    %208 = arith.truncf %207 : vector<8x32xf32> to vector<8x32xbf16>
    %cst_93 = arith.constant dense<0.000000e+00> : vector<8x128xf32>
    %209 = tpu.matmul %208, %206, %cst_93 {dimension_numbers = #tpu.dot_dimension_numbers<[1], [0], [0], [1], [0, 0, 1, 1], [], []>} : vector<8x32xbf16>, vector<32x128xbf16>, vector<8x128xf32> -> vector<8x128xf32>
    %210 = vector.shape_cast %209 : vector<8x128xf32> to vector<2x4x128xf32>
    %211 = arith.truncf %210 : vector<2x4x128xf32> to vector<2x4x128xbf16>
    "tpu.trace_start"() <{level = 10 : i32, message = "bqd,bkd->bqk"}> : () -> ()
    %cst_94 = arith.constant dense<0.000000e+00> : vector<2x4x4xf32>
    %212 = tpu.matmul %203, %205, %cst_94 {dimension_numbers = #tpu.dot_dimension_numbers<[2], [2], [1], [1], [0, 0, 0, 1, 1, 1], [0], [0]>} : vector<2x4x32xbf16>, vector<2x4x32xbf16>, vector<2x4x4xf32> -> vector<2x4x4xf32>
    "tpu.trace_stop"() : () -> ()
    %cst_95 = arith.constant dense<0xFF800000> : vector<2x4xf32>
    %213 = vector.multi_reduction <maximumf>, %212, %cst_95 [2] : vector<2x4x4xf32> to vector<2x4xf32>
    %214 = vector.shape_cast %213 : vector<2x4xf32> to vector<2x4x1xf32>
    %215 = vector.broadcast %214 : vector<2x4x1xf32> to vector<2x4x4xf32>
    %216 = arith.subf %212, %215 : vector<2x4x4xf32>
    %217 = math.exp %216 : vector<2x4x4xf32>
    %cst_96 = arith.constant dense<0.000000e+00> : vector<2x4xf32>
    %218 = vector.multi_reduction <add>, %217, %cst_96 [2] : vector<2x4x4xf32> to vector<2x4xf32>
    %219 = vector.shape_cast %218 : vector<2x4xf32> to vector<2x4x1xf32>
    %220 = tpu.reciprocal %219 {approx = true} : vector<2x4x1xf32> -> vector<2x4x1xf32>
    %221 = vector.broadcast %220 : vector<2x4x1xf32> to vector<2x4x4xf32>
    %222 = arith.mulf %217, %221 : vector<2x4x4xf32>
    %223 = arith.truncf %222 : vector<2x4x4xf32> to vector<2x4x4xbf16>
    "tpu.trace_start"() <{level = 10 : i32, message = "bqk,bkd->bqd"}> : () -> ()
    %cst_97 = arith.constant dense<0.000000e+00> : vector<2x4x128xf32>
    %224 = tpu.matmul %223, %211, %cst_97 {dimension_numbers = #tpu.dot_dimension_numbers<[2], [1], [1], [2], [0, 0, 0, 1, 1, 2], [0], [0]>} : vector<2x4x4xbf16>, vector<2x4x128xbf16>, vector<2x4x128xf32> -> vector<2x4x128xf32>
    "tpu.trace_stop"() : () -> ()
    %225 = vector.extract_strided_slice %198 {offsets = [0, 0, 32], sizes = [2, 4, 32], strides = [1, 1, 1]} : vector<2x4x128xf32> to vector<2x4x32xf32>
    %226 = arith.truncf %225 : vector<2x4x32xf32> to vector<2x4x32xbf16>
    %227 = vector.extract_strided_slice %200 {offsets = [0, 0, 32], sizes = [2, 4, 32], strides = [1, 1, 1]} : vector<2x4x128xf32> to vector<2x4x32xf32>
    %228 = arith.truncf %227 : vector<2x4x32xf32> to vector<2x4x32xbf16>
    %c1248 = arith.constant 1248 : index
    %c0_98 = arith.constant 0 : index
    %229 = vector.load %arg3[%c1248, %c0_98] : memref<2240x128xbf16, #tpu.memory_space<vmem>>, vector<32x128xbf16>
    %230 = vector.extract_strided_slice %201 {offsets = [0, 32], sizes = [8, 32], strides = [1, 1]} : vector<8x128xf32> to vector<8x32xf32>
    %231 = arith.truncf %230 : vector<8x32xf32> to vector<8x32xbf16>
    %cst_99 = arith.constant dense<0.000000e+00> : vector<8x128xf32>
    %232 = tpu.matmul %231, %229, %cst_99 {dimension_numbers = #tpu.dot_dimension_numbers<[1], [0], [0], [1], [0, 0, 1, 1], [], []>} : vector<8x32xbf16>, vector<32x128xbf16>, vector<8x128xf32> -> vector<8x128xf32>
    %233 = vector.shape_cast %232 : vector<8x128xf32> to vector<2x4x128xf32>
    %234 = arith.truncf %233 : vector<2x4x128xf32> to vector<2x4x128xbf16>
    "tpu.trace_start"() <{level = 10 : i32, message = "bqd,bkd->bqk"}> : () -> ()
    %cst_100 = arith.constant dense<0.000000e+00> : vector<2x4x4xf32>
    %235 = tpu.matmul %226, %228, %cst_100 {dimension_numbers = #tpu.dot_dimension_numbers<[2], [2], [1], [1], [0, 0, 0, 1, 1, 1], [0], [0]>} : vector<2x4x32xbf16>, vector<2x4x32xbf16>, vector<2x4x4xf32> -> vector<2x4x4xf32>
    "tpu.trace_stop"() : () -> ()
    %cst_101 = arith.constant dense<0xFF800000> : vector<2x4xf32>
    %236 = vector.multi_reduction <maximumf>, %235, %cst_101 [2] : vector<2x4x4xf32> to vector<2x4xf32>
    %237 = vector.shape_cast %236 : vector<2x4xf32> to vector<2x4x1xf32>
    %238 = vector.broadcast %237 : vector<2x4x1xf32> to vector<2x4x4xf32>
    %239 = arith.subf %235, %238 : vector<2x4x4xf32>
    %240 = math.exp %239 : vector<2x4x4xf32>
    %cst_102 = arith.constant dense<0.000000e+00> : vector<2x4xf32>
    %241 = vector.multi_reduction <add>, %240, %cst_102 [2] : vector<2x4x4xf32> to vector<2x4xf32>
    %242 = vector.shape_cast %241 : vector<2x4xf32> to vector<2x4x1xf32>
    %243 = tpu.reciprocal %242 {approx = true} : vector<2x4x1xf32> -> vector<2x4x1xf32>
    %244 = vector.broadcast %243 : vector<2x4x1xf32> to vector<2x4x4xf32>
    %245 = arith.mulf %240, %244 : vector<2x4x4xf32>
    %246 = arith.truncf %245 : vector<2x4x4xf32> to vector<2x4x4xbf16>
    "tpu.trace_start"() <{level = 10 : i32, message = "bqk,bkd->bqd"}> : () -> ()
    %cst_103 = arith.constant dense<0.000000e+00> : vector<2x4x128xf32>
    %247 = tpu.matmul %246, %234, %cst_103 {dimension_numbers = #tpu.dot_dimension_numbers<[2], [1], [1], [2], [0, 0, 0, 1, 1, 2], [0], [0]>} : vector<2x4x4xbf16>, vector<2x4x128xbf16>, vector<2x4x128xf32> -> vector<2x4x128xf32>
    "tpu.trace_stop"() : () -> ()
    %248 = arith.addf %224, %247 : vector<2x4x128xf32>
    %249 = vector.extract_strided_slice %198 {offsets = [0, 0, 64], sizes = [2, 4, 32], strides = [1, 1, 1]} : vector<2x4x128xf32> to vector<2x4x32xf32>
    %250 = arith.truncf %249 : vector<2x4x32xf32> to vector<2x4x32xbf16>
    %251 = vector.extract_strided_slice %200 {offsets = [0, 0, 64], sizes = [2, 4, 32], strides = [1, 1, 1]} : vector<2x4x128xf32> to vector<2x4x32xf32>
    %252 = arith.truncf %251 : vector<2x4x32xf32> to vector<2x4x32xbf16>
    %c1280 = arith.constant 1280 : index
    %c0_104 = arith.constant 0 : index
    %253 = vector.load %arg3[%c1280, %c0_104] : memref<2240x128xbf16, #tpu.memory_space<vmem>>, vector<32x128xbf16>
    %254 = vector.extract_strided_slice %201 {offsets = [0, 64], sizes = [8, 32], strides = [1, 1]} : vector<8x128xf32> to vector<8x32xf32>
    %255 = arith.truncf %254 : vector<8x32xf32> to vector<8x32xbf16>
    %cst_105 = arith.constant dense<0.000000e+00> : vector<8x128xf32>
    %256 = tpu.matmul %255, %253, %cst_105 {dimension_numbers = #tpu.dot_dimension_numbers<[1], [0], [0], [1], [0, 0, 1, 1], [], []>} : vector<8x32xbf16>, vector<32x128xbf16>, vector<8x128xf32> -> vector<8x128xf32>
    %257 = vector.shape_cast %256 : vector<8x128xf32> to vector<2x4x128xf32>
    %258 = arith.truncf %257 : vector<2x4x128xf32> to vector<2x4x128xbf16>
    "tpu.trace_start"() <{level = 10 : i32, message = "bqd,bkd->bqk"}> : () -> ()
    %cst_106 = arith.constant dense<0.000000e+00> : vector<2x4x4xf32>
    %259 = tpu.matmul %250, %252, %cst_106 {dimension_numbers = #tpu.dot_dimension_numbers<[2], [2], [1], [1], [0, 0, 0, 1, 1, 1], [0], [0]>} : vector<2x4x32xbf16>, vector<2x4x32xbf16>, vector<2x4x4xf32> -> vector<2x4x4xf32>
    "tpu.trace_stop"() : () -> ()
    %cst_107 = arith.constant dense<0xFF800000> : vector<2x4xf32>
    %260 = vector.multi_reduction <maximumf>, %259, %cst_107 [2] : vector<2x4x4xf32> to vector<2x4xf32>
    %261 = vector.shape_cast %260 : vector<2x4xf32> to vector<2x4x1xf32>
    %262 = vector.broadcast %261 : vector<2x4x1xf32> to vector<2x4x4xf32>
    %263 = arith.subf %259, %262 : vector<2x4x4xf32>
    %264 = math.exp %263 : vector<2x4x4xf32>
    %cst_108 = arith.constant dense<0.000000e+00> : vector<2x4xf32>
    %265 = vector.multi_reduction <add>, %264, %cst_108 [2] : vector<2x4x4xf32> to vector<2x4xf32>
    %266 = vector.shape_cast %265 : vector<2x4xf32> to vector<2x4x1xf32>
    %267 = tpu.reciprocal %266 {approx = true} : vector<2x4x1xf32> -> vector<2x4x1xf32>
    %268 = vector.broadcast %267 : vector<2x4x1xf32> to vector<2x4x4xf32>
    %269 = arith.mulf %264, %268 : vector<2x4x4xf32>
    %270 = arith.truncf %269 : vector<2x4x4xf32> to vector<2x4x4xbf16>
    "tpu.trace_start"() <{level = 10 : i32, message = "bqk,bkd->bqd"}> : () -> ()
    %cst_109 = arith.constant dense<0.000000e+00> : vector<2x4x128xf32>
    %271 = tpu.matmul %270, %258, %cst_109 {dimension_numbers = #tpu.dot_dimension_numbers<[2], [1], [1], [2], [0, 0, 0, 1, 1, 2], [0], [0]>} : vector<2x4x4xbf16>, vector<2x4x128xbf16>, vector<2x4x128xf32> -> vector<2x4x128xf32>
    "tpu.trace_stop"() : () -> ()
    %272 = arith.addf %248, %271 : vector<2x4x128xf32>
    %273 = vector.extract_strided_slice %198 {offsets = [0, 0, 96], sizes = [2, 4, 32], strides = [1, 1, 1]} : vector<2x4x128xf32> to vector<2x4x32xf32>
    %274 = arith.truncf %273 : vector<2x4x32xf32> to vector<2x4x32xbf16>
    %275 = vector.extract_strided_slice %200 {offsets = [0, 0, 96], sizes = [2, 4, 32], strides = [1, 1, 1]} : vector<2x4x128xf32> to vector<2x4x32xf32>
    %276 = arith.truncf %275 : vector<2x4x32xf32> to vector<2x4x32xbf16>
    %c1312 = arith.constant 1312 : index
    %c0_110 = arith.constant 0 : index
    %277 = vector.load %arg3[%c1312, %c0_110] : memref<2240x128xbf16, #tpu.memory_space<vmem>>, vector<32x128xbf16>
    %278 = vector.extract_strided_slice %201 {offsets = [0, 96], sizes = [8, 32], strides = [1, 1]} : vector<8x128xf32> to vector<8x32xf32>
    %279 = arith.truncf %278 : vector<8x32xf32> to vector<8x32xbf16>
    %cst_111 = arith.constant dense<0.000000e+00> : vector<8x128xf32>
    %280 = tpu.matmul %279, %277, %cst_111 {dimension_numbers = #tpu.dot_dimension_numbers<[1], [0], [0], [1], [0, 0, 1, 1], [], []>} : vector<8x32xbf16>, vector<32x128xbf16>, vector<8x128xf32> -> vector<8x128xf32>
    %281 = vector.shape_cast %280 : vector<8x128xf32> to vector<2x4x128xf32>
    %282 = arith.truncf %281 : vector<2x4x128xf32> to vector<2x4x128xbf16>
    "tpu.trace_start"() <{level = 10 : i32, message = "bqd,bkd->bqk"}> : () -> ()
    %cst_112 = arith.constant dense<0.000000e+00> : vector<2x4x4xf32>
    %283 = tpu.matmul %274, %276, %cst_112 {dimension_numbers = #tpu.dot_dimension_numbers<[2], [2], [1], [1], [0, 0, 0, 1, 1, 1], [0], [0]>} : vector<2x4x32xbf16>, vector<2x4x32xbf16>, vector<2x4x4xf32> -> vector<2x4x4xf32>
    "tpu.trace_stop"() : () -> ()
    %cst_113 = arith.constant dense<0xFF800000> : vector<2x4xf32>
    %284 = vector.multi_reduction <maximumf>, %283, %cst_113 [2] : vector<2x4x4xf32> to vector<2x4xf32>
    %285 = vector.shape_cast %284 : vector<2x4xf32> to vector<2x4x1xf32>
    %286 = vector.broadcast %285 : vector<2x4x1xf32> to vector<2x4x4xf32>
    %287 = arith.subf %283, %286 : vector<2x4x4xf32>
    %288 = math.exp %287 : vector<2x4x4xf32>
    %cst_114 = arith.constant dense<0.000000e+00> : vector<2x4xf32>
    %289 = vector.multi_reduction <add>, %288, %cst_114 [2] : vector<2x4x4xf32> to vector<2x4xf32>
    %290 = vector.shape_cast %289 : vector<2x4xf32> to vector<2x4x1xf32>
    %291 = tpu.reciprocal %290 {approx = true} : vector<2x4x1xf32> -> vector<2x4x1xf32>
    %292 = vector.broadcast %291 : vector<2x4x1xf32> to vector<2x4x4xf32>
    %293 = arith.mulf %288, %292 : vector<2x4x4xf32>
    %294 = arith.truncf %293 : vector<2x4x4xf32> to vector<2x4x4xbf16>
    "tpu.trace_start"() <{level = 10 : i32, message = "bqk,bkd->bqd"}> : () -> ()
    %cst_115 = arith.constant dense<0.000000e+00> : vector<2x4x128xf32>
    %295 = tpu.matmul %294, %282, %cst_115 {dimension_numbers = #tpu.dot_dimension_numbers<[2], [1], [1], [2], [0, 0, 0, 1, 1, 2], [0], [0]>} : vector<2x4x4xbf16>, vector<2x4x128xbf16>, vector<2x4x128xf32> -> vector<2x4x128xf32>
    "tpu.trace_stop"() : () -> ()
    %296 = arith.addf %272, %295 : vector<2x4x128xf32>
    %297 = vector.shape_cast %296 : vector<2x4x128xf32> to vector<8x128xf32>
    %c12 = arith.constant 12 : index
    %c0_116 = arith.constant 0 : index
    %298 = vector.load %arg6[%c12, %c0_116] : memref<32x384xf32, #tpu.memory_space<vmem>>, vector<1x128xf32>
    %299 = vector.broadcast %298 : vector<1x128xf32> to vector<8x128xf32>
    %300 = arith.addf %297, %299 : vector<8x128xf32>
    %301 = arith.addf %188, %300 : vector<8x128xf32>
    %cst_117 = arith.constant dense<0.000000e+00> : vector<8xf32>
    %302 = vector.multi_reduction <add>, %301, %cst_117 [1] : vector<8x128xf32> to vector<8xf32>
    %303 = vector.shape_cast %302 : vector<8xf32> to vector<8x1xf32>
    %cst_118 = arith.constant 1.280000e+02 : f32
    %304 = vector.broadcast %cst_118 : f32 to vector<8x1xf32>
    %305 = arith.divf %303, %304 : vector<8x1xf32>
    %306 = vector.broadcast %305 : vector<8x1xf32> to vector<8x128xf32>
    %307 = arith.subf %301, %306 : vector<8x128xf32>
    %308 = arith.mulf %307, %307 : vector<8x128xf32>
    %cst_119 = arith.constant dense<0.000000e+00> : vector<8xf32>
    %309 = vector.multi_reduction <add>, %308, %cst_119 [1] : vector<8x128xf32> to vector<8xf32>
    %310 = vector.shape_cast %309 : vector<8xf32> to vector<8x1xf32>
    %cst_120 = arith.constant 1.280000e+02 : f32
    %311 = vector.broadcast %cst_120 : f32 to vector<8x1xf32>
    %312 = arith.divf %310, %311 : vector<8x1xf32>
    %313 = vector.broadcast %305 : vector<8x1xf32> to vector<8x128xf32>
    %314 = arith.subf %301, %313 : vector<8x128xf32>
    %cst_121 = arith.constant 9.99999974E-6 : f32
    %315 = vector.broadcast %cst_121 : f32 to vector<8x1xf32>
    %316 = arith.addf %312, %315 : vector<8x1xf32>
    %317 = math.rsqrt %316 : vector<8x1xf32>
    %318 = vector.broadcast %317 : vector<8x1xf32> to vector<8x128xf32>
    %319 = arith.mulf %314, %318 : vector<8x128xf32>
    %c18 = arith.constant 18 : index
    %c0_122 = arith.constant 0 : index
    %320 = vector.load %arg6[%c18, %c0_122] : memref<32x384xf32, #tpu.memory_space<vmem>>, vector<1x128xf32>
    %321 = vector.broadcast %320 : vector<1x128xf32> to vector<8x128xf32>
    %322 = arith.mulf %319, %321 : vector<8x128xf32>
    %c20 = arith.constant 20 : index
    %c0_123 = arith.constant 0 : index
    %323 = vector.load %arg6[%c20, %c0_123] : memref<32x384xf32, #tpu.memory_space<vmem>>, vector<1x128xf32>
    %324 = vector.broadcast %323 : vector<1x128xf32> to vector<8x128xf32>
    %325 = arith.addf %322, %324 : vector<8x128xf32>
    %c0_124 = arith.constant 0 : index
    %c0_125 = arith.constant 0 : index
    %326 = vector.load %arg4[%c0_124, %c0_125] : memref<768x256xbf16, #tpu.memory_space<vmem>>, vector<128x256xbf16>
    %327 = arith.truncf %325 : vector<8x128xf32> to vector<8x128xbf16>
    %cst_126 = arith.constant dense<0.000000e+00> : vector<8x256xf32>
    %328 = tpu.matmul %327, %326, %cst_126 {dimension_numbers = #tpu.dot_dimension_numbers<[1], [0], [0], [1], [0, 0, 1, 1], [], []>} : vector<8x128xbf16>, vector<128x256xbf16>, vector<8x256xf32> -> vector<8x256xf32>
    %c14 = arith.constant 14 : index
    %c0_127 = arith.constant 0 : index
    %329 = vector.load %arg6[%c14, %c0_127] : memref<32x384xf32, #tpu.memory_space<vmem>>, vector<1x256xf32>
    %330 = vector.broadcast %329 : vector<1x256xf32> to vector<8x256xf32>
    %331 = arith.addf %328, %330 : vector<8x256xf32>
    %cst_128 = arith.constant 0.000000e+00 : f32
    %332 = vector.broadcast %cst_128 : f32 to vector<8x256xf32>
    %333 = arith.maximumf %331, %332 : vector<8x256xf32>
    %c1472 = arith.constant 1472 : index
    %c0_129 = arith.constant 0 : index
    %334 = vector.load %arg3[%c1472, %c0_129] : memref<2240x128xbf16, #tpu.memory_space<vmem>>, vector<256x128xbf16>
    %335 = arith.truncf %333 : vector<8x256xf32> to vector<8x256xbf16>
    %cst_130 = arith.constant dense<0.000000e+00> : vector<8x128xf32>
    %336 = tpu.matmul %335, %334, %cst_130 {dimension_numbers = #tpu.dot_dimension_numbers<[1], [0], [0], [1], [0, 0, 1, 1], [], []>} : vector<8x256xbf16>, vector<256x128xbf16>, vector<8x128xf32> -> vector<8x128xf32>
    %c16 = arith.constant 16 : index
    %c0_131 = arith.constant 0 : index
    %337 = vector.load %arg6[%c16, %c0_131] : memref<32x384xf32, #tpu.memory_space<vmem>>, vector<1x128xf32>
    %338 = vector.broadcast %337 : vector<1x128xf32> to vector<8x128xf32>
    %339 = arith.addf %336, %338 : vector<8x128xf32>
    %340 = arith.addf %325, %339 : vector<8x128xf32>
    %cst_132 = arith.constant dense<0.000000e+00> : vector<8xf32>
    %341 = vector.multi_reduction <add>, %340, %cst_132 [1] : vector<8x128xf32> to vector<8xf32>
    %342 = vector.shape_cast %341 : vector<8xf32> to vector<8x1xf32>
    %cst_133 = arith.constant 1.280000e+02 : f32
    %343 = vector.broadcast %cst_133 : f32 to vector<8x1xf32>
    %344 = arith.divf %342, %343 : vector<8x1xf32>
    %345 = vector.broadcast %344 : vector<8x1xf32> to vector<8x128xf32>
    %346 = arith.subf %340, %345 : vector<8x128xf32>
    %347 = arith.mulf %346, %346 : vector<8x128xf32>
    %cst_134 = arith.constant dense<0.000000e+00> : vector<8xf32>
    %348 = vector.multi_reduction <add>, %347, %cst_134 [1] : vector<8x128xf32> to vector<8xf32>
    %349 = vector.shape_cast %348 : vector<8xf32> to vector<8x1xf32>
    %cst_135 = arith.constant 1.280000e+02 : f32
    %350 = vector.broadcast %cst_135 : f32 to vector<8x1xf32>
    %351 = arith.divf %349, %350 : vector<8x1xf32>
    %352 = vector.broadcast %344 : vector<8x1xf32> to vector<8x128xf32>
    %353 = arith.subf %340, %352 : vector<8x128xf32>
    %cst_136 = arith.constant 9.99999974E-6 : f32
    %354 = vector.broadcast %cst_136 : f32 to vector<8x1xf32>
    %355 = arith.addf %351, %354 : vector<8x1xf32>
    %356 = math.rsqrt %355 : vector<8x1xf32>
    %357 = vector.broadcast %356 : vector<8x1xf32> to vector<8x128xf32>
    %358 = arith.mulf %353, %357 : vector<8x128xf32>
    %c22 = arith.constant 22 : index
    %c0_137 = arith.constant 0 : index
    %359 = vector.load %arg6[%c22, %c0_137] : memref<32x384xf32, #tpu.memory_space<vmem>>, vector<1x128xf32>
    %360 = vector.broadcast %359 : vector<1x128xf32> to vector<8x128xf32>
    %361 = arith.mulf %358, %360 : vector<8x128xf32>
    %c24 = arith.constant 24 : index
    %c0_138 = arith.constant 0 : index
    %362 = vector.load %arg6[%c24, %c0_138] : memref<32x384xf32, #tpu.memory_space<vmem>>, vector<1x128xf32>
    %363 = vector.broadcast %362 : vector<1x128xf32> to vector<8x128xf32>
    %364 = arith.addf %361, %363 : vector<8x128xf32>
    %c256_139 = arith.constant 256 : index
    %c0_140 = arith.constant 0 : index
    %365 = vector.load %arg5[%c256_139, %c0_140] : memref<384x384xbf16, #tpu.memory_space<vmem>>, vector<128x384xbf16>
    %366 = arith.truncf %364 : vector<8x128xf32> to vector<8x128xbf16>
    %cst_141 = arith.constant dense<0.000000e+00> : vector<8x384xf32>
    %367 = tpu.matmul %366, %365, %cst_141 {dimension_numbers = #tpu.dot_dimension_numbers<[1], [0], [0], [1], [0, 0, 1, 1], [], []>} : vector<8x128xbf16>, vector<128x384xbf16>, vector<8x384xf32> -> vector<8x384xf32>
    %c11 = arith.constant 11 : index
    %c0_142 = arith.constant 0 : index
    %368 = vector.load %arg6[%c11, %c0_142] : memref<32x384xf32, #tpu.memory_space<vmem>>, vector<1x384xf32>
    %369 = vector.broadcast %368 : vector<1x384xf32> to vector<8x384xf32>
    %370 = arith.addf %367, %369 : vector<8x384xf32>
    %371 = vector.extract_strided_slice %370 {offsets = [0, 0], sizes = [8, 128], strides = [1, 1]} : vector<8x384xf32> to vector<8x128xf32>
    %cst_143 = arith.constant 0.176776692 : f32
    %372 = vector.broadcast %cst_143 : f32 to vector<8x128xf32>
    %373 = arith.mulf %371, %372 : vector<8x128xf32>
    %374 = vector.shape_cast %373 : vector<8x128xf32> to vector<2x4x128xf32>
    %375 = vector.extract_strided_slice %370 {offsets = [0, 128], sizes = [8, 128], strides = [1, 1]} : vector<8x384xf32> to vector<8x128xf32>
    %376 = vector.shape_cast %375 : vector<8x128xf32> to vector<2x4x128xf32>
    %377 = vector.extract_strided_slice %370 {offsets = [0, 256], sizes = [8, 128], strides = [1, 1]} : vector<8x384xf32> to vector<8x128xf32>
    %378 = vector.extract_strided_slice %374 {offsets = [0, 0, 0], sizes = [2, 4, 32], strides = [1, 1, 1]} : vector<2x4x128xf32> to vector<2x4x32xf32>
    %379 = arith.truncf %378 : vector<2x4x32xf32> to vector<2x4x32xbf16>
    %380 = vector.extract_strided_slice %376 {offsets = [0, 0, 0], sizes = [2, 4, 32], strides = [1, 1, 1]} : vector<2x4x128xf32> to vector<2x4x32xf32>
    %381 = arith.truncf %380 : vector<2x4x32xf32> to vector<2x4x32xbf16>
    %c1344 = arith.constant 1344 : index
    %c0_144 = arith.constant 0 : index
    %382 = vector.load %arg3[%c1344, %c0_144] : memref<2240x128xbf16, #tpu.memory_space<vmem>>, vector<32x128xbf16>
    %383 = vector.extract_strided_slice %377 {offsets = [0, 0], sizes = [8, 32], strides = [1, 1]} : vector<8x128xf32> to vector<8x32xf32>
    %384 = arith.truncf %383 : vector<8x32xf32> to vector<8x32xbf16>
    %cst_145 = arith.constant dense<0.000000e+00> : vector<8x128xf32>
    %385 = tpu.matmul %384, %382, %cst_145 {dimension_numbers = #tpu.dot_dimension_numbers<[1], [0], [0], [1], [0, 0, 1, 1], [], []>} : vector<8x32xbf16>, vector<32x128xbf16>, vector<8x128xf32> -> vector<8x128xf32>
    %386 = vector.shape_cast %385 : vector<8x128xf32> to vector<2x4x128xf32>
    %387 = arith.truncf %386 : vector<2x4x128xf32> to vector<2x4x128xbf16>
    "tpu.trace_start"() <{level = 10 : i32, message = "bqd,bkd->bqk"}> : () -> ()
    %cst_146 = arith.constant dense<0.000000e+00> : vector<2x4x4xf32>
    %388 = tpu.matmul %379, %381, %cst_146 {dimension_numbers = #tpu.dot_dimension_numbers<[2], [2], [1], [1], [0, 0, 0, 1, 1, 1], [0], [0]>} : vector<2x4x32xbf16>, vector<2x4x32xbf16>, vector<2x4x4xf32> -> vector<2x4x4xf32>
    "tpu.trace_stop"() : () -> ()
    %cst_147 = arith.constant dense<0xFF800000> : vector<2x4xf32>
    %389 = vector.multi_reduction <maximumf>, %388, %cst_147 [2] : vector<2x4x4xf32> to vector<2x4xf32>
    %390 = vector.shape_cast %389 : vector<2x4xf32> to vector<2x4x1xf32>
    %391 = vector.broadcast %390 : vector<2x4x1xf32> to vector<2x4x4xf32>
    %392 = arith.subf %388, %391 : vector<2x4x4xf32>
    %393 = math.exp %392 : vector<2x4x4xf32>
    %cst_148 = arith.constant dense<0.000000e+00> : vector<2x4xf32>
    %394 = vector.multi_reduction <add>, %393, %cst_148 [2] : vector<2x4x4xf32> to vector<2x4xf32>
    %395 = vector.shape_cast %394 : vector<2x4xf32> to vector<2x4x1xf32>
    %396 = tpu.reciprocal %395 {approx = true} : vector<2x4x1xf32> -> vector<2x4x1xf32>
    %397 = vector.broadcast %396 : vector<2x4x1xf32> to vector<2x4x4xf32>
    %398 = arith.mulf %393, %397 : vector<2x4x4xf32>
    %399 = arith.truncf %398 : vector<2x4x4xf32> to vector<2x4x4xbf16>
    "tpu.trace_start"() <{level = 10 : i32, message = "bqk,bkd->bqd"}> : () -> ()
    %cst_149 = arith.constant dense<0.000000e+00> : vector<2x4x128xf32>
    %400 = tpu.matmul %399, %387, %cst_149 {dimension_numbers = #tpu.dot_dimension_numbers<[2], [1], [1], [2], [0, 0, 0, 1, 1, 2], [0], [0]>} : vector<2x4x4xbf16>, vector<2x4x128xbf16>, vector<2x4x128xf32> -> vector<2x4x128xf32>
    "tpu.trace_stop"() : () -> ()
    %401 = vector.extract_strided_slice %374 {offsets = [0, 0, 32], sizes = [2, 4, 32], strides = [1, 1, 1]} : vector<2x4x128xf32> to vector<2x4x32xf32>
    %402 = arith.truncf %401 : vector<2x4x32xf32> to vector<2x4x32xbf16>
    %403 = vector.extract_strided_slice %376 {offsets = [0, 0, 32], sizes = [2, 4, 32], strides = [1, 1, 1]} : vector<2x4x128xf32> to vector<2x4x32xf32>
    %404 = arith.truncf %403 : vector<2x4x32xf32> to vector<2x4x32xbf16>
    %c1376 = arith.constant 1376 : index
    %c0_150 = arith.constant 0 : index
    %405 = vector.load %arg3[%c1376, %c0_150] : memref<2240x128xbf16, #tpu.memory_space<vmem>>, vector<32x128xbf16>
    %406 = vector.extract_strided_slice %377 {offsets = [0, 32], sizes = [8, 32], strides = [1, 1]} : vector<8x128xf32> to vector<8x32xf32>
    %407 = arith.truncf %406 : vector<8x32xf32> to vector<8x32xbf16>
    %cst_151 = arith.constant dense<0.000000e+00> : vector<8x128xf32>
    %408 = tpu.matmul %407, %405, %cst_151 {dimension_numbers = #tpu.dot_dimension_numbers<[1], [0], [0], [1], [0, 0, 1, 1], [], []>} : vector<8x32xbf16>, vector<32x128xbf16>, vector<8x128xf32> -> vector<8x128xf32>
    %409 = vector.shape_cast %408 : vector<8x128xf32> to vector<2x4x128xf32>
    %410 = arith.truncf %409 : vector<2x4x128xf32> to vector<2x4x128xbf16>
    "tpu.trace_start"() <{level = 10 : i32, message = "bqd,bkd->bqk"}> : () -> ()
    %cst_152 = arith.constant dense<0.000000e+00> : vector<2x4x4xf32>
    %411 = tpu.matmul %402, %404, %cst_152 {dimension_numbers = #tpu.dot_dimension_numbers<[2], [2], [1], [1], [0, 0, 0, 1, 1, 1], [0], [0]>} : vector<2x4x32xbf16>, vector<2x4x32xbf16>, vector<2x4x4xf32> -> vector<2x4x4xf32>
    "tpu.trace_stop"() : () -> ()
    %cst_153 = arith.constant dense<0xFF800000> : vector<2x4xf32>
    %412 = vector.multi_reduction <maximumf>, %411, %cst_153 [2] : vector<2x4x4xf32> to vector<2x4xf32>
    %413 = vector.shape_cast %412 : vector<2x4xf32> to vector<2x4x1xf32>
    %414 = vector.broadcast %413 : vector<2x4x1xf32> to vector<2x4x4xf32>
    %415 = arith.subf %411, %414 : vector<2x4x4xf32>
    %416 = math.exp %415 : vector<2x4x4xf32>
    %cst_154 = arith.constant dense<0.000000e+00> : vector<2x4xf32>
    %417 = vector.multi_reduction <add>, %416, %cst_154 [2] : vector<2x4x4xf32> to vector<2x4xf32>
    %418 = vector.shape_cast %417 : vector<2x4xf32> to vector<2x4x1xf32>
    %419 = tpu.reciprocal %418 {approx = true} : vector<2x4x1xf32> -> vector<2x4x1xf32>
    %420 = vector.broadcast %419 : vector<2x4x1xf32> to vector<2x4x4xf32>
    %421 = arith.mulf %416, %420 : vector<2x4x4xf32>
    %422 = arith.truncf %421 : vector<2x4x4xf32> to vector<2x4x4xbf16>
    "tpu.trace_start"() <{level = 10 : i32, message = "bqk,bkd->bqd"}> : () -> ()
    %cst_155 = arith.constant dense<0.000000e+00> : vector<2x4x128xf32>
    %423 = tpu.matmul %422, %410, %cst_155 {dimension_numbers = #tpu.dot_dimension_numbers<[2], [1], [1], [2], [0, 0, 0, 1, 1, 2], [0], [0]>} : vector<2x4x4xbf16>, vector<2x4x128xbf16>, vector<2x4x128xf32> -> vector<2x4x128xf32>
    "tpu.trace_stop"() : () -> ()
    %424 = arith.addf %400, %423 : vector<2x4x128xf32>
    %425 = vector.extract_strided_slice %374 {offsets = [0, 0, 64], sizes = [2, 4, 32], strides = [1, 1, 1]} : vector<2x4x128xf32> to vector<2x4x32xf32>
    %426 = arith.truncf %425 : vector<2x4x32xf32> to vector<2x4x32xbf16>
    %427 = vector.extract_strided_slice %376 {offsets = [0, 0, 64], sizes = [2, 4, 32], strides = [1, 1, 1]} : vector<2x4x128xf32> to vector<2x4x32xf32>
    %428 = arith.truncf %427 : vector<2x4x32xf32> to vector<2x4x32xbf16>
    %c1408 = arith.constant 1408 : index
    %c0_156 = arith.constant 0 : index
    %429 = vector.load %arg3[%c1408, %c0_156] : memref<2240x128xbf16, #tpu.memory_space<vmem>>, vector<32x128xbf16>
    %430 = vector.extract_strided_slice %377 {offsets = [0, 64], sizes = [8, 32], strides = [1, 1]} : vector<8x128xf32> to vector<8x32xf32>
    %431 = arith.truncf %430 : vector<8x32xf32> to vector<8x32xbf16>
    %cst_157 = arith.constant dense<0.000000e+00> : vector<8x128xf32>
    %432 = tpu.matmul %431, %429, %cst_157 {dimension_numbers = #tpu.dot_dimension_numbers<[1], [0], [0], [1], [0, 0, 1, 1], [], []>} : vector<8x32xbf16>, vector<32x128xbf16>, vector<8x128xf32> -> vector<8x128xf32>
    %433 = vector.shape_cast %432 : vector<8x128xf32> to vector<2x4x128xf32>
    %434 = arith.truncf %433 : vector<2x4x128xf32> to vector<2x4x128xbf16>
    "tpu.trace_start"() <{level = 10 : i32, message = "bqd,bkd->bqk"}> : () -> ()
    %cst_158 = arith.constant dense<0.000000e+00> : vector<2x4x4xf32>
    %435 = tpu.matmul %426, %428, %cst_158 {dimension_numbers = #tpu.dot_dimension_numbers<[2], [2], [1], [1], [0, 0, 0, 1, 1, 1], [0], [0]>} : vector<2x4x32xbf16>, vector<2x4x32xbf16>, vector<2x4x4xf32> -> vector<2x4x4xf32>
    "tpu.trace_stop"() : () -> ()
    %cst_159 = arith.constant dense<0xFF800000> : vector<2x4xf32>
    %436 = vector.multi_reduction <maximumf>, %435, %cst_159 [2] : vector<2x4x4xf32> to vector<2x4xf32>
    %437 = vector.shape_cast %436 : vector<2x4xf32> to vector<2x4x1xf32>
    %438 = vector.broadcast %437 : vector<2x4x1xf32> to vector<2x4x4xf32>
    %439 = arith.subf %435, %438 : vector<2x4x4xf32>
    %440 = math.exp %439 : vector<2x4x4xf32>
    %cst_160 = arith.constant dense<0.000000e+00> : vector<2x4xf32>
    %441 = vector.multi_reduction <add>, %440, %cst_160 [2] : vector<2x4x4xf32> to vector<2x4xf32>
    %442 = vector.shape_cast %441 : vector<2x4xf32> to vector<2x4x1xf32>
    %443 = tpu.reciprocal %442 {approx = true} : vector<2x4x1xf32> -> vector<2x4x1xf32>
    %444 = vector.broadcast %443 : vector<2x4x1xf32> to vector<2x4x4xf32>
    %445 = arith.mulf %440, %444 : vector<2x4x4xf32>
    %446 = arith.truncf %445 : vector<2x4x4xf32> to vector<2x4x4xbf16>
    "tpu.trace_start"() <{level = 10 : i32, message = "bqk,bkd->bqd"}> : () -> ()
    %cst_161 = arith.constant dense<0.000000e+00> : vector<2x4x128xf32>
    %447 = tpu.matmul %446, %434, %cst_161 {dimension_numbers = #tpu.dot_dimension_numbers<[2], [1], [1], [2], [0, 0, 0, 1, 1, 2], [0], [0]>} : vector<2x4x4xbf16>, vector<2x4x128xbf16>, vector<2x4x128xf32> -> vector<2x4x128xf32>
    "tpu.trace_stop"() : () -> ()
    %448 = arith.addf %424, %447 : vector<2x4x128xf32>
    %449 = vector.extract_strided_slice %374 {offsets = [0, 0, 96], sizes = [2, 4, 32], strides = [1, 1, 1]} : vector<2x4x128xf32> to vector<2x4x32xf32>
    %450 = arith.truncf %449 : vector<2x4x32xf32> to vector<2x4x32xbf16>
    %451 = vector.extract_strided_slice %376 {offsets = [0, 0, 96], sizes = [2, 4, 32], strides = [1, 1, 1]} : vector<2x4x128xf32> to vector<2x4x32xf32>
    %452 = arith.truncf %451 : vector<2x4x32xf32> to vector<2x4x32xbf16>
    %c1440 = arith.constant 1440 : index
    %c0_162 = arith.constant 0 : index
    %453 = vector.load %arg3[%c1440, %c0_162] : memref<2240x128xbf16, #tpu.memory_space<vmem>>, vector<32x128xbf16>
    %454 = vector.extract_strided_slice %377 {offsets = [0, 96], sizes = [8, 32], strides = [1, 1]} : vector<8x128xf32> to vector<8x32xf32>
    %455 = arith.truncf %454 : vector<8x32xf32> to vector<8x32xbf16>
    %cst_163 = arith.constant dense<0.000000e+00> : vector<8x128xf32>
    %456 = tpu.matmul %455, %453, %cst_163 {dimension_numbers = #tpu.dot_dimension_numbers<[1], [0], [0], [1], [0, 0, 1, 1], [], []>} : vector<8x32xbf16>, vector<32x128xbf16>, vector<8x128xf32> -> vector<8x128xf32>
    %457 = vector.shape_cast %456 : vector<8x128xf32> to vector<2x4x128xf32>
    %458 = arith.truncf %457 : vector<2x4x128xf32> to vector<2x4x128xbf16>
    "tpu.trace_start"() <{level = 10 : i32, message = "bqd,bkd->bqk"}> : () -> ()
    %cst_164 = arith.constant dense<0.000000e+00> : vector<2x4x4xf32>
    %459 = tpu.matmul %450, %452, %cst_164 {dimension_numbers = #tpu.dot_dimension_numbers<[2], [2], [1], [1], [0, 0, 0, 1, 1, 1], [0], [0]>} : vector<2x4x32xbf16>, vector<2x4x32xbf16>, vector<2x4x4xf32> -> vector<2x4x4xf32>
    "tpu.trace_stop"() : () -> ()
    %cst_165 = arith.constant dense<0xFF800000> : vector<2x4xf32>
    %460 = vector.multi_reduction <maximumf>, %459, %cst_165 [2] : vector<2x4x4xf32> to vector<2x4xf32>
    %461 = vector.shape_cast %460 : vector<2x4xf32> to vector<2x4x1xf32>
    %462 = vector.broadcast %461 : vector<2x4x1xf32> to vector<2x4x4xf32>
    %463 = arith.subf %459, %462 : vector<2x4x4xf32>
    %464 = math.exp %463 : vector<2x4x4xf32>
    %cst_166 = arith.constant dense<0.000000e+00> : vector<2x4xf32>
    %465 = vector.multi_reduction <add>, %464, %cst_166 [2] : vector<2x4x4xf32> to vector<2x4xf32>
    %466 = vector.shape_cast %465 : vector<2x4xf32> to vector<2x4x1xf32>
    %467 = tpu.reciprocal %466 {approx = true} : vector<2x4x1xf32> -> vector<2x4x1xf32>
    %468 = vector.broadcast %467 : vector<2x4x1xf32> to vector<2x4x4xf32>
    %469 = arith.mulf %464, %468 : vector<2x4x4xf32>
    %470 = arith.truncf %469 : vector<2x4x4xf32> to vector<2x4x4xbf16>
    "tpu.trace_start"() <{level = 10 : i32, message = "bqk,bkd->bqd"}> : () -> ()
    %cst_167 = arith.constant dense<0.000000e+00> : vector<2x4x128xf32>
    %471 = tpu.matmul %470, %458, %cst_167 {dimension_numbers = #tpu.dot_dimension_numbers<[2], [1], [1], [2], [0, 0, 0, 1, 1, 2], [0], [0]>} : vector<2x4x4xbf16>, vector<2x4x128xbf16>, vector<2x4x128xf32> -> vector<2x4x128xf32>
    "tpu.trace_stop"() : () -> ()
    %472 = arith.addf %448, %471 : vector<2x4x128xf32>
    %473 = vector.shape_cast %472 : vector<2x4x128xf32> to vector<8x128xf32>
    %c13 = arith.constant 13 : index
    %c0_168 = arith.constant 0 : index
    %474 = vector.load %arg6[%c13, %c0_168] : memref<32x384xf32, #tpu.memory_space<vmem>>, vector<1x128xf32>
    %475 = vector.broadcast %474 : vector<1x128xf32> to vector<8x128xf32>
    %476 = arith.addf %473, %475 : vector<8x128xf32>
    %477 = arith.addf %364, %476 : vector<8x128xf32>
    %cst_169 = arith.constant dense<0.000000e+00> : vector<8xf32>
    %478 = vector.multi_reduction <add>, %477, %cst_169 [1] : vector<8x128xf32> to vector<8xf32>
    %479 = vector.shape_cast %478 : vector<8xf32> to vector<8x1xf32>
    %cst_170 = arith.constant 1.280000e+02 : f32
    %480 = vector.broadcast %cst_170 : f32 to vector<8x1xf32>
    %481 = arith.divf %479, %480 : vector<8x1xf32>
    %482 = vector.broadcast %481 : vector<8x1xf32> to vector<8x128xf32>
    %483 = arith.subf %477, %482 : vector<8x128xf32>
    %484 = arith.mulf %483, %483 : vector<8x128xf32>
    %cst_171 = arith.constant dense<0.000000e+00> : vector<8xf32>
    %485 = vector.multi_reduction <add>, %484, %cst_171 [1] : vector<8x128xf32> to vector<8xf32>
    %486 = vector.shape_cast %485 : vector<8xf32> to vector<8x1xf32>
    %cst_172 = arith.constant 1.280000e+02 : f32
    %487 = vector.broadcast %cst_172 : f32 to vector<8x1xf32>
    %488 = arith.divf %486, %487 : vector<8x1xf32>
    %489 = vector.broadcast %481 : vector<8x1xf32> to vector<8x128xf32>
    %490 = arith.subf %477, %489 : vector<8x128xf32>
    %cst_173 = arith.constant 9.99999974E-6 : f32
    %491 = vector.broadcast %cst_173 : f32 to vector<8x1xf32>
    %492 = arith.addf %488, %491 : vector<8x1xf32>
    %493 = math.rsqrt %492 : vector<8x1xf32>
    %494 = vector.broadcast %493 : vector<8x1xf32> to vector<8x128xf32>
    %495 = arith.mulf %490, %494 : vector<8x128xf32>
    %c19 = arith.constant 19 : index
    %c0_174 = arith.constant 0 : index
    %496 = vector.load %arg6[%c19, %c0_174] : memref<32x384xf32, #tpu.memory_space<vmem>>, vector<1x128xf32>
    %497 = vector.broadcast %496 : vector<1x128xf32> to vector<8x128xf32>
    %498 = arith.mulf %495, %497 : vector<8x128xf32>
    %c21 = arith.constant 21 : index
    %c0_175 = arith.constant 0 : index
    %499 = vector.load %arg6[%c21, %c0_175] : memref<32x384xf32, #tpu.memory_space<vmem>>, vector<1x128xf32>
    %500 = vector.broadcast %499 : vector<1x128xf32> to vector<8x128xf32>
    %501 = arith.addf %498, %500 : vector<8x128xf32>
    %c128_176 = arith.constant 128 : index
    %c0_177 = arith.constant 0 : index
    %502 = vector.load %arg4[%c128_176, %c0_177] : memref<768x256xbf16, #tpu.memory_space<vmem>>, vector<128x256xbf16>
    %503 = arith.truncf %501 : vector<8x128xf32> to vector<8x128xbf16>
    %cst_178 = arith.constant dense<0.000000e+00> : vector<8x256xf32>
    %504 = tpu.matmul %503, %502, %cst_178 {dimension_numbers = #tpu.dot_dimension_numbers<[1], [0], [0], [1], [0, 0, 1, 1], [], []>} : vector<8x128xbf16>, vector<128x256xbf16>, vector<8x256xf32> -> vector<8x256xf32>
    %c15 = arith.constant 15 : index
    %c0_179 = arith.constant 0 : index
    %505 = vector.load %arg6[%c15, %c0_179] : memref<32x384xf32, #tpu.memory_space<vmem>>, vector<1x256xf32>
    %506 = vector.broadcast %505 : vector<1x256xf32> to vector<8x256xf32>
    %507 = arith.addf %504, %506 : vector<8x256xf32>
    %cst_180 = arith.constant 0.000000e+00 : f32
    %508 = vector.broadcast %cst_180 : f32 to vector<8x256xf32>
    %509 = arith.maximumf %507, %508 : vector<8x256xf32>
    %c1728 = arith.constant 1728 : index
    %c0_181 = arith.constant 0 : index
    %510 = vector.load %arg3[%c1728, %c0_181] : memref<2240x128xbf16, #tpu.memory_space<vmem>>, vector<256x128xbf16>
    %511 = arith.truncf %509 : vector<8x256xf32> to vector<8x256xbf16>
    %cst_182 = arith.constant dense<0.000000e+00> : vector<8x128xf32>
    %512 = tpu.matmul %511, %510, %cst_182 {dimension_numbers = #tpu.dot_dimension_numbers<[1], [0], [0], [1], [0, 0, 1, 1], [], []>} : vector<8x256xbf16>, vector<256x128xbf16>, vector<8x128xf32> -> vector<8x128xf32>
    %c17 = arith.constant 17 : index
    %c0_183 = arith.constant 0 : index
    %513 = vector.load %arg6[%c17, %c0_183] : memref<32x384xf32, #tpu.memory_space<vmem>>, vector<1x128xf32>
    %514 = vector.broadcast %513 : vector<1x128xf32> to vector<8x128xf32>
    %515 = arith.addf %512, %514 : vector<8x128xf32>
    %516 = arith.addf %501, %515 : vector<8x128xf32>
    %cst_184 = arith.constant dense<0.000000e+00> : vector<8xf32>
    %517 = vector.multi_reduction <add>, %516, %cst_184 [1] : vector<8x128xf32> to vector<8xf32>
    %518 = vector.shape_cast %517 : vector<8xf32> to vector<8x1xf32>
    %cst_185 = arith.constant 1.280000e+02 : f32
    %519 = vector.broadcast %cst_185 : f32 to vector<8x1xf32>
    %520 = arith.divf %518, %519 : vector<8x1xf32>
    %521 = vector.broadcast %520 : vector<8x1xf32> to vector<8x128xf32>
    %522 = arith.subf %516, %521 : vector<8x128xf32>
    %523 = arith.mulf %522, %522 : vector<8x128xf32>
    %cst_186 = arith.constant dense<0.000000e+00> : vector<8xf32>
    %524 = vector.multi_reduction <add>, %523, %cst_186 [1] : vector<8x128xf32> to vector<8xf32>
    %525 = vector.shape_cast %524 : vector<8xf32> to vector<8x1xf32>
    %cst_187 = arith.constant 1.280000e+02 : f32
    %526 = vector.broadcast %cst_187 : f32 to vector<8x1xf32>
    %527 = arith.divf %525, %526 : vector<8x1xf32>
    %528 = vector.broadcast %520 : vector<8x1xf32> to vector<8x128xf32>
    %529 = arith.subf %516, %528 : vector<8x128xf32>
    %cst_188 = arith.constant 9.99999974E-6 : f32
    %530 = vector.broadcast %cst_188 : f32 to vector<8x1xf32>
    %531 = arith.addf %527, %530 : vector<8x1xf32>
    %532 = math.rsqrt %531 : vector<8x1xf32>
    %533 = vector.broadcast %532 : vector<8x1xf32> to vector<8x128xf32>
    %534 = arith.mulf %529, %533 : vector<8x128xf32>
    %c23 = arith.constant 23 : index
    %c0_189 = arith.constant 0 : index
    %535 = vector.load %arg6[%c23, %c0_189] : memref<32x384xf32, #tpu.memory_space<vmem>>, vector<1x128xf32>
    %536 = vector.broadcast %535 : vector<1x128xf32> to vector<8x128xf32>
    %537 = arith.mulf %534, %536 : vector<8x128xf32>
    %c25 = arith.constant 25 : index
    %c0_190 = arith.constant 0 : index
    %538 = vector.load %arg6[%c25, %c0_190] : memref<32x384xf32, #tpu.memory_space<vmem>>, vector<1x128xf32>
    %539 = vector.broadcast %538 : vector<1x128xf32> to vector<8x128xf32>
    %540 = arith.addf %537, %539 : vector<8x128xf32>
    %c0_191 = arith.constant 0 : index
    %c0_192 = arith.constant 0 : index
    %541 = vector.load %arg7[%c0_191, %c0_192] : memref<8x128xf32, #tpu.memory_space<vmem>>, vector<8x128xf32>
    tpu.vector_store %arg7[%c0_191, %c0_192], %540 {strides = array<i32>} : memref<8x128xf32, #tpu.memory_space<vmem>>, vector<8x128xf32>,
    %542 = vector.shape_cast %540 : vector<8x128xf32> to vector<2x4x128xf32>
    %c26 = arith.constant 26 : index
    %c0_193 = arith.constant 0 : index
    %543 = vector.load %arg6[%c26, %c0_193] : memref<32x384xf32, #tpu.memory_space<vmem>>, vector<1x256xf32>
    %c256_194 = arith.constant 256 : index
    %c0_195 = arith.constant 0 : index
    %544 = vector.load %arg4[%c256_194, %c0_195] : memref<768x256xbf16, #tpu.memory_space<vmem>>, vector<128x256xbf16>
    %545 = vector.extract_strided_slice %542 {offsets = [0, 0, 0], sizes = [2, 1, 128], strides = [1, 1, 1]} : vector<2x4x128xf32> to vector<2x1x128xf32>
    %546 = vector.shape_cast %545 : vector<2x1x128xf32> to vector<2x128xf32>
    %547 = arith.truncf %546 : vector<2x128xf32> to vector<2x128xbf16>
    %cst_196 = arith.constant dense<0.000000e+00> : vector<2x256xf32>
    %548 = tpu.matmul %547, %544, %cst_196 {dimension_numbers = #tpu.dot_dimension_numbers<[1], [0], [0], [1], [0, 0, 1, 1], [], []>} : vector<2x128xbf16>, vector<128x256xbf16>, vector<2x256xf32> -> vector<2x256xf32>
    %549 = vector.broadcast %543 : vector<1x256xf32> to vector<2x256xf32>
    %550 = arith.addf %549, %548 : vector<2x256xf32>
    %c384 = arith.constant 384 : index
    %c0_197 = arith.constant 0 : index
    %551 = vector.load %arg4[%c384, %c0_197] : memref<768x256xbf16, #tpu.memory_space<vmem>>, vector<128x256xbf16>
    %552 = vector.extract_strided_slice %542 {offsets = [0, 1, 0], sizes = [2, 1, 128], strides = [1, 1, 1]} : vector<2x4x128xf32> to vector<2x1x128xf32>
    %553 = vector.shape_cast %552 : vector<2x1x128xf32> to vector<2x128xf32>
    %554 = arith.truncf %553 : vector<2x128xf32> to vector<2x128xbf16>
    %cst_198 = arith.constant dense<0.000000e+00> : vector<2x256xf32>
    %555 = tpu.matmul %554, %551, %cst_198 {dimension_numbers = #tpu.dot_dimension_numbers<[1], [0], [0], [1], [0, 0, 1, 1], [], []>} : vector<2x128xbf16>, vector<128x256xbf16>, vector<2x256xf32> -> vector<2x256xf32>
    %556 = arith.addf %550, %555 : vector<2x256xf32>
    %c512 = arith.constant 512 : index
    %c0_199 = arith.constant 0 : index
    %557 = vector.load %arg4[%c512, %c0_199] : memref<768x256xbf16, #tpu.memory_space<vmem>>, vector<128x256xbf16>
    %558 = vector.extract_strided_slice %542 {offsets = [0, 2, 0], sizes = [2, 1, 128], strides = [1, 1, 1]} : vector<2x4x128xf32> to vector<2x1x128xf32>
    %559 = vector.shape_cast %558 : vector<2x1x128xf32> to vector<2x128xf32>
    %560 = arith.truncf %559 : vector<2x128xf32> to vector<2x128xbf16>
    %cst_200 = arith.constant dense<0.000000e+00> : vector<2x256xf32>
    %561 = tpu.matmul %560, %557, %cst_200 {dimension_numbers = #tpu.dot_dimension_numbers<[1], [0], [0], [1], [0, 0, 1, 1], [], []>} : vector<2x128xbf16>, vector<128x256xbf16>, vector<2x256xf32> -> vector<2x256xf32>
    %562 = arith.addf %556, %561 : vector<2x256xf32>
    %c640 = arith.constant 640 : index
    %c0_201 = arith.constant 0 : index
    %563 = vector.load %arg4[%c640, %c0_201] : memref<768x256xbf16, #tpu.memory_space<vmem>>, vector<128x256xbf16>
    %564 = vector.extract_strided_slice %542 {offsets = [0, 3, 0], sizes = [2, 1, 128], strides = [1, 1, 1]} : vector<2x4x128xf32> to vector<2x1x128xf32>
    %565 = vector.shape_cast %564 : vector<2x1x128xf32> to vector<2x128xf32>
    %566 = arith.truncf %565 : vector<2x128xf32> to vector<2x128xbf16>
    %cst_202 = arith.constant dense<0.000000e+00> : vector<2x256xf32>
    %567 = tpu.matmul %566, %563, %cst_202 {dimension_numbers = #tpu.dot_dimension_numbers<[1], [0], [0], [1], [0, 0, 1, 1], [], []>} : vector<2x128xbf16>, vector<128x256xbf16>, vector<2x256xf32> -> vector<2x256xf32>
    %568 = arith.addf %562, %567 : vector<2x256xf32>
    %cst_203 = arith.constant 0.000000e+00 : f32
    %569 = vector.broadcast %cst_203 : f32 to vector<2x256xf32>
    %570 = arith.maximumf %568, %569 : vector<2x256xf32>
    %c1984 = arith.constant 1984 : index
    %c0_204 = arith.constant 0 : index
    %571 = vector.load %arg3[%c1984, %c0_204] : memref<2240x128xbf16, #tpu.memory_space<vmem>>, vector<256x128xbf16>
    %572 = arith.truncf %570 : vector<2x256xf32> to vector<2x256xbf16>
    %cst_205 = arith.constant dense<0.000000e+00> : vector<2x128xf32>
    %573 = tpu.matmul %572, %571, %cst_205 {dimension_numbers = #tpu.dot_dimension_numbers<[1], [0], [0], [1], [0, 0, 1, 1], [], []>} : vector<2x256xbf16>, vector<256x128xbf16>, vector<2x128xf32> -> vector<2x128xf32>
    %c27 = arith.constant 27 : index
    %c0_206 = arith.constant 0 : index
    %574 = vector.load %arg6[%c27, %c0_206] : memref<32x384xf32, #tpu.memory_space<vmem>>, vector<1x128xf32>
    %575 = vector.broadcast %574 : vector<1x128xf32> to vector<2x128xf32>
    %576 = arith.addf %573, %575 : vector<2x128xf32>
    %577 = tpu.iota {dimensions = array<i32: 1>} : vector<2x128xi32>
    %c3_i32 = arith.constant 3 : i32
    %578 = vector.broadcast %c3_i32 : i32 to vector<2x128xi32>
    %579 = arith.cmpi sge, %577, %578 : vector<2x128xi32>
    %c6_i32 = arith.constant 6 : i32
    %580 = vector.broadcast %c6_i32 : i32 to vector<2x128xi32>
    %581 = arith.cmpi slt, %577, %580 : vector<2x128xi32>
    %582 = arith.andi %579, %581 : vector<2x128xi1>
    %583 = arith.negf %576 : vector<2x128xf32>
    %584 = math.exp %583 : vector<2x128xf32>
    %cst_207 = arith.constant 1.000000e+00 : f32
    %585 = vector.broadcast %cst_207 : f32 to vector<2x128xf32>
    %586 = arith.addf %585, %584 : vector<2x128xf32>
    %587 = arith.divf %585, %586 : vector<2x128xf32>
    %588 = arith.select %582, %587, %576 : vector<2x128xi1>, vector<2x128xf32>
    %c0_208 = arith.constant 0 : index
    %c0_209 = arith.constant 0 : index
    %589 = vector.load %arg8[%c0_208, %c0_209] : memref<2x128xf32, #tpu.memory_space<vmem>>, vector<2x128xf32>
    tpu.vector_store %arg8[%c0_208, %c0_209], %588 {strides = array<i32>} : memref<2x128xf32, #tpu.memory_space<vmem>>, vector<2x128xf32>,
    return
  }
}

</mosaic_0001>

<llo_original>
// kernel: forward.1
$region0: #{forward.1}
  #allocation0 [shape = 'u32[]', space=smem, size = 0x4, offset = 0x4, fixed_abs, tag = 'smem constant byte address 0x4 - core index']
  #allocation1 [shape = 'u32[72,128]{1,0:T(1,128)}', space=vmem, size = 0x9000, scoped, tag = 'internal scratch']
  %s0 = inlined_call_operand.vmem [shape: bf16[16,768], index: 0, kind: input, shape index: {}]
  %s1 = inlined_call_operand.vmem [shape: bf16[2,384], index: 1, kind: input, shape index: {}]
  %s2 = inlined_call_operand.vmem [shape: bf16[384,64], index: 2, kind: input, shape index: {}]
  %s3 = inlined_call_operand.vmem [shape: bf16[2240,128], index: 3, kind: input, shape index: {}]
  %s4 = inlined_call_operand.hbm [shape: bf16[768,256], index: 4, kind: input, shape index: {}]
  %s5 = inlined_call_operand.vmem [shape: bf16[384,384], index: 5, kind: input, shape index: {}]
  %s6 = inlined_call_operand.hbm [shape: f32[32,384], index: 6, kind: input, shape index: {}]
  %s7 = inlined_call_operand.vmem [shape: f32[8,128], index: 7, kind: output, shape index: {0}]
  %s8 = inlined_call_operand.vmem [shape: f32[2,128], index: 8, kind: output, shape index: {1}]
  %9 = xla_tuple %s7, %s8
  %s10 = sld [smem:[#allocation0]]
  $region54: #{forward.1} parent=0
    _
  %s12 = ssub.s32 1, %s10
  %s13 = scalar_select 0, %s12, %s10
  $region1: #{forward.1} parent=0
    #allocation2 [shape = 'u8[393216]{0}', space=vmem, size = 0x60000, scoped, tag = 'input window, operand 4, single buffered']
    #allocation3 [shape = 's32[1]{0}', space=sflag, size = 0x4, scoped, tag = 'scoped memory for forward.1']
    #allocation4 [shape = 'u8[49152]{0}', space=vmem, size = 0xc000, scoped, tag = 'input window, operand 6, single buffered']
    #allocation5 [shape = 's32[1]{0}', space=sflag, size = 0x4, scoped, tag = 'scoped memory for forward.1']
    %14 = vsyncpa [#allocation3], 0
    %15 = vsyncpa [#allocation5], 0
    // Predicated region
    $region2: #{forward.1} parent=1 // pred_check
      _
    $region3: #{forward.1} parent=1 // pred_check_branch
      %17 = sbr.rel (0) target = $region5
    $region4: #{forward.1} parent=1 // pred_region
      _
    $region5: #{forward.1} parent=1 // pred_fallthru
      _
    // Predicated region
    $region6: #{forward.1} parent=1 // pred_check
      _
    $region7: #{forward.1} parent=1 // pred_check_branch
      %19 = sbr.rel (0) target = $region9
    $region8: #{forward.1} parent=1 // pred_region
      _
    $region9: #{forward.1} parent=1 // pred_fallthru
      _
    // Predicated region
    $region10: #{forward.1} parent=1 // pred_check
      _
    $region11: #{forward.1} parent=1 // pred_check_branch
      %21 = sbr.rel (0) target = $region13
    $region12: #{forward.1} parent=1 // pred_region
      _
    $region13: #{forward.1} parent=1 // pred_fallthru
      _
    // Predicated region
    $region14: #{forward.1} parent=1 // pred_check
      _
    $region15: #{forward.1} parent=1 // pred_check_branch
      %23 = sbr.rel (0) target = $region17
    $region16: #{forward.1} parent=1 // pred_region
      _
    $region17: #{forward.1} parent=1 // pred_fallthru
      _
    // Predicated region
    $region18: #{forward.1} parent=1 // pred_check
      _
    $region19: #{forward.1} parent=1 // pred_check_branch
      %25 = sbr.rel (0) target = $region21
    $region20: #{forward.1} parent=1 // pred_region
      %27 = vsyncadd [#allocation3], 0
      %s28 = sshll.u32 %s4, 4
      %s29 = int_to_ptr.hbm [resolvable:$true] %s28
      %s30 = sshll.u32 [#allocation2], 4
      %s31 = int_to_ptr.vmem [resolvable:$true] %s30
      %36 = dma.hbm_to_vmem [thread:$0]  %s29, 12288, %s31, [#allocation3], 128, 128, 8
    $region21: #{forward.1} parent=1 // pred_fallthru
      _
    // Predicated region
    $region22: #{forward.1} parent=1 // pred_check
      _
    $region23: #{forward.1} parent=1 // pred_check_branch
      %38 = sbr.rel (0) target = $region25
    $region24: #{forward.1} parent=1 // pred_region
      _
    $region25: #{forward.1} parent=1 // pred_fallthru
      _
    // Predicated region
    $region26: #{forward.1} parent=1 // pred_check
      _
    $region27: #{forward.1} parent=1 // pred_check_branch
      %40 = sbr.rel (0) target = $region29
    $region28: #{forward.1} parent=1 // pred_region
      %42 = vsyncadd [#allocation5], 0
      %s43 = sshll.u32 %s6, 4
      %s44 = int_to_ptr.hbm [resolvable:$true] %s43
      %s45 = sshll.u32 [#allocation4], 4
      %s46 = int_to_ptr.vmem [resolvable:$true] %s45
      %51 = dma.hbm_to_vmem [thread:$0]  %s44, 1536, %s46, [#allocation5], 384, 384, 24
    $region29: #{forward.1} parent=1 // pred_fallthru
      _
    // Predicated region
    $region30: #{forward.1} parent=1 // pred_check
      _
    $region31: #{forward.1} parent=1 // pred_check_branch
      %53 = sbr.rel (0) target = $region33
    $region32: #{forward.1} parent=1 // pred_region
      %55 = dma.done [#allocation3], 12288
    $region33: #{forward.1} parent=1 // pred_fallthru
      _
    // Predicated region
    $region34: #{forward.1} parent=1 // pred_check
      _
    $region35: #{forward.1} parent=1 // pred_check_branch
      %57 = sbr.rel (0) target = $region37
    $region36: #{forward.1} parent=1 // pred_region
      %59 = dma.done [#allocation5], 1536
    $region37: #{forward.1} parent=1 // pred_fallthru
      _
    %v61 = vld [vmem:[%s0] sm:$0xff]
    %v62 = vld [vmem:[%s0 + $0x8] sm:$0xff]
    %v63 = vld [vmem:[%s0 + $0x10] sm:$0xff]
    %v64 = vld [vmem:[%s0 + $0x18] sm:$0xff]
    %v65 = vld [vmem:[%s0 + $0x20] sm:$0xff]
    %v66 = vld [vmem:[%s0 + $0x28] sm:$0xff]
    %v67 = vld [vmem:[%s3] sm:$0xf]
    %v68 = vld [vmem:[%s3 + $0x4] sm:$0xf]
    %v69 = vld [vmem:[%s3 + $0x8] sm:$0xf]
    %v70 = vld [vmem:[%s3 + $0xc] sm:$0xf]
    %v71 = vld [vmem:[%s3 + $0x10] sm:$0xf]
    %v72 = vld [vmem:[%s3 + $0x14] sm:$0xf]
    %v73 = vld [vmem:[%s3 + $0x18] sm:$0xf]
    %v74 = vld [vmem:[%s3 + $0x1c] sm:$0xf]
    %v75 = vld [vmem:[%s3 + $0x20] sm:$0xf]
    %v76 = vld [vmem:[%s3 + $0x24] sm:$0xf]
    %v77 = vld [vmem:[%s3 + $0x28] sm:$0xf]
    %v78 = vld [vmem:[%s3 + $0x2c] sm:$0xf]
    %v79 = vld [vmem:[%s3 + $0x30] sm:$0xf]
    %v80 = vld [vmem:[%s3 + $0x34] sm:$0xf]
    %v81 = vld [vmem:[%s3 + $0x38] sm:$0xf]
    %v82 = vld [vmem:[%s3 + $0x3c] sm:$0xf]
    %v83 = vld [vmem:[%s3 + $0x40] sm:$0xf]
    %v84 = vld [vmem:[%s3 + $0x44] sm:$0xf]
    %v85 = vld [vmem:[%s3 + $0x48] sm:$0xf]
    %v86 = vld [vmem:[%s3 + $0x4c] sm:$0xf]
    %v87 = vld [vmem:[%s3 + $0x50] sm:$0xf]
    %v88 = vld [vmem:[%s3 + $0x54] sm:$0xf]
    %v89 = vld [vmem:[%s3 + $0x58] sm:$0xf]
    %v90 = vld [vmem:[%s3 + $0x5c] sm:$0xf]
    %v91 = vld [vmem:[%s3 + $0x60] sm:$0xf]
    %v92 = vld [vmem:[%s3 + $0x64] sm:$0xf]
    %v93 = vld [vmem:[%s3 + $0x68] sm:$0xf]
    %v94 = vld [vmem:[%s3 + $0x6c] sm:$0xf]
    %v95 = vld [vmem:[%s3 + $0x70] sm:$0xf]
    %v96 = vld [vmem:[%s3 + $0x74] sm:$0xf]
    %v97 = vld [vmem:[%s3 + $0x78] sm:$0xf]
    %v98 = vld [vmem:[%s3 + $0x7c] sm:$0xf]
    %v99 = vld [vmem:[%s3 + $0x80] sm:$0xf]
    %v100 = vld [vmem:[%s3 + $0x84] sm:$0xf]
    %v101 = vld [vmem:[%s3 + $0x88] sm:$0xf]
    %v102 = vld [vmem:[%s3 + $0x8c] sm:$0xf]
    %v103 = vld [vmem:[%s3 + $0x90] sm:$0xf]
    %v104 = vld [vmem:[%s3 + $0x94] sm:$0xf]
    %v105 = vld [vmem:[%s3 + $0x98] sm:$0xf]
    %v106 = vld [vmem:[%s3 + $0x9c] sm:$0xf]
    %v107 = vld [vmem:[%s3 + $0xa0] sm:$0xf]
    %v108 = vld [vmem:[%s3 + $0xa4] sm:$0xf]
    %v109 = vld [vmem:[%s3 + $0xa8] sm:$0xf]
    %v110 = vld [vmem:[%s3 + $0xac] sm:$0xf]
    %v111 = vld [vmem:[%s3 + $0xb0] sm:$0xf]
    %v112 = vld [vmem:[%s3 + $0xb4] sm:$0xf]
    %v113 = vld [vmem:[%s3 + $0xb8] sm:$0xf]
    %v114 = vld [vmem:[%s3 + $0xbc] sm:$0xf]
    %v115 = vld [vmem:[%s3 + $0xc0] sm:$0xf]
    %v116 = vld [vmem:[%s3 + $0xc4] sm:$0xf]
    %v117 = vld [vmem:[%s3 + $0xc8] sm:$0xf]
    %v118 = vld [vmem:[%s3 + $0xcc] sm:$0xf]
    %v119 = vld [vmem:[%s3 + $0xd0] sm:$0xf]
    %v120 = vld [vmem:[%s3 + $0xd4] sm:$0xf]
    %v121 = vld [vmem:[%s3 + $0xd8] sm:$0xf]
    %v122 = vld [vmem:[%s3 + $0xdc] sm:$0xf]
    %v123 = vld [vmem:[%s3 + $0xe0] sm:$0xf]
    %v124 = vld [vmem:[%s3 + $0xe4] sm:$0xf]
    %v125 = vld [vmem:[%s3 + $0xe8] sm:$0xf]
    %v126 = vld [vmem:[%s3 + $0xec] sm:$0xf]
    %v127 = vld [vmem:[%s3 + $0xf0] sm:$0xf]
    %v128 = vld [vmem:[%s3 + $0xf4] sm:$0xf]
    %v129 = vld [vmem:[%s3 + $0xf8] sm:$0xf]
    %v130 = vld [vmem:[%s3 + $0xfc] sm:$0xf]
    %v131 = vld [vmem:[%s3 + $0x100] sm:$0xf]
    %v132 = vld [vmem:[%s3 + $0x104] sm:$0xf]
    %v133 = vld [vmem:[%s3 + $0x108] sm:$0xf]
    %v134 = vld [vmem:[%s3 + $0x10c] sm:$0xf]
    %v135 = vld [vmem:[%s3 + $0x110] sm:$0xf]
    %v136 = vld [vmem:[%s3 + $0x114] sm:$0xf]
    %v137 = vld [vmem:[%s3 + $0x118] sm:$0xf]
    %v138 = vld [vmem:[%s3 + $0x11c] sm:$0xf]
    %v139 = vld [vmem:[%s3 + $0x120] sm:$0xf]
    %v140 = vld [vmem:[%s3 + $0x124] sm:$0xf]
    %v141 = vld [vmem:[%s3 + $0x128] sm:$0xf]
    %v142 = vld [vmem:[%s3 + $0x12c] sm:$0xf]
    %v143 = vld [vmem:[%s3 + $0x130] sm:$0xf]
    %v144 = vld [vmem:[%s3 + $0x134] sm:$0xf]
    %v145 = vld [vmem:[%s3 + $0x138] sm:$0xf]
    %v146 = vld [vmem:[%s3 + $0x13c] sm:$0xf]
    %v147 = vld [vmem:[%s3 + $0x140] sm:$0xf]
    %v148 = vld [vmem:[%s3 + $0x144] sm:$0xf]
    %v149 = vld [vmem:[%s3 + $0x148] sm:$0xf]
    %v150 = vld [vmem:[%s3 + $0x14c] sm:$0xf]
    %v151 = vld [vmem:[%s3 + $0x150] sm:$0xf]
    %v152 = vld [vmem:[%s3 + $0x154] sm:$0xf]
    %v153 = vld [vmem:[%s3 + $0x158] sm:$0xf]
    %v154 = vld [vmem:[%s3 + $0x15c] sm:$0xf]
    %v155 = vld [vmem:[%s3 + $0x160] sm:$0xf]
    %v156 = vld [vmem:[%s3 + $0x164] sm:$0xf]
    %v157 = vld [vmem:[%s3 + $0x168] sm:$0xf]
    %v158 = vld [vmem:[%s3 + $0x16c] sm:$0xf]
    %v159 = vld [vmem:[%s3 + $0x170] sm:$0xf]
    %v160 = vld [vmem:[%s3 + $0x174] sm:$0xf]
    %v161 = vld [vmem:[%s3 + $0x178] sm:$0xf]
    %v162 = vld [vmem:[%s3 + $0x17c] sm:$0xf]
    %v163 = vld [vmem:[#allocation4] ss:$0 sm:$0xff]
    %v170 = vunpack.c.l.b16 %v61
    %v171 = vunpack.c.h.b16 %v61
    %v172 = vunpack.c.l.b16 %v62
    %v173 = vunpack.c.h.b16 %v62
    %v174 = vunpack.c.l.b16 %v63
    %v175 = vunpack.c.h.b16 %v63
    %v176 = vunpack.c.l.b16 %v64
    %v177 = vunpack.c.h.b16 %v64
    %v178 = vunpack.c.l.b16 %v65
    %v179 = vunpack.c.h.b16 %v65
    %v180 = vunpack.c.l.b16 %v66
    %v181 = vunpack.c.h.b16 %v66
    %v182 = vpack.c.b16 %v176, %v170
    %v183 = vpack.c.b16 %v177, %v171
    %v184 = vpack.c.b16 %v178, %v172
    %v185 = vpack.c.b16 %v179, %v173
    %v186 = vpack.c.b16 %v180, %v174
    %v187 = vpack.c.b16 %v181, %v175
    %v290 = vunpack.c.l.b16 %v67
    %v291 = vunpack.c.l.b16 %v68
    %v292 = vunpack.c.l.b16 %v69
    %v293 = vunpack.c.l.b16 %v70
    %v294 = vunpack.c.l.b16 %v71
    %v295 = vunpack.c.l.b16 %v72
    %v296 = vunpack.c.l.b16 %v73
    %v297 = vunpack.c.l.b16 %v74
    %v298 = vunpack.c.l.b16 %v75
    %v299 = vunpack.c.l.b16 %v76
    %v300 = vunpack.c.l.b16 %v77
    %v301 = vunpack.c.l.b16 %v78
    %v302 = vunpack.c.l.b16 %v79
    %v303 = vunpack.c.l.b16 %v80
    %v304 = vunpack.c.l.b16 %v81
    %v305 = vunpack.c.l.b16 %v82
    %v306 = vunpack.c.l.b16 %v83
    %v307 = vunpack.c.l.b16 %v84
    %v308 = vunpack.c.l.b16 %v85
    %v309 = vunpack.c.l.b16 %v86
    %v310 = vunpack.c.l.b16 %v87
    %v311 = vunpack.c.l.b16 %v88
    %v312 = vunpack.c.l.b16 %v89
    %v313 = vunpack.c.l.b16 %v90
    %v314 = vunpack.c.l.b16 %v91
    %v315 = vunpack.c.l.b16 %v92
    %v316 = vunpack.c.l.b16 %v93
    %v317 = vunpack.c.l.b16 %v94
    %v318 = vunpack.c.l.b16 %v95
    %v319 = vunpack.c.l.b16 %v96
    %v320 = vunpack.c.l.b16 %v97
    %v321 = vunpack.c.l.b16 %v98
    %v322 = vunpack.c.l.b16 %v99
    %v323 = vunpack.c.l.b16 %v100
    %v324 = vunpack.c.l.b16 %v101
    %v325 = vunpack.c.l.b16 %v102
    %v326 = vunpack.c.l.b16 %v103
    %v327 = vunpack.c.l.b16 %v104
    %v328 = vunpack.c.l.b16 %v105
    %v329 = vunpack.c.l.b16 %v106
    %v330 = vunpack.c.l.b16 %v107
    %v331 = vunpack.c.l.b16 %v108
    %v332 = vunpack.c.l.b16 %v109
    %v333 = vunpack.c.l.b16 %v110
    %v334 = vunpack.c.l.b16 %v111
    %v335 = vunpack.c.l.b16 %v112
    %v336 = vunpack.c.l.b16 %v113
    %v337 = vunpack.c.l.b16 %v114
    %v338 = vunpack.c.l.b16 %v115
    %v339 = vunpack.c.l.b16 %v116
    %v340 = vunpack.c.l.b16 %v117
    %v341 = vunpack.c.l.b16 %v118
    %v342 = vunpack.c.l.b16 %v119
    %v343 = vunpack.c.l.b16 %v120
    %v344 = vunpack.c.l.b16 %v121
    %v345 = vunpack.c.l.b16 %v122
    %v346 = vunpack.c.l.b16 %v123
    %v347 = vunpack.c.l.b16 %v124
    %v348 = vunpack.c.l.b16 %v125
    %v349 = vunpack.c.l.b16 %v126
    %v350 = vunpack.c.l.b16 %v127
    %v351 = vunpack.c.l.b16 %v128
    %v352 = vunpack.c.l.b16 %v129
    %v353 = vunpack.c.l.b16 %v130
    %v354 = vunpack.c.l.b16 %v131
    %v355 = vunpack.c.l.b16 %v132
    %v356 = vunpack.c.l.b16 %v133
    %v357 = vunpack.c.l.b16 %v134
    %v358 = vunpack.c.l.b16 %v135
    %v359 = vunpack.c.l.b16 %v136
    %v360 = vunpack.c.l.b16 %v137
    %v361 = vunpack.c.l.b16 %v138
    %v362 = vunpack.c.l.b16 %v139
    %v363 = vunpack.c.l.b16 %v140
    %v364 = vunpack.c.l.b16 %v141
    %v365 = vunpack.c.l.b16 %v142
    %v366 = vunpack.c.l.b16 %v143
    %v367 = vunpack.c.l.b16 %v144
    %v368 = vunpack.c.l.b16 %v145
    %v369 = vunpack.c.l.b16 %v146
    %v370 = vunpack.c.l.b16 %v147
    %v371 = vunpack.c.l.b16 %v148
    %v372 = vunpack.c.l.b16 %v149
    %v373 = vunpack.c.l.b16 %v150
    %v374 = vunpack.c.l.b16 %v151
    %v375 = vunpack.c.l.b16 %v152
    %v376 = vunpack.c.l.b16 %v153
    %v377 = vunpack.c.l.b16 %v154
    %v378 = vunpack.c.l.b16 %v155
    %v379 = vunpack.c.l.b16 %v156
    %v380 = vunpack.c.l.b16 %v157
    %v381 = vunpack.c.l.b16 %v158
    %v382 = vunpack.c.l.b16 %v159
    %v383 = vunpack.c.l.b16 %v160
    %v384 = vunpack.c.l.b16 %v161
    %v385 = vunpack.c.l.b16 %v162
    %v386 = vpack.c.b16 %v291, %v290
    %v387 = vpack.c.b16 %v293, %v292
    %v388 = vpack.c.b16 %v295, %v294
    %v389 = vpack.c.b16 %v297, %v296
    %v390 = vpack.c.b16 %v299, %v298
    %v391 = vpack.c.b16 %v301, %v300
    %v392 = vpack.c.b16 %v303, %v302
    %v393 = vpack.c.b16 %v305, %v304
    %v394 = vpack.c.b16 %v307, %v306
    %v395 = vpack.c.b16 %v309, %v308
    %v396 = vpack.c.b16 %v311, %v310
    %v397 = vpack.c.b16 %v313, %v312
    %v398 = vpack.c.b16 %v315, %v314
    %v399 = vpack.c.b16 %v317, %v316
    %v400 = vpack.c.b16 %v319, %v318
    %v401 = vpack.c.b16 %v321, %v320
    %v402 = vpack.c.b16 %v323, %v322
    %v403 = vpack.c.b16 %v325, %v324
    %v404 = vpack.c.b16 %v327, %v326
    %v405 = vpack.c.b16 %v329, %v328
    %v406 = vpack.c.b16 %v331, %v330
    %v407 = vpack.c.b16 %v333, %v332
    %v408 = vpack.c.b16 %v335, %v334
    %v409 = vpack.c.b16 %v337, %v336
    %v410 = vpack.c.b16 %v339, %v338
    %v411 = vpack.c.b16 %v341, %v340
    %v412 = vpack.c.b16 %v343, %v342
    %v413 = vpack.c.b16 %v345, %v344
    %v414 = vpack.c.b16 %v347, %v346
    %v415 = vpack.c.b16 %v349, %v348
    %v416 = vpack.c.b16 %v351, %v350
    %v417 = vpack.c.b16 %v353, %v352
    %v418 = vpack.c.b16 %v355, %v354
    %v419 = vpack.c.b16 %v357, %v356
    %v420 = vpack.c.b16 %v359, %v358
    %v421 = vpack.c.b16 %v361, %v360
    %v422 = vpack.c.b16 %v363, %v362
    %v423 = vpack.c.b16 %v365, %v364
    %v424 = vpack.c.b16 %v367, %v366
    %v425 = vpack.c.b16 %v369, %v368
    %v426 = vpack.c.b16 %v371, %v370
    %v427 = vpack.c.b16 %v373, %v372
    %v428 = vpack.c.b16 %v375, %v374
    %v429 = vpack.c.b16 %v377, %v376
    %v430 = vpack.c.b16 %v379, %v378
    %v431 = vpack.c.b16 %v381, %v380
    %v432 = vpack.c.b16 %v383, %v382
    %v433 = vpack.c.b16 %v385, %v384
    %482 = vmatpush.bf16.msra.mxu0 %v393
    %483 = vmatpush.bf16.msra.mxu0 %v392
    %484 = vmatpush.bf16.msra.mxu0 %v391
    %485 = vmatpush.bf16.msra.mxu0 %v390
    %486 = vmatpush.bf16.msra.mxu0 %v389
    %487 = vmatpush.bf16.msra.mxu0 %v388
    %488 = vmatpush.bf16.msra.mxu0 %v387
    %489 = vmatpush.bf16.msra.mxu0 %v386
    %490 = vmatmul.bf16.gmra.mxu0 %v182
    %v491 = vpop.f32.mrf.mxu0
    %v492 = vadd.f32 %v163, %v491
    %v493 = vpop.f32.mrf.mxu0
    %v494 = vadd.f32 %v163, %v493
    %495 = vdwg.mxu0
    %496 = vmatpush.bf16.msra.mxu0 %v401
    %497 = vmatpush.bf16.msra.mxu0 %v400
    %498 = vmatpush.bf16.msra.mxu0 %v399
    %499 = vmatpush.bf16.msra.mxu0 %v398
    %500 = vmatpush.bf16.msra.mxu0 %v397
    %501 = vmatpush.bf16.msra.mxu0 %v396
    %502 = vmatpush.bf16.msra.mxu0 %v395
    %503 = vmatpush.bf16.msra.mxu0 %v394
    %504 = vmatmul.bf16.gmra.mxu0 %v183
    %v505 = vpop.f32.mrf.mxu0
    %v506 = vadd.f32 %v492, %v505
    %v507 = vpop.f32.mrf.mxu0
    %v508 = vadd.f32 %v494, %v507
    %509 = vdwg.mxu0
    %510 = vmatpush.bf16.msra.mxu0 %v409
    %511 = vmatpush.bf16.msra.mxu0 %v408
    %512 = vmatpush.bf16.msra.mxu0 %v407
    %513 = vmatpush.bf16.msra.mxu0 %v406
    %514 = vmatpush.bf16.msra.mxu0 %v405
    %515 = vmatpush.bf16.msra.mxu0 %v404
    %516 = vmatpush.bf16.msra.mxu0 %v403
    %517 = vmatpush.bf16.msra.mxu0 %v402
    %518 = vmatmul.bf16.gmra.mxu0 %v184
    %v519 = vpop.f32.mrf.mxu0
    %v520 = vadd.f32 %v506, %v519
    %v521 = vpop.f32.mrf.mxu0
    %v522 = vadd.f32 %v508, %v521
    %523 = vdwg.mxu0
    %524 = vmatpush.bf16.msra.mxu0 %v417
    %525 = vmatpush.bf16.msra.mxu0 %v416
    %526 = vmatpush.bf16.msra.mxu0 %v415
    %527 = vmatpush.bf16.msra.mxu0 %v414
    %528 = vmatpush.bf16.msra.mxu0 %v413
    %529 = vmatpush.bf16.msra.mxu0 %v412
    %530 = vmatpush.bf16.msra.mxu0 %v411
    %531 = vmatpush.bf16.msra.mxu0 %v410
    %532 = vmatmul.bf16.gmra.mxu0 %v185
    %v533 = vpop.f32.mrf.mxu0
    %v534 = vadd.f32 %v520, %v533
    %v535 = vpop.f32.mrf.mxu0
    %v536 = vadd.f32 %v522, %v535
    %537 = vdwg.mxu0
    %538 = vmatpush.bf16.msra.mxu0 %v425
    %539 = vmatpush.bf16.msra.mxu0 %v424
    %540 = vmatpush.bf16.msra.mxu0 %v423
    %541 = vmatpush.bf16.msra.mxu0 %v422
    %542 = vmatpush.bf16.msra.mxu0 %v421
    %543 = vmatpush.bf16.msra.mxu0 %v420
    %544 = vmatpush.bf16.msra.mxu0 %v419
    %545 = vmatpush.bf16.msra.mxu0 %v418
    %546 = vmatmul.bf16.gmra.mxu0 %v186
    %v547 = vpop.f32.mrf.mxu0
    %v548 = vadd.f32 %v534, %v547
    %v549 = vpop.f32.mrf.mxu0
    %v550 = vadd.f32 %v536, %v549
    %551 = vdwg.mxu0
    %552 = vmatpush.bf16.msra.mxu0 %v433
    %553 = vmatpush.bf16.msra.mxu0 %v432
    %554 = vmatpush.bf16.msra.mxu0 %v431
    %555 = vmatpush.bf16.msra.mxu0 %v430
    %556 = vmatpush.bf16.msra.mxu0 %v429
    %557 = vmatpush.bf16.msra.mxu0 %v428
    %558 = vmatpush.bf16.msra.mxu0 %v427
    %559 = vmatpush.bf16.msra.mxu0 %v426
    %560 = vmatmul.bf16.gmra.mxu0 %v187
    %v561 = vpop.f32.mrf.mxu0
    %v562 = vadd.f32 %v548, %v561
    %v563 = vpop.f32.mrf.mxu0
    %v564 = vadd.f32 %v550, %v563
    %565 = vdwg.mxu0
    %v566 = vmax.f32 %v562, 0.0
    %v567 = vmax.f32 %v564, 0.0
    %v568 = vld [vmem:[%s5] sm:$0xff]
    %v569 = vld [vmem:[%s5 + $0x8] sm:$0xf]
    %v570 = vld [vmem:[%s5 + $0xc] sm:$0xff]
    %v571 = vld [vmem:[%s5 + $0x14] sm:$0xf]
    %v572 = vld [vmem:[%s5 + $0x18] sm:$0xff]
    %v573 = vld [vmem:[%s5 + $0x20] sm:$0xf]
    %v574 = vld [vmem:[%s5 + $0x24] sm:$0xff]
    %v575 = vld [vmem:[%s5 + $0x2c] sm:$0xf]
    %v576 = vld [vmem:[%s5 + $0x30] sm:$0xff]
    %v577 = vld [vmem:[%s5 + $0x38] sm:$0xf]
    %v578 = vld [vmem:[%s5 + $0x3c] sm:$0xff]
    %v579 = vld [vmem:[%s5 + $0x44] sm:$0xf]
    %v580 = vld [vmem:[%s5 + $0x48] sm:$0xff]
    %v581 = vld [vmem:[%s5 + $0x50] sm:$0xf]
    %v582 = vld [vmem:[%s5 + $0x54] sm:$0xff]
    %v583 = vld [vmem:[%s5 + $0x5c] sm:$0xf]
    %v584 = vld [vmem:[%s5 + $0x60] sm:$0xff]
    %v585 = vld [vmem:[%s5 + $0x68] sm:$0xf]
    %v586 = vld [vmem:[%s5 + $0x6c] sm:$0xff]
    %v587 = vld [vmem:[%s5 + $0x74] sm:$0xf]
    %v588 = vld [vmem:[%s5 + $0x78] sm:$0xff]
    %v589 = vld [vmem:[%s5 + $0x80] sm:$0xf]
    %v590 = vld [vmem:[%s5 + $0x84] sm:$0xff]
    %v591 = vld [vmem:[%s5 + $0x8c] sm:$0xf]
    %v592 = vld [vmem:[%s5 + $0x90] sm:$0xff]
    %v593 = vld [vmem:[%s5 + $0x98] sm:$0xf]
    %v594 = vld [vmem:[%s5 + $0x9c] sm:$0xff]
    %v595 = vld [vmem:[%s5 + $0xa4] sm:$0xf]
    %v596 = vld [vmem:[%s5 + $0xa8] sm:$0xff]
    %v597 = vld [vmem:[%s5 + $0xb0] sm:$0xf]
    %v598 = vld [vmem:[%s5 + $0xb4] sm:$0xff]
    %v599 = vld [vmem:[%s5 + $0xbc] sm:$0xf]
    %v600 = vpack.c.bf16 %v567, %v566
    %s601 = scalar_lea.vmem [#allocation4], 1
    %v602 = vld [vmem:[%s601] ss:$8 sm:$0x7]
    %v604 = vperm.slane %v602, 0
    %v605 = vperm.slane %v602, 1
    %v606 = vperm.slane %v602, 2
    %v642 = vunpack.c.l.b16 %v568
    %v643 = vunpack.c.h.b16 %v568
    %v644 = vunpack.c.l.b16 %v569
    %v645 = vunpack.c.l.b16 %v570
    %v646 = vunpack.c.h.b16 %v570
    %v647 = vunpack.c.l.b16 %v571
    %v648 = vunpack.c.l.b16 %v572
    %v649 = vunpack.c.h.b16 %v572
    %v650 = vunpack.c.l.b16 %v573
    %v651 = vunpack.c.l.b16 %v574
    %v652 = vunpack.c.h.b16 %v574
    %v653 = vunpack.c.l.b16 %v575
    %v654 = vunpack.c.l.b16 %v576
    %v655 = vunpack.c.h.b16 %v576
    %v656 = vunpack.c.l.b16 %v577
    %v657 = vunpack.c.l.b16 %v578
    %v658 = vunpack.c.h.b16 %v578
    %v659 = vunpack.c.l.b16 %v579
    %v660 = vunpack.c.l.b16 %v580
    %v661 = vunpack.c.h.b16 %v580
    %v662 = vunpack.c.l.b16 %v581
    %v663 = vunpack.c.l.b16 %v582
    %v664 = vunpack.c.h.b16 %v582
    %v665 = vunpack.c.l.b16 %v583
    %v666 = vunpack.c.l.b16 %v584
    %v667 = vunpack.c.h.b16 %v584
    %v668 = vunpack.c.l.b16 %v585
    %v669 = vunpack.c.l.b16 %v586
    %v670 = vunpack.c.h.b16 %v586
    %v671 = vunpack.c.l.b16 %v587
    %v672 = vunpack.c.l.b16 %v588
    %v673 = vunpack.c.h.b16 %v588
    %v674 = vunpack.c.l.b16 %v589
    %v675 = vunpack.c.l.b16 %v590
    %v676 = vunpack.c.h.b16 %v590
    %v677 = vunpack.c.l.b16 %v591
    %v678 = vunpack.c.l.b16 %v592
    %v679 = vunpack.c.h.b16 %v592
    %v680 = vunpack.c.l.b16 %v593
    %v681 = vunpack.c.l.b16 %v594
    %v682 = vunpack.c.h.b16 %v594
    %v683 = vunpack.c.l.b16 %v595
    %v684 = vunpack.c.l.b16 %v596
    %v685 = vunpack.c.h.b16 %v596
    %v686 = vunpack.c.l.b16 %v597
    %v687 = vunpack.c.l.b16 %v598
    %v688 = vunpack.c.h.b16 %v598
    %v689 = vunpack.c.l.b16 %v599
    %v690 = vpack.c.b16 %v645, %v642
    %v691 = vpack.c.b16 %v646, %v643
    %v692 = vpack.c.b16 %v647, %v644
    %v693 = vpack.c.b16 %v651, %v648
    %v694 = vpack.c.b16 %v652, %v649
    %v695 = vpack.c.b16 %v653, %v650
    %v696 = vpack.c.b16 %v657, %v654
    %v697 = vpack.c.b16 %v658, %v655
    %v698 = vpack.c.b16 %v659, %v656
    %v699 = vpack.c.b16 %v663, %v660
    %v700 = vpack.c.b16 %v664, %v661
    %v701 = vpack.c.b16 %v665, %v662
    %v702 = vpack.c.b16 %v669, %v666
    %v703 = vpack.c.b16 %v670, %v667
    %v704 = vpack.c.b16 %v671, %v668
    %v705 = vpack.c.b16 %v675, %v672
    %v706 = vpack.c.b16 %v676, %v673
    %v707 = vpack.c.b16 %v677, %v674
    %v708 = vpack.c.b16 %v681, %v678
    %v709 = vpack.c.b16 %v682, %v679
    %v710 = vpack.c.b16 %v683, %v680
    %v711 = vpack.c.b16 %v687, %v684
    %v712 = vpack.c.b16 %v688, %v685
    %v713 = vpack.c.b16 %v689, %v686
    %738 = vmatpush.bf16.msra.mxu0 %v711
    %739 = vmatpush.bf16.msra.mxu0 %v708
    %740 = vmatpush.bf16.msra.mxu0 %v705
    %741 = vmatpush.bf16.msra.mxu0 %v702
    %742 = vmatpush.bf16.msra.mxu0 %v699
    %743 = vmatpush.bf16.msra.mxu0 %v696
    %744 = vmatpush.bf16.msra.mxu0 %v693
    %745 = vmatpush.bf16.msra.mxu0 %v690
    %746 = vmatmul.bf16.gmra.mxu0 %v600
    %v747 = vpop.f32.mrf.mxu0
    %v748 = vadd.f32 %v604, %v747
    %v749 = vpop.f32.mrf.mxu0
    %v750 = vadd.f32 %v604, %v749
    %751 = vdwg.mxu0
    %752 = vmatpush.bf16.msra.mxu0 %v712
    %753 = vmatpush.bf16.msra.mxu0 %v709
    %754 = vmatpush.bf16.msra.mxu0 %v706
    %755 = vmatpush.bf16.msra.mxu0 %v703
    %756 = vmatpush.bf16.msra.mxu0 %v700
    %757 = vmatpush.bf16.msra.mxu0 %v697
    %758 = vmatpush.bf16.msra.mxu0 %v694
    %759 = vmatpush.bf16.msra.mxu0 %v691
    %760 = vmatmul.bf16.gmra.mxu0 %v600
    %v761 = vpop.f32.mrf.mxu0
    %v762 = vadd.f32 %v605, %v761
    %v763 = vpop.f32.mrf.mxu0
    %v764 = vadd.f32 %v605, %v763
    %765 = vdwg.mxu0
    %766 = vmatpush.bf16.msra.mxu0 %v713
    %767 = vmatpush.bf16.msra.mxu0 %v710
    %768 = vmatpush.bf16.msra.mxu0 %v707
    %769 = vmatpush.bf16.msra.mxu0 %v704
    %770 = vmatpush.bf16.msra.mxu0 %v701
    %771 = vmatpush.bf16.msra.mxu0 %v698
    %772 = vmatpush.bf16.msra.mxu0 %v695
    %773 = vmatpush.bf16.msra.mxu0 %v692
    %774 = vmatmul.bf16.gmra.mxu0 %v600
    %v775 = vpop.f32.mrf.mxu0
    %v776 = vadd.f32 %v606, %v775
    %v777 = vpop.f32.mrf.mxu0
    %v778 = vadd.f32 %v606, %v777
    %779 = vdwg.mxu0
    %v780 = vmul.f32 %v748, 0.17677669
    %v781 = vmul.f32 %v750, 0.17677669
    %v782 = vpack.c.bf16 %v780, %v780
    %v783 = vpack.c.bf16 %v781, %v781
    %v784 = vpack.c.bf16 %v762, %v762
    %v785 = vpack.c.bf16 %v764, %v764
    %v786 = vld [vmem:[%s3 + $0x180] sm:$0xf]
    %v787 = vld [vmem:[%s3 + $0x184] sm:$0xf]
    %v788 = vld [vmem:[%s3 + $0x188] sm:$0xf]
    %v789 = vld [vmem:[%s3 + $0x18c] sm:$0xf]
    %v790 = vpack.c.bf16 %v778, %v776
    %v795 = vunpack.c.l.b16 %v786
    %v796 = vunpack.c.l.b16 %v787
    %v797 = vunpack.c.l.b16 %v788
    %v798 = vunpack.c.l.b16 %v789
    %v799 = vpack.c.b16 %v796, %v795
    %v800 = vpack.c.b16 %v798, %v797
    %vm803 = vcmask 261120
    %v805 = vsel %vm803, %v790, 0
    %807 = vmatpush.bf16.msra.mxu0 0
    %808 = vmatpush.bf16.msra.mxu0 0
    %809 = vmatpush.bf16.msra.mxu0 0
    %810 = vmatpush.bf16.msra.mxu0 0
    %811 = vmatpush.bf16.msra.mxu0 0
    %812 = vmatpush.bf16.msra.mxu0 0
    %813 = vmatpush.bf16.msra.mxu0 %v800
    %814 = vmatpush.bf16.msra.mxu0 %v799
    %815 = vmatmul.bf16.gmra.mxu0 %v805
    %v816 = vpop.f32.mrf.mxu0
    %v817 = vadd.f32 0.0, %v816
    %v818 = vpop.f32.mrf.mxu0
    %v819 = vadd.f32 0.0, %v818
    %820 = vdwg.mxu0
    %v821 = vpack.c.bf16 %v817, %v817
    %v822 = vpack.c.bf16 %v819, %v819
    %v824 = vsel %vm803, %v782, 0
    %v827 = vsel %vm803, %v784, 0
    %829 = vmatpush.bf16.xpose.msra.mxu0 0
    %830 = vmatpush.bf16.xpose.msra.mxu0 0
    %831 = vmatpush.bf16.xpose.msra.mxu0 0
    %832 = vmatpush.bf16.xpose.msra.mxu0 0
    %833 = vmatpush.bf16.xpose.msra.mxu0 0
    %834 = vmatpush.bf16.xpose.msra.mxu0 0
    %835 = vmatpush.bf16.xpose.msra.mxu0 0
    %836 = vmatpush.bf16.xpose.msra.mxu0 %v827
    %837 = vmatmul.bf16.gmra.mxu0 %v824
    %v838 = vpop.f32.mrf.mxu0
    %v839 = vadd.f32 0.0, %v838
    %v840 = vpop.f32.mrf.mxu0
    %841 = vdwg.mxu0
    %v843 = vsel %vm803, %v783, 0
    %v846 = vsel %vm803, %v785, 0
    %848 = vmatpush.bf16.xpose.msra.mxu0 0
    %849 = vmatpush.bf16.xpose.msra.mxu0 0
    %850 = vmatpush.bf16.xpose.msra.mxu0 0
    %851 = vmatpush.bf16.xpose.msra.mxu0 0
    %852 = vmatpush.bf16.xpose.msra.mxu0 0
    %853 = vmatpush.bf16.xpose.msra.mxu0 0
    %854 = vmatpush.bf16.xpose.msra.mxu0 0
    %855 = vmatpush.bf16.xpose.msra.mxu0 %v846
    %856 = vmatmul.bf16.gmra.mxu0 %v843
    %v857 = vpop.f32.mrf.mxu0
    %v858 = vadd.f32 0.0, %v857
    %v859 = vpop.f32.mrf.mxu0
    %860 = vdwg.mxu0
    %vm861 = vcmask 64512
    %v862 = vsel %vm861, %v839, -inf
    %863 = vmax.xlane.f32.xlu0 %v862
    %v864 = vpop.xlane.xlu0 %863
    %v865 = vsel %vm861, %v858, -inf
    %866 = vmax.xlane.f32.xlu0 %v865
    %v867 = vpop.xlane.xlu0 %866
    %v868 = vsub.f32 %v839, %v864
    %v869 = vsub.f32 %v858, %v867
    %v870 = vmul.f32 %v868, 1.442695
    %v871 = vpow.pop %v870
    %v872 = vmul.f32 %v869, 1.442695
    %v873 = vpow.pop %v872
    %v874 = vsel %vm861, %v871, 0.0
    %875 = vadd.xlane.f32.xlu0 %v874
    %v876 = vpop.xlane.xlu0 %875
    %v877 = vsel %vm861, %v873, 0.0
    %878 = vadd.xlane.f32.xlu0 %v877
    %v879 = vpop.xlane.xlu0 %878
    %v880 = vrcp.pop %v876
    %v881 = vrcp.pop %v879
    %v882 = vmul.f32 %v871, %v880
    %v883 = vmul.f32 %v873, %v881
    %v884 = vpack.c.bf16 %v882, %v882
    %v885 = vpack.c.bf16 %v883, %v883
    %v886 = vld [vmem:[%s3 + $0x190] sm:$0xf]
    %v887 = vld [vmem:[%s3 + $0x194] sm:$0xf]
    %v888 = vld [vmem:[%s3 + $0x198] sm:$0xf]
    %v889 = vld [vmem:[%s3 + $0x19c] sm:$0xf]
    %891 = vrot.lane.b32.xlu0 %v790, 96
    %v892 = vpop.permute.xlu0 %891
    %v897 = vunpack.c.l.b16 %v886
    %v898 = vunpack.c.l.b16 %v887
    %v899 = vunpack.c.l.b16 %v888
    %v900 = vunpack.c.l.b16 %v889
    %v901 = vpack.c.b16 %v898, %v897
    %v902 = vpack.c.b16 %v900, %v899
    %v906 = vsel %vm803, %v892, 0
    %908 = vmatpush.bf16.msra.mxu0 0
    %909 = vmatpush.bf16.msra.mxu0 0
    %910 = vmatpush.bf16.msra.mxu0 0
    %911 = vmatpush.bf16.msra.mxu0 0
    %912 = vmatpush.bf16.msra.mxu0 0
    %913 = vmatpush.bf16.msra.mxu0 0
    %914 = vmatpush.bf16.msra.mxu0 %v902
    %915 = vmatpush.bf16.msra.mxu0 %v901
    %916 = vmatmul.bf16.gmra.mxu0 %v906
    %v917 = vpop.f32.mrf.mxu0
    %v918 = vadd.f32 0.0, %v917
    %v919 = vpop.f32.mrf.mxu0
    %v920 = vadd.f32 0.0, %v919
    %921 = vdwg.mxu0
    %v922 = vpack.c.bf16 %v918, %v918
    %v923 = vpack.c.bf16 %v920, %v920
    %v925 = vunpack.c.l.b16 %v782
    %v926 = vpack.c.b16 %v925, %v925
    %927 = vrot.lane.b32.xlu0 %v926, 96
    %v928 = vpop.permute.xlu0 %927
    %v930 = vunpack.c.l.b16 %v784
    %v931 = vpack.c.b16 %v930, %v930
    %932 = vrot.lane.b32.xlu0 %v931, 96
    %v933 = vpop.permute.xlu0 %932
    %v935 = vsel %vm803, %v928, 0
    %v938 = vsel %vm803, %v933, 0
    %940 = vmatpush.bf16.xpose.msra.mxu0 0
    %941 = vmatpush.bf16.xpose.msra.mxu0 0
    %942 = vmatpush.bf16.xpose.msra.mxu0 0
    %943 = vmatpush.bf16.xpose.msra.mxu0 0
    %944 = vmatpush.bf16.xpose.msra.mxu0 0
    %945 = vmatpush.bf16.xpose.msra.mxu0 0
    %946 = vmatpush.bf16.xpose.msra.mxu0 0
    %947 = vmatpush.bf16.xpose.msra.mxu0 %v938
    %948 = vmatmul.bf16.gmra.mxu0 %v935
    %v949 = vpop.f32.mrf.mxu0
    %v950 = vadd.f32 0.0, %v949
    %v951 = vpop.f32.mrf.mxu0
    %952 = vdwg.mxu0
    %v954 = vunpack.c.l.b16 %v783
    %v955 = vpack.c.b16 %v954, %v954
    %956 = vrot.lane.b32.xlu0 %v955, 96
    %v957 = vpop.permute.xlu0 %956
    %v959 = vunpack.c.l.b16 %v785
    %v960 = vpack.c.b16 %v959, %v959
    %961 = vrot.lane.b32.xlu0 %v960, 96
    %v962 = vpop.permute.xlu0 %961
    %v964 = vsel %vm803, %v957, 0
    %v967 = vsel %vm803, %v962, 0
    %969 = vmatpush.bf16.xpose.msra.mxu0 0
    %970 = vmatpush.bf16.xpose.msra.mxu0 0
    %971 = vmatpush.bf16.xpose.msra.mxu0 0
    %972 = vmatpush.bf16.xpose.msra.mxu0 0
    %973 = vmatpush.bf16.xpose.msra.mxu0 0
    %974 = vmatpush.bf16.xpose.msra.mxu0 0
    %975 = vmatpush.bf16.xpose.msra.mxu0 0
    %976 = vmatpush.bf16.xpose.msra.mxu0 %v967
    %977 = vmatmul.bf16.gmra.mxu0 %v964
    %v978 = vpop.f32.mrf.mxu0
    %v979 = vadd.f32 0.0, %v978
    %v980 = vpop.f32.mrf.mxu0
    %981 = vdwg.mxu0
    %v982 = vsel %vm861, %v950, -inf
    %983 = vmax.xlane.f32.xlu0 %v982
    %v984 = vpop.xlane.xlu0 %983
    %v985 = vsel %vm861, %v979, -inf
    %986 = vmax.xlane.f32.xlu0 %v985
    %v987 = vpop.xlane.xlu0 %986
    %v988 = vsub.f32 %v950, %v984
    %v989 = vsub.f32 %v979, %v987
    %v990 = vmul.f32 %v988, 1.442695
    %v991 = vpow.pop %v990
    %v992 = vmul.f32 %v989, 1.442695
    %v993 = vpow.pop %v992
    %v994 = vsel %vm861, %v991, 0.0
    %995 = vadd.xlane.f32.xlu0 %v994
    %v996 = vpop.xlane.xlu0 %995
    %v997 = vsel %vm861, %v993, 0.0
    %998 = vadd.xlane.f32.xlu0 %v997
    %v999 = vpop.xlane.xlu0 %998
    %v1000 = vrcp.pop %v996
    %v1001 = vrcp.pop %v999
    %v1002 = vmul.f32 %v991, %v1000
    %v1003 = vmul.f32 %v993, %v1001
    %v1004 = vpack.c.bf16 %v1002, %v1002
    %v1005 = vpack.c.bf16 %v1003, %v1003
    %v1007 = vsel %vm861, %v1004, 0
    %vm1009 = vcmask 1043456
    %v1011 = vsel %vm1009, %v922, 0
    %1013 = vmatpush.bf16.msra.mxu0 0
    %1014 = vmatpush.bf16.msra.mxu0 0
    %1015 = vmatpush.bf16.msra.mxu0 0
    %1016 = vmatpush.bf16.msra.mxu0 0
    %1017 = vmatpush.bf16.msra.mxu0 0
    %1018 = vmatpush.bf16.msra.mxu0 0
    %1019 = vmatpush.bf16.msra.mxu0 0
    %1020 = vmatpush.bf16.msra.mxu0 %v1011
    %1021 = vmatmul.bf16.gmra.mxu0 %v1007
    %v1022 = vpop.f32.mrf.mxu0
    %v1023 = vadd.f32 0.0, %v1022
    %v1024 = vpop.f32.mrf.mxu0
    %1025 = vdwg.mxu0
    %v1027 = vsel %vm861, %v1005, 0
    %v1030 = vsel %vm1009, %v923, 0
    %1032 = vmatpush.bf16.msra.mxu0 0
    %1033 = vmatpush.bf16.msra.mxu0 0
    %1034 = vmatpush.bf16.msra.mxu0 0
    %1035 = vmatpush.bf16.msra.mxu0 0
    %1036 = vmatpush.bf16.msra.mxu0 0
    %1037 = vmatpush.bf16.msra.mxu0 0
    %1038 = vmatpush.bf16.msra.mxu0 0
    %1039 = vmatpush.bf16.msra.mxu0 %v1030
    %1040 = vmatmul.bf16.gmra.mxu0 %v1027
    %v1041 = vpop.f32.mrf.mxu0
    %v1042 = vadd.f32 0.0, %v1041
    %v1043 = vpop.f32.mrf.mxu0
    %1044 = vdwg.mxu0
    %v1046 = vsel %vm861, %v884, 0
    %v1049 = vsel %vm1009, %v821, 0
    %1051 = vmatpush.bf16.msra.mxu0 0
    %1052 = vmatpush.bf16.msra.mxu0 0
    %1053 = vmatpush.bf16.msra.mxu0 0
    %1054 = vmatpush.bf16.msra.mxu0 0
    %1055 = vmatpush.bf16.msra.mxu0 0
    %1056 = vmatpush.bf16.msra.mxu0 0
    %1057 = vmatpush.bf16.msra.mxu0 0
    %1058 = vmatpush.bf16.msra.mxu0 %v1049
    %1059 = vmatmul.bf16.gmra.mxu0 %v1046
    %v1060 = vpop.f32.mrf.mxu0
    %v1061 = vadd.f32 %v1023, %v1060
    %v1062 = vpop.f32.mrf.mxu0
    %1063 = vdwg.mxu0
    %v1065 = vsel %vm861, %v885, 0
    %v1068 = vsel %vm1009, %v822, 0
    %1070 = vmatpush.bf16.msra.mxu0 0
    %1071 = vmatpush.bf16.msra.mxu0 0
    %1072 = vmatpush.bf16.msra.mxu0 0
    %1073 = vmatpush.bf16.msra.mxu0 0
    %1074 = vmatpush.bf16.msra.mxu0 0
    %1075 = vmatpush.bf16.msra.mxu0 0
    %1076 = vmatpush.bf16.msra.mxu0 0
    %1077 = vmatpush.bf16.msra.mxu0 %v1068
    %1078 = vmatmul.bf16.gmra.mxu0 %v1065
    %v1079 = vpop.f32.mrf.mxu0
    %v1080 = vadd.f32 %v1042, %v1079
    %v1081 = vpop.f32.mrf.mxu0
    %1082 = vdwg.mxu0
    %v1083 = vld [vmem:[%s3 + $0x1a0] sm:$0xf]
    %v1084 = vld [vmem:[%s3 + $0x1a4] sm:$0xf]
    %v1085 = vld [vmem:[%s3 + $0x1a8] sm:$0xf]
    %v1086 = vld [vmem:[%s3 + $0x1ac] sm:$0xf]
    %1087 = vrot.lane.b32.xlu0 %v790, 64
    %v1088 = vpop.permute.xlu0 %1087
    %v1093 = vunpack.c.l.b16 %v1083
    %v1094 = vunpack.c.l.b16 %v1084
    %v1095 = vunpack.c.l.b16 %v1085
    %v1096 = vunpack.c.l.b16 %v1086
    %v1097 = vpack.c.b16 %v1094, %v1093
    %v1098 = vpack.c.b16 %v1096, %v1095
    %v1102 = vsel %vm803, %v1088, 0
    %1104 = vmatpush.bf16.msra.mxu0 0
    %1105 = vmatpush.bf16.msra.mxu0 0
    %1106 = vmatpush.bf16.msra.mxu0 0
    %1107 = vmatpush.bf16.msra.mxu0 0
    %1108 = vmatpush.bf16.msra.mxu0 0
    %1109 = vmatpush.bf16.msra.mxu0 0
    %1110 = vmatpush.bf16.msra.mxu0 %v1098
    %1111 = vmatpush.bf16.msra.mxu0 %v1097
    %1112 = vmatmul.bf16.gmra.mxu0 %v1102
    %v1113 = vpop.f32.mrf.mxu0
    %v1114 = vadd.f32 0.0, %v1113
    %v1115 = vpop.f32.mrf.mxu0
    %v1116 = vadd.f32 0.0, %v1115
    %1117 = vdwg.mxu0
    %v1118 = vpack.c.bf16 %v1114, %v1114
    %v1119 = vpack.c.bf16 %v1116, %v1116
    %1120 = vrot.lane.b32.xlu0 %v926, 64
    %v1121 = vpop.permute.xlu0 %1120
    %1122 = vrot.lane.b32.xlu0 %v931, 64
    %v1123 = vpop.permute.xlu0 %1122
    %v1125 = vsel %vm803, %v1121, 0
    %v1128 = vsel %vm803, %v1123, 0
    %1130 = vmatpush.bf16.xpose.msra.mxu0 0
    %1131 = vmatpush.bf16.xpose.msra.mxu0 0
    %1132 = vmatpush.bf16.xpose.msra.mxu0 0
    %1133 = vmatpush.bf16.xpose.msra.mxu0 0
    %1134 = vmatpush.bf16.xpose.msra.mxu0 0
    %1135 = vmatpush.bf16.xpose.msra.mxu0 0
    %1136 = vmatpush.bf16.xpose.msra.mxu0 0
    %1137 = vmatpush.bf16.xpose.msra.mxu0 %v1128
    %1138 = vmatmul.bf16.gmra.mxu0 %v1125
    %v1139 = vpop.f32.mrf.mxu0
    %v1140 = vadd.f32 0.0, %v1139
    %v1141 = vpop.f32.mrf.mxu0
    %1142 = vdwg.mxu0
    %1143 = vrot.lane.b32.xlu0 %v955, 64
    %v1144 = vpop.permute.xlu0 %1143
    %1145 = vrot.lane.b32.xlu0 %v960, 64
    %v1146 = vpop.permute.xlu0 %1145
    %v1148 = vsel %vm803, %v1144, 0
    %v1151 = vsel %vm803, %v1146, 0
    %1153 = vmatpush.bf16.xpose.msra.mxu0 0
    %1154 = vmatpush.bf16.xpose.msra.mxu0 0
    %1155 = vmatpush.bf16.xpose.msra.mxu0 0
    %1156 = vmatpush.bf16.xpose.msra.mxu0 0
    %1157 = vmatpush.bf16.xpose.msra.mxu0 0
    %1158 = vmatpush.bf16.xpose.msra.mxu0 0
    %1159 = vmatpush.bf16.xpose.msra.mxu0 0
    %1160 = vmatpush.bf16.xpose.msra.mxu0 %v1151
    %1161 = vmatmul.bf16.gmra.mxu0 %v1148
    %v1162 = vpop.f32.mrf.mxu0
    %v1163 = vadd.f32 0.0, %v1162
    %v1164 = vpop.f32.mrf.mxu0
    %1165 = vdwg.mxu0
    %v1166 = vsel %vm861, %v1140, -inf
    %1167 = vmax.xlane.f32.xlu0 %v1166
    %v1168 = vpop.xlane.xlu0 %1167
    %v1169 = vsel %vm861, %v1163, -inf
    %1170 = vmax.xlane.f32.xlu0 %v1169
    %v1171 = vpop.xlane.xlu0 %1170
    %v1172 = vsub.f32 %v1140, %v1168
    %v1173 = vsub.f32 %v1163, %v1171
    %v1174 = vmul.f32 %v1172, 1.442695
    %v1175 = vpow.pop %v1174
    %v1176 = vmul.f32 %v1173, 1.442695
    %v1177 = vpow.pop %v1176
    %v1178 = vsel %vm861, %v1175, 0.0
    %1179 = vadd.xlane.f32.xlu0 %v1178
    %v1180 = vpop.xlane.xlu0 %1179
    %v1181 = vsel %vm861, %v1177, 0.0
    %1182 = vadd.xlane.f32.xlu0 %v1181
    %v1183 = vpop.xlane.xlu0 %1182
    %v1184 = vrcp.pop %v1180
    %v1185 = vrcp.pop %v1183
    %v1186 = vmul.f32 %v1175, %v1184
    %v1187 = vmul.f32 %v1177, %v1185
    %v1188 = vpack.c.bf16 %v1186, %v1186
    %v1189 = vpack.c.bf16 %v1187, %v1187
    %v1191 = vsel %vm861, %v1188, 0
    %v1194 = vsel %vm1009, %v1118, 0
    %1196 = vmatpush.bf16.msra.mxu0 0
    %1197 = vmatpush.bf16.msra.mxu0 0
    %1198 = vmatpush.bf16.msra.mxu0 0
    %1199 = vmatpush.bf16.msra.mxu0 0
    %1200 = vmatpush.bf16.msra.mxu0 0
    %1201 = vmatpush.bf16.msra.mxu0 0
    %1202 = vmatpush.bf16.msra.mxu0 0
    %1203 = vmatpush.bf16.msra.mxu0 %v1194
    %1204 = vmatmul.bf16.gmra.mxu0 %v1191
    %v1205 = vpop.f32.mrf.mxu0
    %v1206 = vadd.f32 0.0, %v1205
    %v1207 = vpop.f32.mrf.mxu0
    %1208 = vdwg.mxu0
    %v1210 = vsel %vm861, %v1189, 0
    %v1213 = vsel %vm1009, %v1119, 0
    %1215 = vmatpush.bf16.msra.mxu0 0
    %1216 = vmatpush.bf16.msra.mxu0 0
    %1217 = vmatpush.bf16.msra.mxu0 0
    %1218 = vmatpush.bf16.msra.mxu0 0
    %1219 = vmatpush.bf16.msra.mxu0 0
    %1220 = vmatpush.bf16.msra.mxu0 0
    %1221 = vmatpush.bf16.msra.mxu0 0
    %1222 = vmatpush.bf16.msra.mxu0 %v1213
    %1223 = vmatmul.bf16.gmra.mxu0 %v1210
    %v1224 = vpop.f32.mrf.mxu0
    %v1225 = vadd.f32 0.0, %v1224
    %v1226 = vpop.f32.mrf.mxu0
    %1227 = vdwg.mxu0
    %v1228 = vadd.f32 %v1061, %v1206
    %v1229 = vadd.f32 %v1080, %v1225
    %v1230 = vld [vmem:[%s3 + $0x1b0] sm:$0xf]
    %v1231 = vld [vmem:[%s3 + $0x1b4] sm:$0xf]
    %v1232 = vld [vmem:[%s3 + $0x1b8] sm:$0xf]
    %v1233 = vld [vmem:[%s3 + $0x1bc] sm:$0xf]
    %1234 = vrot.lane.b32.xlu0 %v790, 32
    %v1235 = vpop.permute.xlu0 %1234
    %v1240 = vunpack.c.l.b16 %v1230
    %v1241 = vunpack.c.l.b16 %v1231
    %v1242 = vunpack.c.l.b16 %v1232
    %v1243 = vunpack.c.l.b16 %v1233
    %v1244 = vpack.c.b16 %v1241, %v1240
    %v1245 = vpack.c.b16 %v1243, %v1242
    %v1249 = vsel %vm803, %v1235, 0
    %1251 = vmatpush.bf16.msra.mxu0 0
    %1252 = vmatpush.bf16.msra.mxu0 0
    %1253 = vmatpush.bf16.msra.mxu0 0
    %1254 = vmatpush.bf16.msra.mxu0 0
    %1255 = vmatpush.bf16.msra.mxu0 0
    %1256 = vmatpush.bf16.msra.mxu0 0
    %1257 = vmatpush.bf16.msra.mxu0 %v1245
    %1258 = vmatpush.bf16.msra.mxu0 %v1244
    %1259 = vmatmul.bf16.gmra.mxu0 %v1249
    %v1260 = vpop.f32.mrf.mxu0
    %v1261 = vadd.f32 0.0, %v1260
    %v1262 = vpop.f32.mrf.mxu0
    %v1263 = vadd.f32 0.0, %v1262
    %1264 = vdwg.mxu0
    %v1265 = vpack.c.bf16 %v1261, %v1261
    %v1266 = vpack.c.bf16 %v1263, %v1263
    %1267 = vrot.lane.b32.xlu0 %v926, 32
    %v1268 = vpop.permute.xlu0 %1267
    %1269 = vrot.lane.b32.xlu0 %v931, 32
    %v1270 = vpop.permute.xlu0 %1269
    %v1272 = vsel %vm803, %v1268, 0
    %v1275 = vsel %vm803, %v1270, 0
    %1277 = vmatpush.bf16.xpose.msra.mxu0 0
    %1278 = vmatpush.bf16.xpose.msra.mxu0 0
    %1279 = vmatpush.bf16.xpose.msra.mxu0 0
    %1280 = vmatpush.bf16.xpose.msra.mxu0 0
    %1281 = vmatpush.bf16.xpose.msra.mxu0 0
    %1282 = vmatpush.bf16.xpose.msra.mxu0 0
    %1283 = vmatpush.bf16.xpose.msra.mxu0 0
    %1284 = vmatpush.bf16.xpose.msra.mxu0 %v1275
    %1285 = vmatmul.bf16.gmra.mxu0 %v1272
    %v1286 = vpop.f32.mrf.mxu0
    %v1287 = vadd.f32 0.0, %v1286
    %v1288 = vpop.f32.mrf.mxu0
    %1289 = vdwg.mxu0
    %1290 = vrot.lane.b32.xlu0 %v955, 32
    %v1291 = vpop.permute.xlu0 %1290
    %1292 = vrot.lane.b32.xlu0 %v960, 32
    %v1293 = vpop.permute.xlu0 %1292
    %v1295 = vsel %vm803, %v1291, 0
    %v1298 = vsel %vm803, %v1293, 0
    %1300 = vmatpush.bf16.xpose.msra.mxu0 0
    %1301 = vmatpush.bf16.xpose.msra.mxu0 0
    %1302 = vmatpush.bf16.xpose.msra.mxu0 0
    %1303 = vmatpush.bf16.xpose.msra.mxu0 0
    %1304 = vmatpush.bf16.xpose.msra.mxu0 0
    %1305 = vmatpush.bf16.xpose.msra.mxu0 0
    %1306 = vmatpush.bf16.xpose.msra.mxu0 0
    %1307 = vmatpush.bf16.xpose.msra.mxu0 %v1298
    %1308 = vmatmul.bf16.gmra.mxu0 %v1295
    %v1309 = vpop.f32.mrf.mxu0
    %v1310 = vadd.f32 0.0, %v1309
    %v1311 = vpop.f32.mrf.mxu0
    %1312 = vdwg.mxu0
    %v1313 = vsel %vm861, %v1287, -inf
    %1314 = vmax.xlane.f32.xlu0 %v1313
    %v1315 = vpop.xlane.xlu0 %1314
    %v1316 = vsel %vm861, %v1310, -inf
    %1317 = vmax.xlane.f32.xlu0 %v1316
    %v1318 = vpop.xlane.xlu0 %1317
    %v1319 = vsub.f32 %v1287, %v1315
    %v1320 = vsub.f32 %v1310, %v1318
    %v1321 = vmul.f32 %v1319, 1.442695
    %v1322 = vpow.pop %v1321
    %v1323 = vmul.f32 %v1320, 1.442695
    %v1324 = vpow.pop %v1323
    %v1325 = vsel %vm861, %v1322, 0.0
    %1326 = vadd.xlane.f32.xlu0 %v1325
    %v1327 = vpop.xlane.xlu0 %1326
    %v1328 = vsel %vm861, %v1324, 0.0
    %1329 = vadd.xlane.f32.xlu0 %v1328
    %v1330 = vpop.xlane.xlu0 %1329
    %v1331 = vrcp.pop %v1327
    %v1332 = vrcp.pop %v1330
    %v1333 = vmul.f32 %v1322, %v1331
    %v1334 = vmul.f32 %v1324, %v1332
    %v1335 = vpack.c.bf16 %v1333, %v1333
    %v1336 = vpack.c.bf16 %v1334, %v1334
    %v1338 = vsel %vm861, %v1335, 0
    %v1341 = vsel %vm1009, %v1265, 0
    %1343 = vmatpush.bf16.msra.mxu0 0
    %1344 = vmatpush.bf16.msra.mxu0 0
    %1345 = vmatpush.bf16.msra.mxu0 0
    %1346 = vmatpush.bf16.msra.mxu0 0
    %1347 = vmatpush.bf16.msra.mxu0 0
    %1348 = vmatpush.bf16.msra.mxu0 0
    %1349 = vmatpush.bf16.msra.mxu0 0
    %1350 = vmatpush.bf16.msra.mxu0 %v1341
    %1351 = vmatmul.bf16.gmra.mxu0 %v1338
    %v1352 = vpop.f32.mrf.mxu0
    %v1353 = vadd.f32 0.0, %v1352
    %v1354 = vpop.f32.mrf.mxu0
    %1355 = vdwg.mxu0
    %v1357 = vsel %vm861, %v1336, 0
    %v1360 = vsel %vm1009, %v1266, 0
    %1362 = vmatpush.bf16.msra.mxu0 0
    %1363 = vmatpush.bf16.msra.mxu0 0
    %1364 = vmatpush.bf16.msra.mxu0 0
    %1365 = vmatpush.bf16.msra.mxu0 0
    %1366 = vmatpush.bf16.msra.mxu0 0
    %1367 = vmatpush.bf16.msra.mxu0 0
    %1368 = vmatpush.bf16.msra.mxu0 0
    %1369 = vmatpush.bf16.msra.mxu0 %v1360
    %1370 = vmatmul.bf16.gmra.mxu0 %v1357
    %v1371 = vpop.f32.mrf.mxu0
    %v1372 = vadd.f32 0.0, %v1371
    %v1373 = vpop.f32.mrf.mxu0
    %1374 = vdwg.mxu0
    %v1375 = vadd.f32 %v1228, %v1353
    %v1376 = vadd.f32 %v1229, %v1372
    %v1377 = vld [vmem:[#allocation4 + $0x2] ss:$0 sm:$0xff]
    %v1378 = vadd.f32 %v1375, %v1377
    %v1379 = vadd.f32 %v1376, %v1377
    %v1380 = vrot.slane %v1378, 4
    %v1381 = vadd.f32 %v1378, %v1380
    %v1382 = vrot.slane %v1381, 2
    %v1383 = vadd.f32 %v1381, %v1382
    %v1384 = vrot.slane %v1383, 1
    %v1385 = vadd.f32 %v1383, %v1384
    %v1386 = vrot.slane %v1379, 4
    %v1387 = vadd.f32 %v1379, %v1386
    %v1388 = vrot.slane %v1387, 2
    %v1389 = vadd.f32 %v1387, %v1388
    %v1390 = vrot.slane %v1389, 1
    %v1391 = vadd.f32 %v1389, %v1390
    %v1392 = vrcp.pop 8.0
    %v1393 = vmul.f32 8.0, %v1392
    %v1394 = vsub.f32 1.0, %v1393
    %v1395 = vmul.f32 %v1392, %v1394
    %v1396 = vadd.f32 %v1392, %v1395
    %vm1397 = vweird.f32 %v1392
    %v1398 = vsel %vm1397, %v1392, %v1396
    %v1399 = vmul.f32 %v1385, %v1398
    %v1400 = vmul.f32 %v1391, %v1398
    %v1401 = vld [vmem:[%s3 + $0x1c0] sm:$0xf]
    %v1402 = vld [vmem:[%s3 + $0x1c4] sm:$0xf]
    %v1403 = vld [vmem:[%s3 + $0x1c8] sm:$0xf]
    %v1404 = vld [vmem:[%s3 + $0x1cc] sm:$0xf]
    %v1405 = vld [vmem:[%s3 + $0x1d0] sm:$0xf]
    %v1406 = vld [vmem:[%s3 + $0x1d4] sm:$0xf]
    %v1407 = vld [vmem:[%s3 + $0x1d8] sm:$0xf]
    %v1408 = vld [vmem:[%s3 + $0x1dc] sm:$0xf]
    %v1409 = vld [vmem:[%s3 + $0x1e0] sm:$0xf]
    %v1410 = vld [vmem:[%s3 + $0x1e4] sm:$0xf]
    %v1411 = vld [vmem:[%s3 + $0x1e8] sm:$0xf]
    %v1412 = vld [vmem:[%s3 + $0x1ec] sm:$0xf]
    %v1413 = vld [vmem:[%s3 + $0x1f0] sm:$0xf]
    %v1414 = vld [vmem:[%s3 + $0x1f4] sm:$0xf]
    %v1415 = vld [vmem:[%s3 + $0x1f8] sm:$0xf]
    %v1416 = vld [vmem:[%s3 + $0x1fc] sm:$0xf]
    %v1417 = vpack.c.bf16 %v1399, %v1399
    %v1418 = vpack.c.bf16 %v1400, %v1400
    %v1419 = vld [vmem:[#allocation4 + $0x3] ss:$0 sm:$0xff]
    %v1422 = vunpack.c.l.b16 %v1417
    %v1423 = vunpack.c.l.b16 %v1418
    %vm1424 = vcmask 1041409
    %v1425 = vsel %vm1424, %v1423, %v1422
    %v1426 = vpack.c.b16 %v1425, %v1425
    %v1444 = vunpack.c.l.b16 %v1401
    %v1445 = vunpack.c.l.b16 %v1402
    %v1446 = vunpack.c.l.b16 %v1403
    %v1447 = vunpack.c.l.b16 %v1404
    %v1448 = vunpack.c.l.b16 %v1405
    %v1449 = vunpack.c.l.b16 %v1406
    %v1450 = vunpack.c.l.b16 %v1407
    %v1451 = vunpack.c.l.b16 %v1408
    %v1452 = vunpack.c.l.b16 %v1409
    %v1453 = vunpack.c.l.b16 %v1410
    %v1454 = vunpack.c.l.b16 %v1411
    %v1455 = vunpack.c.l.b16 %v1412
    %v1456 = vunpack.c.l.b16 %v1413
    %v1457 = vunpack.c.l.b16 %v1414
    %v1458 = vunpack.c.l.b16 %v1415
    %v1459 = vunpack.c.l.b16 %v1416
    %v1460 = vpack.c.b16 %v1445, %v1444
    %v1461 = vpack.c.b16 %v1447, %v1446
    %v1462 = vpack.c.b16 %v1449, %v1448
    %v1463 = vpack.c.b16 %v1451, %v1450
    %v1464 = vpack.c.b16 %v1453, %v1452
    %v1465 = vpack.c.b16 %v1455, %v1454
    %v1466 = vpack.c.b16 %v1457, %v1456
    %v1467 = vpack.c.b16 %v1459, %v1458
    %1476 = vmatpush.bf16.msra.mxu0 %v1467
    %1477 = vmatpush.bf16.msra.mxu0 %v1466
    %1478 = vmatpush.bf16.msra.mxu0 %v1465
    %1479 = vmatpush.bf16.msra.mxu0 %v1464
    %1480 = vmatpush.bf16.msra.mxu0 %v1463
    %1481 = vmatpush.bf16.msra.mxu0 %v1462
    %1482 = vmatpush.bf16.msra.mxu0 %v1461
    %1483 = vmatpush.bf16.msra.mxu0 %v1460
    %1484 = vmatmul.bf16.gmra.mxu0 %v1426
    %v1485 = vpop.f32.mrf.mxu0
    %v1486 = vadd.f32 %v1419, %v1485
    %v1487 = vpop.f32.mrf.mxu0
    %1488 = vdwg.mxu0
    %v1489 = vld [vmem:[%s1] sm:$0x1]
    %v1490 = vld [vmem:[%s1 + $0x1] sm:$0x1]
    %v1491 = vld [vmem:[%s1 + $0x2] sm:$0x1]
    %v1492 = vld [vmem:[%s2] sm:$0xf]
    %v1493 = vld [vmem:[%s2 + $0x4] sm:$0xf]
    %v1494 = vld [vmem:[%s2 + $0x8] sm:$0xf]
    %v1495 = vld [vmem:[%s2 + $0xc] sm:$0xf]
    %v1496 = vld [vmem:[%s2 + $0x10] sm:$0xf]
    %v1497 = vld [vmem:[%s2 + $0x14] sm:$0xf]
    %v1498 = vld [vmem:[%s2 + $0x18] sm:$0xf]
    %v1499 = vld [vmem:[%s2 + $0x1c] sm:$0xf]
    %v1500 = vld [vmem:[%s2 + $0x20] sm:$0xf]
    %v1501 = vld [vmem:[%s2 + $0x24] sm:$0xf]
    %v1502 = vld [vmem:[%s2 + $0x28] sm:$0xf]
    %v1503 = vld [vmem:[%s2 + $0x2c] sm:$0xf]
    %v1504 = vld [vmem:[%s2 + $0x30] sm:$0xf]
    %v1505 = vld [vmem:[%s2 + $0x34] sm:$0xf]
    %v1506 = vld [vmem:[%s2 + $0x38] sm:$0xf]
    %v1507 = vld [vmem:[%s2 + $0x3c] sm:$0xf]
    %v1508 = vld [vmem:[#allocation4 + $0x4] ss:$0 sm:$0xff]
    %v1525 = vunpack.c.l.b16 %v1492
    %v1526 = vunpack.c.l.b16 %v1493
    %v1527 = vunpack.c.l.b16 %v1494
    %v1528 = vunpack.c.l.b16 %v1495
    %v1529 = vunpack.c.l.b16 %v1496
    %v1530 = vunpack.c.l.b16 %v1497
    %v1531 = vunpack.c.l.b16 %v1498
    %v1532 = vunpack.c.l.b16 %v1499
    %v1533 = vunpack.c.l.b16 %v1500
    %v1534 = vunpack.c.l.b16 %v1501
    %v1535 = vunpack.c.l.b16 %v1502
    %v1536 = vunpack.c.l.b16 %v1503
    %v1537 = vunpack.c.l.b16 %v1504
    %v1538 = vunpack.c.l.b16 %v1505
    %v1539 = vunpack.c.l.b16 %v1506
    %v1540 = vunpack.c.l.b16 %v1507
    %v1541 = vpack.c.b16 %v1526, %v1525
    %v1542 = vpack.c.b16 %v1528, %v1527
    %v1543 = vpack.c.b16 %v1530, %v1529
    %v1544 = vpack.c.b16 %v1532, %v1531
    %v1545 = vpack.c.b16 %v1534, %v1533
    %v1546 = vpack.c.b16 %v1536, %v1535
    %v1547 = vpack.c.b16 %v1538, %v1537
    %v1548 = vpack.c.b16 %v1540, %v1539
    %1557 = vmatpush.bf16.msra.mxu0 %v1548
    %1558 = vmatpush.bf16.msra.mxu0 %v1547
    %1559 = vmatpush.bf16.msra.mxu0 %v1546
    %1560 = vmatpush.bf16.msra.mxu0 %v1545
    %1561 = vmatpush.bf16.msra.mxu0 %v1544
    %1562 = vmatpush.bf16.msra.mxu0 %v1543
    %1563 = vmatpush.bf16.msra.mxu0 %v1542
    %1564 = vmatpush.bf16.msra.mxu0 %v1541
    %1565 = vmatmul.bf16.gmra.mxu0 %v1489
    %v1566 = vpop.f32.mrf.mxu0
    %v1567 = vadd.f32 %v1508, %v1566
    %v1568 = vpop.f32.mrf.mxu0
    %1569 = vdwg.mxu0
    %v1570 = vmax.f32 %v1567, 0.0
    %v1571 = vld [vmem:[%s3 + $0x200] sm:$0xf]
    %v1572 = vld [vmem:[%s3 + $0x204] sm:$0xf]
    %v1573 = vld [vmem:[%s3 + $0x208] sm:$0xf]
    %v1574 = vld [vmem:[%s3 + $0x20c] sm:$0xf]
    %v1575 = vld [vmem:[%s3 + $0x210] sm:$0xf]
    %v1576 = vld [vmem:[%s3 + $0x214] sm:$0xf]
    %v1577 = vld [vmem:[%s3 + $0x218] sm:$0xf]
    %v1578 = vld [vmem:[%s3 + $0x21c] sm:$0xf]
    %v1579 = vpack.c.bf16 %v1570, %v1570
    %v1580 = vld [vmem:[#allocation4 + $0x5] ss:$0 sm:$0xff]
    %v1589 = vunpack.c.l.b16 %v1571
    %v1590 = vunpack.c.l.b16 %v1572
    %v1591 = vunpack.c.l.b16 %v1573
    %v1592 = vunpack.c.l.b16 %v1574
    %v1593 = vunpack.c.l.b16 %v1575
    %v1594 = vunpack.c.l.b16 %v1576
    %v1595 = vunpack.c.l.b16 %v1577
    %v1596 = vunpack.c.l.b16 %v1578
    %v1597 = vpack.c.b16 %v1590, %v1589
    %v1598 = vpack.c.b16 %v1592, %v1591
    %v1599 = vpack.c.b16 %v1594, %v1593
    %v1600 = vpack.c.b16 %v1596, %v1595
    %vm1605 = vcmask 523264
    %v1607 = vsel %vm1605, %v1579, 0
    %1609 = vmatpush.bf16.msra.mxu0 0
    %1610 = vmatpush.bf16.msra.mxu0 0
    %1611 = vmatpush.bf16.msra.mxu0 0
    %1612 = vmatpush.bf16.msra.mxu0 0
    %1613 = vmatpush.bf16.msra.mxu0 %v1600
    %1614 = vmatpush.bf16.msra.mxu0 %v1599
    %1615 = vmatpush.bf16.msra.mxu0 %v1598
    %1616 = vmatpush.bf16.msra.mxu0 %v1597
    %1617 = vmatmul.bf16.gmra.mxu0 %v1607
    %v1618 = vpop.f32.mrf.mxu0
    %v1619 = vadd.f32 %v1580, %v1618
    %v1620 = vpop.f32.mrf.mxu0
    %1621 = vdwg.mxu0
    %v1622 = vld [vmem:[%s2 + $0x40] sm:$0xf]
    %v1623 = vld [vmem:[%s2 + $0x44] sm:$0xf]
    %v1624 = vld [vmem:[%s2 + $0x48] sm:$0xf]
    %v1625 = vld [vmem:[%s2 + $0x4c] sm:$0xf]
    %v1626 = vld [vmem:[%s2 + $0x50] sm:$0xf]
    %v1627 = vld [vmem:[%s2 + $0x54] sm:$0xf]
    %v1628 = vld [vmem:[%s2 + $0x58] sm:$0xf]
    %v1629 = vld [vmem:[%s2 + $0x5c] sm:$0xf]
    %v1630 = vld [vmem:[%s2 + $0x60] sm:$0xf]
    %v1631 = vld [vmem:[%s2 + $0x64] sm:$0xf]
    %v1632 = vld [vmem:[%s2 + $0x68] sm:$0xf]
    %v1633 = vld [vmem:[%s2 + $0x6c] sm:$0xf]
    %v1634 = vld [vmem:[%s2 + $0x70] sm:$0xf]
    %v1635 = vld [vmem:[%s2 + $0x74] sm:$0xf]
    %v1636 = vld [vmem:[%s2 + $0x78] sm:$0xf]
    %v1637 = vld [vmem:[%s2 + $0x7c] sm:$0xf]
    %v1638 = vld [vmem:[#allocation4 + $0x6] ss:$0 sm:$0xff]
    %v1655 = vunpack.c.l.b16 %v1622
    %v1656 = vunpack.c.l.b16 %v1623
    %v1657 = vunpack.c.l.b16 %v1624
    %v1658 = vunpack.c.l.b16 %v1625
    %v1659 = vunpack.c.l.b16 %v1626
    %v1660 = vunpack.c.l.b16 %v1627
    %v1661 = vunpack.c.l.b16 %v1628
    %v1662 = vunpack.c.l.b16 %v1629
    %v1663 = vunpack.c.l.b16 %v1630
    %v1664 = vunpack.c.l.b16 %v1631
    %v1665 = vunpack.c.l.b16 %v1632
    %v1666 = vunpack.c.l.b16 %v1633
    %v1667 = vunpack.c.l.b16 %v1634
    %v1668 = vunpack.c.l.b16 %v1635
    %v1669 = vunpack.c.l.b16 %v1636
    %v1670 = vunpack.c.l.b16 %v1637
    %v1671 = vpack.c.b16 %v1656, %v1655
    %v1672 = vpack.c.b16 %v1658, %v1657
    %v1673 = vpack.c.b16 %v1660, %v1659
    %v1674 = vpack.c.b16 %v1662, %v1661
    %v1675 = vpack.c.b16 %v1664, %v1663
    %v1676 = vpack.c.b16 %v1666, %v1665
    %v1677 = vpack.c.b16 %v1668, %v1667
    %v1678 = vpack.c.b16 %v1670, %v1669
    %1687 = vmatpush.bf16.msra.mxu0 %v1678
    %1688 = vmatpush.bf16.msra.mxu0 %v1677
    %1689 = vmatpush.bf16.msra.mxu0 %v1676
    %1690 = vmatpush.bf16.msra.mxu0 %v1675
    %1691 = vmatpush.bf16.msra.mxu0 %v1674
    %1692 = vmatpush.bf16.msra.mxu0 %v1673
    %1693 = vmatpush.bf16.msra.mxu0 %v1672
    %1694 = vmatpush.bf16.msra.mxu0 %v1671
    %1695 = vmatmul.bf16.gmra.mxu0 %v1490
    %v1696 = vpop.f32.mrf.mxu0
    %v1697 = vadd.f32 %v1638, %v1696
    %v1698 = vpop.f32.mrf.mxu0
    %1699 = vdwg.mxu0
    %v1700 = vmax.f32 %v1697, 0.0
    %v1701 = vld [vmem:[%s3 + $0x220] sm:$0xf]
    %v1702 = vld [vmem:[%s3 + $0x224] sm:$0xf]
    %v1703 = vld [vmem:[%s3 + $0x228] sm:$0xf]
    %v1704 = vld [vmem:[%s3 + $0x22c] sm:$0xf]
    %v1705 = vld [vmem:[%s3 + $0x230] sm:$0xf]
    %v1706 = vld [vmem:[%s3 + $0x234] sm:$0xf]
    %v1707 = vld [vmem:[%s3 + $0x238] sm:$0xf]
    %v1708 = vld [vmem:[%s3 + $0x23c] sm:$0xf]
    %v1709 = vpack.c.bf16 %v1700, %v1700
    %v1710 = vld [vmem:[#allocation4 + $0x7] ss:$0 sm:$0xff]
    %v1719 = vunpack.c.l.b16 %v1701
    %v1720 = vunpack.c.l.b16 %v1702
    %v1721 = vunpack.c.l.b16 %v1703
    %v1722 = vunpack.c.l.b16 %v1704
    %v1723 = vunpack.c.l.b16 %v1705
    %v1724 = vunpack.c.l.b16 %v1706
    %v1725 = vunpack.c.l.b16 %v1707
    %v1726 = vunpack.c.l.b16 %v1708
    %v1727 = vpack.c.b16 %v1720, %v1719
    %v1728 = vpack.c.b16 %v1722, %v1721
    %v1729 = vpack.c.b16 %v1724, %v1723
    %v1730 = vpack.c.b16 %v1726, %v1725
    %v1736 = vsel %vm1605, %v1709, 0
    %1738 = vmatpush.bf16.msra.mxu0 0
    %1739 = vmatpush.bf16.msra.mxu0 0
    %1740 = vmatpush.bf16.msra.mxu0 0
    %1741 = vmatpush.bf16.msra.mxu0 0
    %1742 = vmatpush.bf16.msra.mxu0 %v1730
    %1743 = vmatpush.bf16.msra.mxu0 %v1729
    %1744 = vmatpush.bf16.msra.mxu0 %v1728
    %1745 = vmatpush.bf16.msra.mxu0 %v1727
    %1746 = vmatmul.bf16.gmra.mxu0 %v1736
    %v1747 = vpop.f32.mrf.mxu0
    %v1748 = vadd.f32 %v1710, %v1747
    %v1749 = vpop.f32.mrf.mxu0
    %1750 = vdwg.mxu0
    %v1751 = vld [vmem:[%s2 + $0x80] sm:$0xf]
    %v1752 = vld [vmem:[%s2 + $0x84] sm:$0xf]
    %v1753 = vld [vmem:[%s2 + $0x88] sm:$0xf]
    %v1754 = vld [vmem:[%s2 + $0x8c] sm:$0xf]
    %v1755 = vld [vmem:[%s2 + $0x90] sm:$0xf]
    %v1756 = vld [vmem:[%s2 + $0x94] sm:$0xf]
    %v1757 = vld [vmem:[%s2 + $0x98] sm:$0xf]
    %v1758 = vld [vmem:[%s2 + $0x9c] sm:$0xf]
    %v1759 = vld [vmem:[%s2 + $0xa0] sm:$0xf]
    %v1760 = vld [vmem:[%s2 + $0xa4] sm:$0xf]
    %v1761 = vld [vmem:[%s2 + $0xa8] sm:$0xf]
    %v1762 = vld [vmem:[%s2 + $0xac] sm:$0xf]
    %v1763 = vld [vmem:[%s2 + $0xb0] sm:$0xf]
    %v1764 = vld [vmem:[%s2 + $0xb4] sm:$0xf]
    %v1765 = vld [vmem:[%s2 + $0xb8] sm:$0xf]
    %v1766 = vld [vmem:[%s2 + $0xbc] sm:$0xf]
    %v1767 = vld [vmem:[#allocation4 + $0x18] ss:$0 sm:$0xff]
    %v1784 = vunpack.c.l.b16 %v1751
    %v1785 = vunpack.c.l.b16 %v1752
    %v1786 = vunpack.c.l.b16 %v1753
    %v1787 = vunpack.c.l.b16 %v1754
    %v1788 = vunpack.c.l.b16 %v1755
    %v1789 = vunpack.c.l.b16 %v1756
    %v1790 = vunpack.c.l.b16 %v1757
    %v1791 = vunpack.c.l.b16 %v1758
    %v1792 = vunpack.c.l.b16 %v1759
    %v1793 = vunpack.c.l.b16 %v1760
    %v1794 = vunpack.c.l.b16 %v1761
    %v1795 = vunpack.c.l.b16 %v1762
    %v1796 = vunpack.c.l.b16 %v1763
    %v1797 = vunpack.c.l.b16 %v1764
    %v1798 = vunpack.c.l.b16 %v1765
    %v1799 = vunpack.c.l.b16 %v1766
    %v1800 = vpack.c.b16 %v1785, %v1784
    %v1801 = vpack.c.b16 %v1787, %v1786
    %v1802 = vpack.c.b16 %v1789, %v1788
    %v1803 = vpack.c.b16 %v1791, %v1790
    %v1804 = vpack.c.b16 %v1793, %v1792
    %v1805 = vpack.c.b16 %v1795, %v1794
    %v1806 = vpack.c.b16 %v1797, %v1796
    %v1807 = vpack.c.b16 %v1799, %v1798
    %1816 = vmatpush.bf16.msra.mxu0 %v1807
    %1817 = vmatpush.bf16.msra.mxu0 %v1806
    %1818 = vmatpush.bf16.msra.mxu0 %v1805
    %1819 = vmatpush.bf16.msra.mxu0 %v1804
    %1820 = vmatpush.bf16.msra.mxu0 %v1803
    %1821 = vmatpush.bf16.msra.mxu0 %v1802
    %1822 = vmatpush.bf16.msra.mxu0 %v1801
    %1823 = vmatpush.bf16.msra.mxu0 %v1800
    %1824 = vmatmul.bf16.gmra.mxu0 %v1491
    %v1825 = vpop.f32.mrf.mxu0
    %v1826 = vadd.f32 %v1767, %v1825
    %v1827 = vpop.f32.mrf.mxu0
    %1828 = vdwg.mxu0
    %v1829 = vmax.f32 %v1826, 0.0
    %v1830 = vld [vmem:[%s3 + $0x240] sm:$0xf]
    %v1831 = vld [vmem:[%s3 + $0x244] sm:$0xf]
    %v1832 = vld [vmem:[%s3 + $0x248] sm:$0xf]
    %v1833 = vld [vmem:[%s3 + $0x24c] sm:$0xf]
    %v1834 = vld [vmem:[%s3 + $0x250] sm:$0xf]
    %v1835 = vld [vmem:[%s3 + $0x254] sm:$0xf]
    %v1836 = vld [vmem:[%s3 + $0x258] sm:$0xf]
    %v1837 = vld [vmem:[%s3 + $0x25c] sm:$0xf]
    %v1838 = vpack.c.bf16 %v1829, %v1829
    %v1839 = vld [vmem:[#allocation4 + $0x19] ss:$0 sm:$0xff]
    %v1848 = vunpack.c.l.b16 %v1830
    %v1849 = vunpack.c.l.b16 %v1831
    %v1850 = vunpack.c.l.b16 %v1832
    %v1851 = vunpack.c.l.b16 %v1833
    %v1852 = vunpack.c.l.b16 %v1834
    %v1853 = vunpack.c.l.b16 %v1835
    %v1854 = vunpack.c.l.b16 %v1836
    %v1855 = vunpack.c.l.b16 %v1837
    %v1856 = vpack.c.b16 %v1849, %v1848
    %v1857 = vpack.c.b16 %v1851, %v1850
    %v1858 = vpack.c.b16 %v1853, %v1852
    %v1859 = vpack.c.b16 %v1855, %v1854
    %v1865 = vsel %vm1605, %v1838, 0
    %1867 = vmatpush.bf16.msra.mxu0 0
    %1868 = vmatpush.bf16.msra.mxu0 0
    %1869 = vmatpush.bf16.msra.mxu0 0
    %1870 = vmatpush.bf16.msra.mxu0 0
    %1871 = vmatpush.bf16.msra.mxu0 %v1859
    %1872 = vmatpush.bf16.msra.mxu0 %v1858
    %1873 = vmatpush.bf16.msra.mxu0 %v1857
    %1874 = vmatpush.bf16.msra.mxu0 %v1856
    %1875 = vmatmul.bf16.gmra.mxu0 %v1865
    %v1876 = vpop.f32.mrf.mxu0
    %v1877 = vadd.f32 %v1839, %v1876
    %v1878 = vpop.f32.mrf.mxu0
    %1879 = vdwg.mxu0
    %1880 = vst [vmem:[%s7] sm:$0x1] %v1486
    %1881 = vst [vmem:[%s7 + $0x1] sm:$0x1] %v1619
    %1882 = vst [vmem:[%s7 + $0x2] sm:$0x1] %v1748
    %1883 = vst [vmem:[%s7 + $0x3] sm:$0x1] %v1877
    %1884 = vst [vmem:[%s7 + $0x3] sm:$0x2] %v1486
    %1885 = vst [vmem:[%s7 + $0x4] sm:$0x2] %v1619
    %1886 = vst [vmem:[%s7 + $0x5] sm:$0x2] %v1748
    %1887 = vst [vmem:[%s7 + $0x6] sm:$0x2] %v1877
    %v1888 = vld [vmem:[%s7] sm:$0xff]
    %v1889 = vld [vmem:[%s5 + $0xc0] sm:$0xff]
    %v1890 = vld [vmem:[%s5 + $0xc8] sm:$0xf]
    %v1891 = vld [vmem:[%s5 + $0xcc] sm:$0xff]
    %v1892 = vld [vmem:[%s5 + $0xd4] sm:$0xf]
    %v1893 = vld [vmem:[%s5 + $0xd8] sm:$0xff]
    %v1894 = vld [vmem:[%s5 + $0xe0] sm:$0xf]
    %v1895 = vld [vmem:[%s5 + $0xe4] sm:$0xff]
    %v1896 = vld [vmem:[%s5 + $0xec] sm:$0xf]
    %v1897 = vld [vmem:[%s5 + $0xf0] sm:$0xff]
    %v1898 = vld [vmem:[%s5 + $0xf8] sm:$0xf]
    %v1899 = vld [vmem:[%s5 + $0xfc] sm:$0xff]
    %v1900 = vld [vmem:[%s5 + $0x104] sm:$0xf]
    %v1901 = vld [vmem:[%s5 + $0x108] sm:$0xff]
    %v1902 = vld [vmem:[%s5 + $0x110] sm:$0xf]
    %v1903 = vld [vmem:[%s5 + $0x114] sm:$0xff]
    %v1904 = vld [vmem:[%s5 + $0x11c] sm:$0xf]
    %v1905 = vld [vmem:[%s5 + $0x120] sm:$0xff]
    %v1906 = vld [vmem:[%s5 + $0x128] sm:$0xf]
    %v1907 = vld [vmem:[%s5 + $0x12c] sm:$0xff]
    %v1908 = vld [vmem:[%s5 + $0x134] sm:$0xf]
    %v1909 = vld [vmem:[%s5 + $0x138] sm:$0xff]
    %v1910 = vld [vmem:[%s5 + $0x140] sm:$0xf]
    %v1911 = vld [vmem:[%s5 + $0x144] sm:$0xff]
    %v1912 = vld [vmem:[%s5 + $0x14c] sm:$0xf]
    %v1913 = vld [vmem:[%s5 + $0x150] sm:$0xff]
    %v1914 = vld [vmem:[%s5 + $0x158] sm:$0xf]
    %v1915 = vld [vmem:[%s5 + $0x15c] sm:$0xff]
    %v1916 = vld [vmem:[%s5 + $0x164] sm:$0xf]
    %v1917 = vld [vmem:[%s5 + $0x168] sm:$0xff]
    %v1918 = vld [vmem:[%s5 + $0x170] sm:$0xf]
    %v1919 = vld [vmem:[%s5 + $0x174] sm:$0xff]
    %v1920 = vld [vmem:[%s5 + $0x17c] sm:$0xf]
    %v1921 = vpack.c.bf16 %v1888, %v1888
    %s1922 = scalar_lea.vmem [#allocation4], 26
    %v1923 = vld [vmem:[%s1922] ss:$8 sm:$0x7]
    %v1925 = vperm.slane %v1923, 0
    %v1926 = vperm.slane %v1923, 1
    %v1927 = vperm.slane %v1923, 2
    %v1963 = vunpack.c.l.b16 %v1889
    %v1964 = vunpack.c.h.b16 %v1889
    %v1965 = vunpack.c.l.b16 %v1890
    %v1966 = vunpack.c.l.b16 %v1891
    %v1967 = vunpack.c.h.b16 %v1891
    %v1968 = vunpack.c.l.b16 %v1892
    %v1969 = vunpack.c.l.b16 %v1893
    %v1970 = vunpack.c.h.b16 %v1893
    %v1971 = vunpack.c.l.b16 %v1894
    %v1972 = vunpack.c.l.b16 %v1895
    %v1973 = vunpack.c.h.b16 %v1895
    %v1974 = vunpack.c.l.b16 %v1896
    %v1975 = vunpack.c.l.b16 %v1897
    %v1976 = vunpack.c.h.b16 %v1897
    %v1977 = vunpack.c.l.b16 %v1898
    %v1978 = vunpack.c.l.b16 %v1899
    %v1979 = vunpack.c.h.b16 %v1899
    %v1980 = vunpack.c.l.b16 %v1900
    %v1981 = vunpack.c.l.b16 %v1901
    %v1982 = vunpack.c.h.b16 %v1901
    %v1983 = vunpack.c.l.b16 %v1902
    %v1984 = vunpack.c.l.b16 %v1903
    %v1985 = vunpack.c.h.b16 %v1903
    %v1986 = vunpack.c.l.b16 %v1904
    %v1987 = vunpack.c.l.b16 %v1905
    %v1988 = vunpack.c.h.b16 %v1905
    %v1989 = vunpack.c.l.b16 %v1906
    %v1990 = vunpack.c.l.b16 %v1907
    %v1991 = vunpack.c.h.b16 %v1907
    %v1992 = vunpack.c.l.b16 %v1908
    %v1993 = vunpack.c.l.b16 %v1909
    %v1994 = vunpack.c.h.b16 %v1909
    %v1995 = vunpack.c.l.b16 %v1910
    %v1996 = vunpack.c.l.b16 %v1911
    %v1997 = vunpack.c.h.b16 %v1911
    %v1998 = vunpack.c.l.b16 %v1912
    %v1999 = vunpack.c.l.b16 %v1913
    %v2000 = vunpack.c.h.b16 %v1913
    %v2001 = vunpack.c.l.b16 %v1914
    %v2002 = vunpack.c.l.b16 %v1915
    %v2003 = vunpack.c.h.b16 %v1915
    %v2004 = vunpack.c.l.b16 %v1916
    %v2005 = vunpack.c.l.b16 %v1917
    %v2006 = vunpack.c.h.b16 %v1917
    %v2007 = vunpack.c.l.b16 %v1918
    %v2008 = vunpack.c.l.b16 %v1919
    %v2009 = vunpack.c.h.b16 %v1919
    %v2010 = vunpack.c.l.b16 %v1920
    %v2011 = vpack.c.b16 %v1966, %v1963
    %v2012 = vpack.c.b16 %v1967, %v1964
    %v2013 = vpack.c.b16 %v1968, %v1965
    %v2014 = vpack.c.b16 %v1972, %v1969
    %v2015 = vpack.c.b16 %v1973, %v1970
    %v2016 = vpack.c.b16 %v1974, %v1971
    %v2017 = vpack.c.b16 %v1978, %v1975
    %v2018 = vpack.c.b16 %v1979, %v1976
    %v2019 = vpack.c.b16 %v1980, %v1977
    %v2020 = vpack.c.b16 %v1984, %v1981
    %v2021 = vpack.c.b16 %v1985, %v1982
    %v2022 = vpack.c.b16 %v1986, %v1983
    %v2023 = vpack.c.b16 %v1990, %v1987
    %v2024 = vpack.c.b16 %v1991, %v1988
    %v2025 = vpack.c.b16 %v1992, %v1989
    %v2026 = vpack.c.b16 %v1996, %v1993
    %v2027 = vpack.c.b16 %v1997, %v1994
    %v2028 = vpack.c.b16 %v1998, %v1995
    %v2029 = vpack.c.b16 %v2002, %v1999
    %v2030 = vpack.c.b16 %v2003, %v2000
    %v2031 = vpack.c.b16 %v2004, %v2001
    %v2032 = vpack.c.b16 %v2008, %v2005
    %v2033 = vpack.c.b16 %v2009, %v2006
    %v2034 = vpack.c.b16 %v2010, %v2007
    %2059 = vmatpush.bf16.msra.mxu0 %v2032
    %2060 = vmatpush.bf16.msra.mxu0 %v2029
    %2061 = vmatpush.bf16.msra.mxu0 %v2026
    %2062 = vmatpush.bf16.msra.mxu0 %v2023
    %2063 = vmatpush.bf16.msra.mxu0 %v2020
    %2064 = vmatpush.bf16.msra.mxu0 %v2017
    %2065 = vmatpush.bf16.msra.mxu0 %v2014
    %2066 = vmatpush.bf16.msra.mxu0 %v2011
    %2067 = vmatmul.bf16.gmra.mxu0 %v1921
    %v2068 = vpop.f32.mrf.mxu0
    %v2069 = vadd.f32 %v1925, %v2068
    %v2070 = vpop.f32.mrf.mxu0
    %2071 = vdwg.mxu0
    %2072 = vmatpush.bf16.msra.mxu0 %v2033
    %2073 = vmatpush.bf16.msra.mxu0 %v2030
    %2074 = vmatpush.bf16.msra.mxu0 %v2027
    %2075 = vmatpush.bf16.msra.mxu0 %v2024
    %2076 = vmatpush.bf16.msra.mxu0 %v2021
    %2077 = vmatpush.bf16.msra.mxu0 %v2018
    %2078 = vmatpush.bf16.msra.mxu0 %v2015
    %2079 = vmatpush.bf16.msra.mxu0 %v2012
    %2080 = vmatmul.bf16.gmra.mxu0 %v1921
    %v2081 = vpop.f32.mrf.mxu0
    %v2082 = vadd.f32 %v1926, %v2081
    %v2083 = vpop.f32.mrf.mxu0
    %2084 = vdwg.mxu0
    %2085 = vmatpush.bf16.msra.mxu0 %v2034
    %2086 = vmatpush.bf16.msra.mxu0 %v2031
    %2087 = vmatpush.bf16.msra.mxu0 %v2028
    %2088 = vmatpush.bf16.msra.mxu0 %v2025
    %2089 = vmatpush.bf16.msra.mxu0 %v2022
    %2090 = vmatpush.bf16.msra.mxu0 %v2019
    %2091 = vmatpush.bf16.msra.mxu0 %v2016
    %2092 = vmatpush.bf16.msra.mxu0 %v2013
    %2093 = vmatmul.bf16.gmra.mxu0 %v1921
    %v2094 = vpop.f32.mrf.mxu0
    %v2095 = vadd.f32 %v1927, %v2094
    %v2096 = vpop.f32.mrf.mxu0
    %2097 = vdwg.mxu0
    %v2098 = vmul.f32 %v2069, 0.17677669
    %v2100 = vrot.slane %v2098, 4
    %v2103 = vrot.slane %v2082, 4
    %v2105 = vpack.c.bf16 %v2098, %v2098
    %v2106 = vpack.c.bf16 %v2100, %v2100
    %v2107 = vpack.c.bf16 %v2082, %v2082
    %v2108 = vpack.c.bf16 %v2103, %v2103
    %v2109 = vld [vmem:[%s3 + $0x260] sm:$0xf]
    %v2110 = vld [vmem:[%s3 + $0x264] sm:$0xf]
    %v2111 = vld [vmem:[%s3 + $0x268] sm:$0xf]
    %v2112 = vld [vmem:[%s3 + $0x26c] sm:$0xf]
    %v2113 = vpack.c.bf16 %v2095, %v2095
    %v2118 = vunpack.c.l.b16 %v2109
    %v2119 = vunpack.c.l.b16 %v2110
    %v2120 = vunpack.c.l.b16 %v2111
    %v2121 = vunpack.c.l.b16 %v2112
    %v2122 = vpack.c.b16 %v2119, %v2118
    %v2123 = vpack.c.b16 %v2121, %v2120
    %v2127 = vsel %vm803, %v2113, 0
    %2129 = vmatpush.bf16.msra.mxu0 0
    %2130 = vmatpush.bf16.msra.mxu0 0
    %2131 = vmatpush.bf16.msra.mxu0 0
    %2132 = vmatpush.bf16.msra.mxu0 0
    %2133 = vmatpush.bf16.msra.mxu0 0
    %2134 = vmatpush.bf16.msra.mxu0 0
    %2135 = vmatpush.bf16.msra.mxu0 %v2123
    %2136 = vmatpush.bf16.msra.mxu0 %v2122
    %2137 = vmatmul.bf16.gmra.mxu0 %v2127
    %v2138 = vpop.f32.mrf.mxu0
    %v2139 = vadd.f32 0.0, %v2138
    %v2140 = vpop.f32.mrf.mxu0
    %2141 = vdwg.mxu0
    %v2143 = vrot.slane %v2139, 4
    %v2145 = vpack.c.bf16 %v2139, %v2139
    %v2146 = vpack.c.bf16 %v2143, %v2143
    %v2148 = vsel %vm803, %v2105, 0
    %v2151 = vsel %vm803, %v2107, 0
    %2153 = vmatpush.bf16.xpose.msra.mxu0 0
    %2154 = vmatpush.bf16.xpose.msra.mxu0 0
    %2155 = vmatpush.bf16.xpose.msra.mxu0 0
    %2156 = vmatpush.bf16.xpose.msra.mxu0 0
    %2157 = vmatpush.bf16.xpose.msra.mxu0 0
    %2158 = vmatpush.bf16.xpose.msra.mxu0 0
    %2159 = vmatpush.bf16.xpose.msra.mxu0 0
    %2160 = vmatpush.bf16.xpose.msra.mxu0 %v2151
    %2161 = vmatmul.bf16.gmra.mxu0 %v2148
    %v2162 = vpop.f32.mrf.mxu0
    %v2163 = vadd.f32 0.0, %v2162
    %v2164 = vpop.f32.mrf.mxu0
    %2165 = vdwg.mxu0
    %v2167 = vsel %vm803, %v2106, 0
    %v2170 = vsel %vm803, %v2108, 0
    %2172 = vmatpush.bf16.xpose.msra.mxu0 0
    %2173 = vmatpush.bf16.xpose.msra.mxu0 0
    %2174 = vmatpush.bf16.xpose.msra.mxu0 0
    %2175 = vmatpush.bf16.xpose.msra.mxu0 0
    %2176 = vmatpush.bf16.xpose.msra.mxu0 0
    %2177 = vmatpush.bf16.xpose.msra.mxu0 0
    %2178 = vmatpush.bf16.xpose.msra.mxu0 0
    %2179 = vmatpush.bf16.xpose.msra.mxu0 %v2170
    %2180 = vmatmul.bf16.gmra.mxu0 %v2167
    %v2181 = vpop.f32.mrf.mxu0
    %v2182 = vadd.f32 0.0, %v2181
    %v2183 = vpop.f32.mrf.mxu0
    %2184 = vdwg.mxu0
    %vm2185 = vcmask 27648
    %v2186 = vsel %vm2185, %v2163, -inf
    %2187 = vmax.xlane.f32.xlu0 %v2186
    %v2188 = vpop.xlane.xlu0 %2187
    %v2189 = vsel %vm2185, %v2182, -inf
    %2190 = vmax.xlane.f32.xlu0 %v2189
    %v2191 = vpop.xlane.xlu0 %2190
    %v2192 = vsub.f32 %v2163, %v2188
    %v2193 = vsub.f32 %v2182, %v2191
    %v2194 = vmul.f32 %v2192, 1.442695
    %v2195 = vpow.pop %v2194
    %v2196 = vmul.f32 %v2193, 1.442695
    %v2197 = vpow.pop %v2196
    %v2198 = vsel %vm2185, %v2195, 0.0
    %2199 = vadd.xlane.f32.xlu0 %v2198
    %v2200 = vpop.xlane.xlu0 %2199
    %v2201 = vsel %vm2185, %v2197, 0.0
    %2202 = vadd.xlane.f32.xlu0 %v2201
    %v2203 = vpop.xlane.xlu0 %2202
    %v2204 = vrcp.pop %v2200
    %v2205 = vrcp.pop %v2203
    %v2206 = vmul.f32 %v2195, %v2204
    %v2207 = vmul.f32 %v2197, %v2205
    %v2208 = vpack.c.bf16 %v2206, %v2206
    %v2209 = vpack.c.bf16 %v2207, %v2207
    %v2210 = vld [vmem:[%s3 + $0x270] sm:$0xf]
    %v2211 = vld [vmem:[%s3 + $0x274] sm:$0xf]
    %v2212 = vld [vmem:[%s3 + $0x278] sm:$0xf]
    %v2213 = vld [vmem:[%s3 + $0x27c] sm:$0xf]
    %2215 = vrot.lane.b32.xlu0 %v2113, 96
    %v2216 = vpop.permute.xlu0 %2215
    %v2221 = vunpack.c.l.b16 %v2210
    %v2222 = vunpack.c.l.b16 %v2211
    %v2223 = vunpack.c.l.b16 %v2212
    %v2224 = vunpack.c.l.b16 %v2213
    %v2225 = vpack.c.b16 %v2222, %v2221
    %v2226 = vpack.c.b16 %v2224, %v2223
    %v2230 = vsel %vm803, %v2216, 0
    %2232 = vmatpush.bf16.msra.mxu0 0
    %2233 = vmatpush.bf16.msra.mxu0 0
    %2234 = vmatpush.bf16.msra.mxu0 0
    %2235 = vmatpush.bf16.msra.mxu0 0
    %2236 = vmatpush.bf16.msra.mxu0 0
    %2237 = vmatpush.bf16.msra.mxu0 0
    %2238 = vmatpush.bf16.msra.mxu0 %v2226
    %2239 = vmatpush.bf16.msra.mxu0 %v2225
    %2240 = vmatmul.bf16.gmra.mxu0 %v2230
    %v2241 = vpop.f32.mrf.mxu0
    %v2242 = vadd.f32 0.0, %v2241
    %v2243 = vpop.f32.mrf.mxu0
    %2244 = vdwg.mxu0
    %v2246 = vrot.slane %v2242, 4
    %v2248 = vpack.c.bf16 %v2242, %v2242
    %v2249 = vpack.c.bf16 %v2246, %v2246
    %v2251 = vunpack.c.l.b16 %v2105
    %v2252 = vpack.c.b16 %v2251, %v2251
    %2253 = vrot.lane.b32.xlu0 %v2252, 96
    %v2254 = vpop.permute.xlu0 %2253
    %v2256 = vunpack.c.l.b16 %v2107
    %v2257 = vpack.c.b16 %v2256, %v2256
    %2258 = vrot.lane.b32.xlu0 %v2257, 96
    %v2259 = vpop.permute.xlu0 %2258
    %v2261 = vsel %vm803, %v2254, 0
    %v2264 = vsel %vm803, %v2259, 0
    %2266 = vmatpush.bf16.xpose.msra.mxu0 0
    %2267 = vmatpush.bf16.xpose.msra.mxu0 0
    %2268 = vmatpush.bf16.xpose.msra.mxu0 0
    %2269 = vmatpush.bf16.xpose.msra.mxu0 0
    %2270 = vmatpush.bf16.xpose.msra.mxu0 0
    %2271 = vmatpush.bf16.xpose.msra.mxu0 0
    %2272 = vmatpush.bf16.xpose.msra.mxu0 0
    %2273 = vmatpush.bf16.xpose.msra.mxu0 %v2264
    %2274 = vmatmul.bf16.gmra.mxu0 %v2261
    %v2275 = vpop.f32.mrf.mxu0
    %v2276 = vadd.f32 0.0, %v2275
    %v2277 = vpop.f32.mrf.mxu0
    %2278 = vdwg.mxu0
    %v2280 = vunpack.c.l.b16 %v2106
    %v2281 = vpack.c.b16 %v2280, %v2280
    %2282 = vrot.lane.b32.xlu0 %v2281, 96
    %v2283 = vpop.permute.xlu0 %2282
    %v2285 = vunpack.c.l.b16 %v2108
    %v2286 = vpack.c.b16 %v2285, %v2285
    %2287 = vrot.lane.b32.xlu0 %v2286, 96
    %v2288 = vpop.permute.xlu0 %2287
    %v2290 = vsel %vm803, %v2283, 0
    %v2293 = vsel %vm803, %v2288, 0
    %2295 = vmatpush.bf16.xpose.msra.mxu0 0
    %2296 = vmatpush.bf16.xpose.msra.mxu0 0
    %2297 = vmatpush.bf16.xpose.msra.mxu0 0
    %2298 = vmatpush.bf16.xpose.msra.mxu0 0
    %2299 = vmatpush.bf16.xpose.msra.mxu0 0
    %2300 = vmatpush.bf16.xpose.msra.mxu0 0
    %2301 = vmatpush.bf16.xpose.msra.mxu0 0
    %2302 = vmatpush.bf16.xpose.msra.mxu0 %v2293
    %2303 = vmatmul.bf16.gmra.mxu0 %v2290
    %v2304 = vpop.f32.mrf.mxu0
    %v2305 = vadd.f32 0.0, %v2304
    %v2306 = vpop.f32.mrf.mxu0
    %2307 = vdwg.mxu0
    %v2308 = vsel %vm2185, %v2276, -inf
    %2309 = vmax.xlane.f32.xlu0 %v2308
    %v2310 = vpop.xlane.xlu0 %2309
    %v2311 = vsel %vm2185, %v2305, -inf
    %2312 = vmax.xlane.f32.xlu0 %v2311
    %v2313 = vpop.xlane.xlu0 %2312
    %v2314 = vsub.f32 %v2276, %v2310
    %v2315 = vsub.f32 %v2305, %v2313
    %v2316 = vmul.f32 %v2314, 1.442695
    %v2317 = vpow.pop %v2316
    %v2318 = vmul.f32 %v2315, 1.442695
    %v2319 = vpow.pop %v2318
    %v2320 = vsel %vm2185, %v2317, 0.0
    %2321 = vadd.xlane.f32.xlu0 %v2320
    %v2322 = vpop.xlane.xlu0 %2321
    %v2323 = vsel %vm2185, %v2319, 0.0
    %2324 = vadd.xlane.f32.xlu0 %v2323
    %v2325 = vpop.xlane.xlu0 %2324
    %v2326 = vrcp.pop %v2322
    %v2327 = vrcp.pop %v2325
    %v2328 = vmul.f32 %v2317, %v2326
    %v2329 = vmul.f32 %v2319, %v2327
    %v2330 = vpack.c.bf16 %v2328, %v2328
    %v2331 = vpack.c.bf16 %v2329, %v2329
    %vm2332 = vcmask 31744
    %v2334 = vsel %vm2332, %v2330, 0
    %vm2336 = vcmask 1041408
    %v2338 = vsel %vm2336, %v2248, 0
    %2340 = vmatpush.bf16.msra.mxu0 0
    %2341 = vmatpush.bf16.msra.mxu0 0
    %2342 = vmatpush.bf16.msra.mxu0 0
    %2343 = vmatpush.bf16.msra.mxu0 0
    %2344 = vmatpush.bf16.msra.mxu0 0
    %2345 = vmatpush.bf16.msra.mxu0 0
    %2346 = vmatpush.bf16.msra.mxu0 0
    %2347 = vmatpush.bf16.msra.mxu0 %v2338
    %2348 = vmatmul.bf16.gmra.mxu0 %v2334
    %v2349 = vpop.f32.mrf.mxu0
    %v2350 = vadd.f32 0.0, %v2349
    %v2351 = vpop.f32.mrf.mxu0
    %2352 = vdwg.mxu0
    %v2354 = vsel %vm2332, %v2331, 0
    %v2357 = vsel %vm2336, %v2249, 0
    %2359 = vmatpush.bf16.msra.mxu0 0
    %2360 = vmatpush.bf16.msra.mxu0 0
    %2361 = vmatpush.bf16.msra.mxu0 0
    %2362 = vmatpush.bf16.msra.mxu0 0
    %2363 = vmatpush.bf16.msra.mxu0 0
    %2364 = vmatpush.bf16.msra.mxu0 0
    %2365 = vmatpush.bf16.msra.mxu0 0
    %2366 = vmatpush.bf16.msra.mxu0 %v2357
    %2367 = vmatmul.bf16.gmra.mxu0 %v2354
    %v2368 = vpop.f32.mrf.mxu0
    %v2369 = vadd.f32 0.0, %v2368
    %v2370 = vpop.f32.mrf.mxu0
    %2371 = vdwg.mxu0
    %v2373 = vsel %vm2332, %v2208, 0
    %v2376 = vsel %vm2336, %v2145, 0
    %2378 = vmatpush.bf16.msra.mxu0 0
    %2379 = vmatpush.bf16.msra.mxu0 0
    %2380 = vmatpush.bf16.msra.mxu0 0
    %2381 = vmatpush.bf16.msra.mxu0 0
    %2382 = vmatpush.bf16.msra.mxu0 0
    %2383 = vmatpush.bf16.msra.mxu0 0
    %2384 = vmatpush.bf16.msra.mxu0 0
    %2385 = vmatpush.bf16.msra.mxu0 %v2376
    %2386 = vmatmul.bf16.gmra.mxu0 %v2373
    %v2387 = vpop.f32.mrf.mxu0
    %v2388 = vadd.f32 %v2350, %v2387
    %v2389 = vpop.f32.mrf.mxu0
    %2390 = vdwg.mxu0
    %v2392 = vsel %vm2332, %v2209, 0
    %v2395 = vsel %vm2336, %v2146, 0
    %2397 = vmatpush.bf16.msra.mxu0 0
    %2398 = vmatpush.bf16.msra.mxu0 0
    %2399 = vmatpush.bf16.msra.mxu0 0
    %2400 = vmatpush.bf16.msra.mxu0 0
    %2401 = vmatpush.bf16.msra.mxu0 0
    %2402 = vmatpush.bf16.msra.mxu0 0
    %2403 = vmatpush.bf16.msra.mxu0 0
    %2404 = vmatpush.bf16.msra.mxu0 %v2395
    %2405 = vmatmul.bf16.gmra.mxu0 %v2392
    %v2406 = vpop.f32.mrf.mxu0
    %v2407 = vadd.f32 %v2369, %v2406
    %v2408 = vpop.f32.mrf.mxu0
    %2409 = vdwg.mxu0
    %v2410 = vld [vmem:[%s3 + $0x280] sm:$0xf]
    %v2411 = vld [vmem:[%s3 + $0x284] sm:$0xf]
    %v2412 = vld [vmem:[%s3 + $0x288] sm:$0xf]
    %v2413 = vld [vmem:[%s3 + $0x28c] sm:$0xf]
    %2414 = vrot.lane.b32.xlu0 %v2113, 64
    %v2415 = vpop.permute.xlu0 %2414
    %v2420 = vunpack.c.l.b16 %v2410
    %v2421 = vunpack.c.l.b16 %v2411
    %v2422 = vunpack.c.l.b16 %v2412
    %v2423 = vunpack.c.l.b16 %v2413
    %v2424 = vpack.c.b16 %v2421, %v2420
    %v2425 = vpack.c.b16 %v2423, %v2422
    %v2429 = vsel %vm803, %v2415, 0
    %2431 = vmatpush.bf16.msra.mxu0 0
    %2432 = vmatpush.bf16.msra.mxu0 0
    %2433 = vmatpush.bf16.msra.mxu0 0
    %2434 = vmatpush.bf16.msra.mxu0 0
    %2435 = vmatpush.bf16.msra.mxu0 0
    %2436 = vmatpush.bf16.msra.mxu0 0
    %2437 = vmatpush.bf16.msra.mxu0 %v2425
    %2438 = vmatpush.bf16.msra.mxu0 %v2424
    %2439 = vmatmul.bf16.gmra.mxu0 %v2429
    %v2440 = vpop.f32.mrf.mxu0
    %v2441 = vadd.f32 0.0, %v2440
    %v2442 = vpop.f32.mrf.mxu0
    %2443 = vdwg.mxu0
    %v2445 = vrot.slane %v2441, 4
    %v2447 = vpack.c.bf16 %v2441, %v2441
    %v2448 = vpack.c.bf16 %v2445, %v2445
    %2449 = vrot.lane.b32.xlu0 %v2252, 64
    %v2450 = vpop.permute.xlu0 %2449
    %2451 = vrot.lane.b32.xlu0 %v2257, 64
    %v2452 = vpop.permute.xlu0 %2451
    %v2454 = vsel %vm803, %v2450, 0
    %v2457 = vsel %vm803, %v2452, 0
    %2459 = vmatpush.bf16.xpose.msra.mxu0 0
    %2460 = vmatpush.bf16.xpose.msra.mxu0 0
    %2461 = vmatpush.bf16.xpose.msra.mxu0 0
    %2462 = vmatpush.bf16.xpose.msra.mxu0 0
    %2463 = vmatpush.bf16.xpose.msra.mxu0 0
    %2464 = vmatpush.bf16.xpose.msra.mxu0 0
    %2465 = vmatpush.bf16.xpose.msra.mxu0 0
    %2466 = vmatpush.bf16.xpose.msra.mxu0 %v2457
    %2467 = vmatmul.bf16.gmra.mxu0 %v2454
    %v2468 = vpop.f32.mrf.mxu0
    %v2469 = vadd.f32 0.0, %v2468
    %v2470 = vpop.f32.mrf.mxu0
    %2471 = vdwg.mxu0
    %2472 = vrot.lane.b32.xlu0 %v2281, 64
    %v2473 = vpop.permute.xlu0 %2472
    %2474 = vrot.lane.b32.xlu0 %v2286, 64
    %v2475 = vpop.permute.xlu0 %2474
    %v2477 = vsel %vm803, %v2473, 0
    %v2480 = vsel %vm803, %v2475, 0
    %2482 = vmatpush.bf16.xpose.msra.mxu0 0
    %2483 = vmatpush.bf16.xpose.msra.mxu0 0
    %2484 = vmatpush.bf16.xpose.msra.mxu0 0
    %2485 = vmatpush.bf16.xpose.msra.mxu0 0
    %2486 = vmatpush.bf16.xpose.msra.mxu0 0
    %2487 = vmatpush.bf16.xpose.msra.mxu0 0
    %2488 = vmatpush.bf16.xpose.msra.mxu0 0
    %2489 = vmatpush.bf16.xpose.msra.mxu0 %v2480
    %2490 = vmatmul.bf16.gmra.mxu0 %v2477
    %v2491 = vpop.f32.mrf.mxu0
    %v2492 = vadd.f32 0.0, %v2491
    %v2493 = vpop.f32.mrf.mxu0
    %2494 = vdwg.mxu0
    %v2495 = vsel %vm2185, %v2469, -inf
    %2496 = vmax.xlane.f32.xlu0 %v2495
    %v2497 = vpop.xlane.xlu0 %2496
    %v2498 = vsel %vm2185, %v2492, -inf
    %2499 = vmax.xlane.f32.xlu0 %v2498
    %v2500 = vpop.xlane.xlu0 %2499
    %v2501 = vsub.f32 %v2469, %v2497
    %v2502 = vsub.f32 %v2492, %v2500
    %v2503 = vmul.f32 %v2501, 1.442695
    %v2504 = vpow.pop %v2503
    %v2505 = vmul.f32 %v2502, 1.442695
    %v2506 = vpow.pop %v2505
    %v2507 = vsel %vm2185, %v2504, 0.0
    %2508 = vadd.xlane.f32.xlu0 %v2507
    %v2509 = vpop.xlane.xlu0 %2508
    %v2510 = vsel %vm2185, %v2506, 0.0
    %2511 = vadd.xlane.f32.xlu0 %v2510
    %v2512 = vpop.xlane.xlu0 %2511
    %v2513 = vrcp.pop %v2509
    %v2514 = vrcp.pop %v2512
    %v2515 = vmul.f32 %v2504, %v2513
    %v2516 = vmul.f32 %v2506, %v2514
    %v2517 = vpack.c.bf16 %v2515, %v2515
    %v2518 = vpack.c.bf16 %v2516, %v2516
    %v2520 = vsel %vm2332, %v2517, 0
    %v2523 = vsel %vm2336, %v2447, 0
    %2525 = vmatpush.bf16.msra.mxu0 0
    %2526 = vmatpush.bf16.msra.mxu0 0
    %2527 = vmatpush.bf16.msra.mxu0 0
    %2528 = vmatpush.bf16.msra.mxu0 0
    %2529 = vmatpush.bf16.msra.mxu0 0
    %2530 = vmatpush.bf16.msra.mxu0 0
    %2531 = vmatpush.bf16.msra.mxu0 0
    %2532 = vmatpush.bf16.msra.mxu0 %v2523
    %2533 = vmatmul.bf16.gmra.mxu0 %v2520
    %v2534 = vpop.f32.mrf.mxu0
    %v2535 = vadd.f32 0.0, %v2534
    %v2536 = vpop.f32.mrf.mxu0
    %2537 = vdwg.mxu0
    %v2539 = vsel %vm2332, %v2518, 0
    %v2542 = vsel %vm2336, %v2448, 0
    %2544 = vmatpush.bf16.msra.mxu0 0
    %2545 = vmatpush.bf16.msra.mxu0 0
    %2546 = vmatpush.bf16.msra.mxu0 0
    %2547 = vmatpush.bf16.msra.mxu0 0
    %2548 = vmatpush.bf16.msra.mxu0 0
    %2549 = vmatpush.bf16.msra.mxu0 0
    %2550 = vmatpush.bf16.msra.mxu0 0
    %2551 = vmatpush.bf16.msra.mxu0 %v2542
    %2552 = vmatmul.bf16.gmra.mxu0 %v2539
    %v2553 = vpop.f32.mrf.mxu0
    %v2554 = vadd.f32 0.0, %v2553
    %v2555 = vpop.f32.mrf.mxu0
    %2556 = vdwg.mxu0
    %v2557 = vadd.f32 %v2388, %v2535
    %v2558 = vadd.f32 %v2407, %v2554
    %v2559 = vld [vmem:[%s3 + $0x290] sm:$0xf]
    %v2560 = vld [vmem:[%s3 + $0x294] sm:$0xf]
    %v2561 = vld [vmem:[%s3 + $0x298] sm:$0xf]
    %v2562 = vld [vmem:[%s3 + $0x29c] sm:$0xf]
    %2563 = vrot.lane.b32.xlu0 %v2113, 32
    %v2564 = vpop.permute.xlu0 %2563
    %v2569 = vunpack.c.l.b16 %v2559
    %v2570 = vunpack.c.l.b16 %v2560
    %v2571 = vunpack.c.l.b16 %v2561
    %v2572 = vunpack.c.l.b16 %v2562
    %v2573 = vpack.c.b16 %v2570, %v2569
    %v2574 = vpack.c.b16 %v2572, %v2571
    %v2578 = vsel %vm803, %v2564, 0
    %2580 = vmatpush.bf16.msra.mxu0 0
    %2581 = vmatpush.bf16.msra.mxu0 0
    %2582 = vmatpush.bf16.msra.mxu0 0
    %2583 = vmatpush.bf16.msra.mxu0 0
    %2584 = vmatpush.bf16.msra.mxu0 0
    %2585 = vmatpush.bf16.msra.mxu0 0
    %2586 = vmatpush.bf16.msra.mxu0 %v2574
    %2587 = vmatpush.bf16.msra.mxu0 %v2573
    %2588 = vmatmul.bf16.gmra.mxu0 %v2578
    %v2589 = vpop.f32.mrf.mxu0
    %v2590 = vadd.f32 0.0, %v2589
    %v2591 = vpop.f32.mrf.mxu0
    %2592 = vdwg.mxu0
    %v2594 = vrot.slane %v2590, 4
    %v2596 = vpack.c.bf16 %v2590, %v2590
    %v2597 = vpack.c.bf16 %v2594, %v2594
    %2598 = vrot.lane.b32.xlu0 %v2252, 32
    %v2599 = vpop.permute.xlu0 %2598
    %2600 = vrot.lane.b32.xlu0 %v2257, 32
    %v2601 = vpop.permute.xlu0 %2600
    %v2603 = vsel %vm803, %v2599, 0
    %v2606 = vsel %vm803, %v2601, 0
    %2608 = vmatpush.bf16.xpose.msra.mxu0 0
    %2609 = vmatpush.bf16.xpose.msra.mxu0 0
    %2610 = vmatpush.bf16.xpose.msra.mxu0 0
    %2611 = vmatpush.bf16.xpose.msra.mxu0 0
    %2612 = vmatpush.bf16.xpose.msra.mxu0 0
    %2613 = vmatpush.bf16.xpose.msra.mxu0 0
    %2614 = vmatpush.bf16.xpose.msra.mxu0 0
    %2615 = vmatpush.bf16.xpose.msra.mxu0 %v2606
    %2616 = vmatmul.bf16.gmra.mxu0 %v2603
    %v2617 = vpop.f32.mrf.mxu0
    %v2618 = vadd.f32 0.0, %v2617
    %v2619 = vpop.f32.mrf.mxu0
    %2620 = vdwg.mxu0
    %2621 = vrot.lane.b32.xlu0 %v2281, 32
    %v2622 = vpop.permute.xlu0 %2621
    %2623 = vrot.lane.b32.xlu0 %v2286, 32
    %v2624 = vpop.permute.xlu0 %2623
    %v2626 = vsel %vm803, %v2622, 0
    %v2629 = vsel %vm803, %v2624, 0
    %2631 = vmatpush.bf16.xpose.msra.mxu0 0
    %2632 = vmatpush.bf16.xpose.msra.mxu0 0
    %2633 = vmatpush.bf16.xpose.msra.mxu0 0
    %2634 = vmatpush.bf16.xpose.msra.mxu0 0
    %2635 = vmatpush.bf16.xpose.msra.mxu0 0
    %2636 = vmatpush.bf16.xpose.msra.mxu0 0
    %2637 = vmatpush.bf16.xpose.msra.mxu0 0
    %2638 = vmatpush.bf16.xpose.msra.mxu0 %v2629
    %2639 = vmatmul.bf16.gmra.mxu0 %v2626
    %v2640 = vpop.f32.mrf.mxu0
    %v2641 = vadd.f32 0.0, %v2640
    %v2642 = vpop.f32.mrf.mxu0
    %2643 = vdwg.mxu0
    %v2644 = vsel %vm2185, %v2618, -inf
    %2645 = vmax.xlane.f32.xlu0 %v2644
    %v2646 = vpop.xlane.xlu0 %2645
    %v2647 = vsel %vm2185, %v2641, -inf
    %2648 = vmax.xlane.f32.xlu0 %v2647
    %v2649 = vpop.xlane.xlu0 %2648
    %v2650 = vsub.f32 %v2618, %v2646
    %v2651 = vsub.f32 %v2641, %v2649
    %v2652 = vmul.f32 %v2650, 1.442695
    %v2653 = vpow.pop %v2652
    %v2654 = vmul.f32 %v2651, 1.442695
    %v2655 = vpow.pop %v2654
    %v2656 = vsel %vm2185, %v2653, 0.0
    %2657 = vadd.xlane.f32.xlu0 %v2656
    %v2658 = vpop.xlane.xlu0 %2657
    %v2659 = vsel %vm2185, %v2655, 0.0
    %2660 = vadd.xlane.f32.xlu0 %v2659
    %v2661 = vpop.xlane.xlu0 %2660
    %v2662 = vrcp.pop %v2658
    %v2663 = vrcp.pop %v2661
    %v2664 = vmul.f32 %v2653, %v2662
    %v2665 = vmul.f32 %v2655, %v2663
    %v2666 = vpack.c.bf16 %v2664, %v2664
    %v2667 = vpack.c.bf16 %v2665, %v2665
    %v2669 = vsel %vm2332, %v2666, 0
    %v2672 = vsel %vm2336, %v2596, 0
    %2674 = vmatpush.bf16.msra.mxu0 0
    %2675 = vmatpush.bf16.msra.mxu0 0
    %2676 = vmatpush.bf16.msra.mxu0 0
    %2677 = vmatpush.bf16.msra.mxu0 0
    %2678 = vmatpush.bf16.msra.mxu0 0
    %2679 = vmatpush.bf16.msra.mxu0 0
    %2680 = vmatpush.bf16.msra.mxu0 0
    %2681 = vmatpush.bf16.msra.mxu0 %v2672
    %2682 = vmatmul.bf16.gmra.mxu0 %v2669
    %v2683 = vpop.f32.mrf.mxu0
    %v2684 = vadd.f32 0.0, %v2683
    %v2685 = vpop.f32.mrf.mxu0
    %2686 = vdwg.mxu0
    %v2688 = vsel %vm2332, %v2667, 0
    %v2691 = vsel %vm2336, %v2597, 0
    %2693 = vmatpush.bf16.msra.mxu0 0
    %2694 = vmatpush.bf16.msra.mxu0 0
    %2695 = vmatpush.bf16.msra.mxu0 0
    %2696 = vmatpush.bf16.msra.mxu0 0
    %2697 = vmatpush.bf16.msra.mxu0 0
    %2698 = vmatpush.bf16.msra.mxu0 0
    %2699 = vmatpush.bf16.msra.mxu0 0
    %2700 = vmatpush.bf16.msra.mxu0 %v2691
    %2701 = vmatmul.bf16.gmra.mxu0 %v2688
    %v2702 = vpop.f32.mrf.mxu0
    %v2703 = vadd.f32 0.0, %v2702
    %v2704 = vpop.f32.mrf.mxu0
    %2705 = vdwg.mxu0
    %v2706 = vadd.f32 %v2557, %v2684
    %v2707 = vadd.f32 %v2558, %v2703
    %v2708 = vld [vmem:[#allocation4 + $0x1c] ss:$0 sm:$0xff]
    %v2710 = vrot.slane %v2708, 4
    %v2712 = vadd.f32 %v2706, %v2708
    %v2713 = vadd.f32 %v2707, %v2710
    %2716 = vst [vmem:[#allocation1] ss:$2 sm:$0xff] %v2712
    %s2717 = scalar_lea.vmem [#allocation1], 1
    %2718 = vst [vmem:[%s2717] ss:$2 sm:$0xff] %v2713
    %v2719 = vld.sshfl [vmem:[#allocation1] sm:$0xff pattern:$0x75316420]
    %v2721 = vadd.f32 %v1888, %v2719
    %2722 = vadd.xlane.f32.xlu0 %v2721
    %v2723 = vpop.xlane.xlu0 %2722
    %v2724 = vrcp.pop 128.0
    %v2725 = vmul.f32 128.0, %v2724
    %v2726 = vsub.f32 1.0, %v2725
    %v2727 = vmul.f32 %v2724, %v2726
    %v2728 = vadd.f32 %v2724, %v2727
    %vm2729 = vweird.f32 %v2724
    %v2730 = vsel %vm2729, %v2724, %v2728
    %v2731 = vmul.f32 %v2723, %v2730
    %v2732 = vsub.f32 %v2721, %v2731
    %v2733 = vmul.f32 %v2732, %v2732
    %2734 = vadd.xlane.f32.xlu0 %v2733
    %v2735 = vpop.xlane.xlu0 %2734
    %v2736 = vmul.f32 %v2735, %v2730
    %v2737 = vadd.f32 %v2736, 1e-05
    %v2738 = vrsqrt.pop %v2737
    %v2739 = vmul.f32 %v2738, %v2737
    %v2740 = vmul.f32 %v2739, %v2738
    %v2741 = vmul.f32 0.5, %v2740
    %v2742 = vsub.f32 1.5, %v2741
    %v2743 = vmul.f32 %v2738, %v2742
    %vm2744 = vweird.f32 %v2737
    %vm2745 = vweird.f32 %v2738
    %vm2746 = vmor %vm2744, %vm2745
    %v2747 = vsel %vm2746, %v2738, %v2743
    %v2748 = vmul.f32 %v2732, %v2747
    %v2749 = vld [vmem:[#allocation4 + $0x32] ss:$0 sm:$0xff]
    %v2750 = vmul.f32 %v2748, %v2749
    %v2751 = vld [vmem:[#allocation4 + $0x34] ss:$0 sm:$0xff]
    %v2752 = vadd.f32 %v2750, %v2751
    %v2753 = vld [vmem:[#allocation2] sm:$0xff]
    %v2754 = vld [vmem:[#allocation2 + $0x8] sm:$0xff]
    %v2755 = vld [vmem:[#allocation2 + $0x10] sm:$0xff]
    %v2756 = vld [vmem:[#allocation2 + $0x18] sm:$0xff]
    %v2757 = vld [vmem:[#allocation2 + $0x20] sm:$0xff]
    %v2758 = vld [vmem:[#allocation2 + $0x28] sm:$0xff]
    %v2759 = vld [vmem:[#allocation2 + $0x30] sm:$0xff]
    %v2760 = vld [vmem:[#allocation2 + $0x38] sm:$0xff]
    %v2761 = vld [vmem:[#allocation2 + $0x40] sm:$0xff]
    %v2762 = vld [vmem:[#allocation2 + $0x48] sm:$0xff]
    %v2763 = vld [vmem:[#allocation2 + $0x50] sm:$0xff]
    %v2764 = vld [vmem:[#allocation2 + $0x58] sm:$0xff]
    %v2765 = vld [vmem:[#allocation2 + $0x60] sm:$0xff]
    %v2766 = vld [vmem:[#allocation2 + $0x68] sm:$0xff]
    %v2767 = vld [vmem:[#allocation2 + $0x70] sm:$0xff]
    %v2768 = vld [vmem:[#allocation2 + $0x78] sm:$0xff]
    %v2769 = vpack.c.bf16 %v2752, %v2752
    %s2770 = scalar_lea.vmem [#allocation4], 30
    %v2771 = vld [vmem:[%s2770] ss:$8 sm:$0x3]
    %v2773 = vperm.slane %v2771, 0
    %v2774 = vperm.slane %v2771, 1
    %v2793 = vunpack.c.l.b16 %v2753
    %v2794 = vunpack.c.h.b16 %v2753
    %v2795 = vunpack.c.l.b16 %v2754
    %v2796 = vunpack.c.h.b16 %v2754
    %v2797 = vunpack.c.l.b16 %v2755
    %v2798 = vunpack.c.h.b16 %v2755
    %v2799 = vunpack.c.l.b16 %v2756
    %v2800 = vunpack.c.h.b16 %v2756
    %v2801 = vunpack.c.l.b16 %v2757
    %v2802 = vunpack.c.h.b16 %v2757
    %v2803 = vunpack.c.l.b16 %v2758
    %v2804 = vunpack.c.h.b16 %v2758
    %v2805 = vunpack.c.l.b16 %v2759
    %v2806 = vunpack.c.h.b16 %v2759
    %v2807 = vunpack.c.l.b16 %v2760
    %v2808 = vunpack.c.h.b16 %v2760
    %v2809 = vunpack.c.l.b16 %v2761
    %v2810 = vunpack.c.h.b16 %v2761
    %v2811 = vunpack.c.l.b16 %v2762
    %v2812 = vunpack.c.h.b16 %v2762
    %v2813 = vunpack.c.l.b16 %v2763
    %v2814 = vunpack.c.h.b16 %v2763
    %v2815 = vunpack.c.l.b16 %v2764
    %v2816 = vunpack.c.h.b16 %v2764
    %v2817 = vunpack.c.l.b16 %v2765
    %v2818 = vunpack.c.h.b16 %v2765
    %v2819 = vunpack.c.l.b16 %v2766
    %v2820 = vunpack.c.h.b16 %v2766
    %v2821 = vunpack.c.l.b16 %v2767
    %v2822 = vunpack.c.h.b16 %v2767
    %v2823 = vunpack.c.l.b16 %v2768
    %v2824 = vunpack.c.h.b16 %v2768
    %v2825 = vpack.c.b16 %v2795, %v2793
    %v2826 = vpack.c.b16 %v2796, %v2794
    %v2827 = vpack.c.b16 %v2799, %v2797
    %v2828 = vpack.c.b16 %v2800, %v2798
    %v2829 = vpack.c.b16 %v2803, %v2801
    %v2830 = vpack.c.b16 %v2804, %v2802
    %v2831 = vpack.c.b16 %v2807, %v2805
    %v2832 = vpack.c.b16 %v2808, %v2806
    %v2833 = vpack.c.b16 %v2811, %v2809
    %v2834 = vpack.c.b16 %v2812, %v2810
    %v2835 = vpack.c.b16 %v2815, %v2813
    %v2836 = vpack.c.b16 %v2816, %v2814
    %v2837 = vpack.c.b16 %v2819, %v2817
    %v2838 = vpack.c.b16 %v2820, %v2818
    %v2839 = vpack.c.b16 %v2823, %v2821
    %v2840 = vpack.c.b16 %v2824, %v2822
    %2857 = vmatpush.bf16.msra.mxu0 %v2839
    %2858 = vmatpush.bf16.msra.mxu0 %v2837
    %2859 = vmatpush.bf16.msra.mxu0 %v2835
    %2860 = vmatpush.bf16.msra.mxu0 %v2833
    %2861 = vmatpush.bf16.msra.mxu0 %v2831
    %2862 = vmatpush.bf16.msra.mxu0 %v2829
    %2863 = vmatpush.bf16.msra.mxu0 %v2827
    %2864 = vmatpush.bf16.msra.mxu0 %v2825
    %2865 = vmatmul.bf16.gmra.mxu0 %v2769
    %v2866 = vpop.f32.mrf.mxu0
    %v2867 = vadd.f32 %v2773, %v2866
    %v2868 = vpop.f32.mrf.mxu0
    %2869 = vdwg.mxu0
    %2870 = vmatpush.bf16.msra.mxu0 %v2840
    %2871 = vmatpush.bf16.msra.mxu0 %v2838
    %2872 = vmatpush.bf16.msra.mxu0 %v2836
    %2873 = vmatpush.bf16.msra.mxu0 %v2834
    %2874 = vmatpush.bf16.msra.mxu0 %v2832
    %2875 = vmatpush.bf16.msra.mxu0 %v2830
    %2876 = vmatpush.bf16.msra.mxu0 %v2828
    %2877 = vmatpush.bf16.msra.mxu0 %v2826
    %2878 = vmatmul.bf16.gmra.mxu0 %v2769
    %v2879 = vpop.f32.mrf.mxu0
    %v2880 = vadd.f32 %v2774, %v2879
    %v2881 = vpop.f32.mrf.mxu0
    %2882 = vdwg.mxu0
    %v2883 = vmax.f32 %v2867, 0.0
    %v2884 = vmax.f32 %v2880, 0.0
    %v2885 = vld [vmem:[%s3 + $0x2e0] sm:$0xf]
    %v2886 = vld [vmem:[%s3 + $0x2e4] sm:$0xf]
    %v2887 = vld [vmem:[%s3 + $0x2e8] sm:$0xf]
    %v2888 = vld [vmem:[%s3 + $0x2ec] sm:$0xf]
    %v2889 = vld [vmem:[%s3 + $0x2f0] sm:$0xf]
    %v2890 = vld [vmem:[%s3 + $0x2f4] sm:$0xf]
    %v2891 = vld [vmem:[%s3 + $0x2f8] sm:$0xf]
    %v2892 = vld [vmem:[%s3 + $0x2fc] sm:$0xf]
    %v2893 = vld [vmem:[%s3 + $0x300] sm:$0xf]
    %v2894 = vld [vmem:[%s3 + $0x304] sm:$0xf]
    %v2895 = vld [vmem:[%s3 + $0x308] sm:$0xf]
    %v2896 = vld [vmem:[%s3 + $0x30c] sm:$0xf]
    %v2897 = vld [vmem:[%s3 + $0x310] sm:$0xf]
    %v2898 = vld [vmem:[%s3 + $0x314] sm:$0xf]
    %v2899 = vld [vmem:[%s3 + $0x318] sm:$0xf]
    %v2900 = vld [vmem:[%s3 + $0x31c] sm:$0xf]
    %v2901 = vld [vmem:[%s3 + $0x320] sm:$0xf]
    %v2902 = vld [vmem:[%s3 + $0x324] sm:$0xf]
    %v2903 = vld [vmem:[%s3 + $0x328] sm:$0xf]
    %v2904 = vld [vmem:[%s3 + $0x32c] sm:$0xf]
    %v2905 = vld [vmem:[%s3 + $0x330] sm:$0xf]
    %v2906 = vld [vmem:[%s3 + $0x334] sm:$0xf]
    %v2907 = vld [vmem:[%s3 + $0x338] sm:$0xf]
    %v2908 = vld [vmem:[%s3 + $0x33c] sm:$0xf]
    %v2909 = vld [vmem:[%s3 + $0x340] sm:$0xf]
    %v2910 = vld [vmem:[%s3 + $0x344] sm:$0xf]
    %v2911 = vld [vmem:[%s3 + $0x348] sm:$0xf]
    %v2912 = vld [vmem:[%s3 + $0x34c] sm:$0xf]
    %v2913 = vld [vmem:[%s3 + $0x350] sm:$0xf]
    %v2914 = vld [vmem:[%s3 + $0x354] sm:$0xf]
    %v2915 = vld [vmem:[%s3 + $0x358] sm:$0xf]
    %v2916 = vld [vmem:[%s3 + $0x35c] sm:$0xf]
    %v2917 = vpack.c.bf16 %v2883, %v2883
    %v2918 = vpack.c.bf16 %v2884, %v2884
    %v2919 = vld [vmem:[#allocation4 + $0x30] ss:$0 sm:$0xff]
    %v2952 = vunpack.c.l.b16 %v2885
    %v2953 = vunpack.c.l.b16 %v2886
    %v2954 = vunpack.c.l.b16 %v2887
    %v2955 = vunpack.c.l.b16 %v2888
    %v2956 = vunpack.c.l.b16 %v2889
    %v2957 = vunpack.c.l.b16 %v2890
    %v2958 = vunpack.c.l.b16 %v2891
    %v2959 = vunpack.c.l.b16 %v2892
    %v2960 = vunpack.c.l.b16 %v2893
    %v2961 = vunpack.c.l.b16 %v2894
    %v2962 = vunpack.c.l.b16 %v2895
    %v2963 = vunpack.c.l.b16 %v2896
    %v2964 = vunpack.c.l.b16 %v2897
    %v2965 = vunpack.c.l.b16 %v2898
    %v2966 = vunpack.c.l.b16 %v2899
    %v2967 = vunpack.c.l.b16 %v2900
    %v2968 = vunpack.c.l.b16 %v2901
    %v2969 = vunpack.c.l.b16 %v2902
    %v2970 = vunpack.c.l.b16 %v2903
    %v2971 = vunpack.c.l.b16 %v2904
    %v2972 = vunpack.c.l.b16 %v2905
    %v2973 = vunpack.c.l.b16 %v2906
    %v2974 = vunpack.c.l.b16 %v2907
    %v2975 = vunpack.c.l.b16 %v2908
    %v2976 = vunpack.c.l.b16 %v2909
    %v2977 = vunpack.c.l.b16 %v2910
    %v2978 = vunpack.c.l.b16 %v2911
    %v2979 = vunpack.c.l.b16 %v2912
    %v2980 = vunpack.c.l.b16 %v2913
    %v2981 = vunpack.c.l.b16 %v2914
    %v2982 = vunpack.c.l.b16 %v2915
    %v2983 = vunpack.c.l.b16 %v2916
    %v2984 = vpack.c.b16 %v2953, %v2952
    %v2985 = vpack.c.b16 %v2955, %v2954
    %v2986 = vpack.c.b16 %v2957, %v2956
    %v2987 = vpack.c.b16 %v2959, %v2958
    %v2988 = vpack.c.b16 %v2961, %v2960
    %v2989 = vpack.c.b16 %v2963, %v2962
    %v2990 = vpack.c.b16 %v2965, %v2964
    %v2991 = vpack.c.b16 %v2967, %v2966
    %v2992 = vpack.c.b16 %v2969, %v2968
    %v2993 = vpack.c.b16 %v2971, %v2970
    %v2994 = vpack.c.b16 %v2973, %v2972
    %v2995 = vpack.c.b16 %v2975, %v2974
    %v2996 = vpack.c.b16 %v2977, %v2976
    %v2997 = vpack.c.b16 %v2979, %v2978
    %v2998 = vpack.c.b16 %v2981, %v2980
    %v2999 = vpack.c.b16 %v2983, %v2982
    %3016 = vmatpush.bf16.msra.mxu0 %v2991
    %3017 = vmatpush.bf16.msra.mxu0 %v2990
    %3018 = vmatpush.bf16.msra.mxu0 %v2989
    %3019 = vmatpush.bf16.msra.mxu0 %v2988
    %3020 = vmatpush.bf16.msra.mxu0 %v2987
    %3021 = vmatpush.bf16.msra.mxu0 %v2986
    %3022 = vmatpush.bf16.msra.mxu0 %v2985
    %3023 = vmatpush.bf16.msra.mxu0 %v2984
    %3024 = vmatmul.bf16.gmra.mxu0 %v2917
    %v3025 = vpop.f32.mrf.mxu0
    %v3026 = vadd.f32 %v2919, %v3025
    %v3027 = vpop.f32.mrf.mxu0
    %3028 = vdwg.mxu0
    %3029 = vmatpush.bf16.msra.mxu0 %v2999
    %3030 = vmatpush.bf16.msra.mxu0 %v2998
    %3031 = vmatpush.bf16.msra.mxu0 %v2997
    %3032 = vmatpush.bf16.msra.mxu0 %v2996
    %3033 = vmatpush.bf16.msra.mxu0 %v2995
    %3034 = vmatpush.bf16.msra.mxu0 %v2994
    %3035 = vmatpush.bf16.msra.mxu0 %v2993
    %3036 = vmatpush.bf16.msra.mxu0 %v2992
    %3037 = vmatmul.bf16.gmra.mxu0 %v2918
    %v3038 = vpop.f32.mrf.mxu0
    %v3039 = vadd.f32 %v3026, %v3038
    %v3040 = vpop.f32.mrf.mxu0
    %3041 = vdwg.mxu0
    %v3042 = vadd.f32 %v2752, %v3039
    %3043 = vadd.xlane.f32.xlu0 %v3042
    %v3044 = vpop.xlane.xlu0 %3043
    %v3045 = vmul.f32 %v3044, %v2730
    %v3046 = vsub.f32 %v3042, %v3045
    %v3047 = vmul.f32 %v3046, %v3046
    %3048 = vadd.xlane.f32.xlu0 %v3047
    %v3049 = vpop.xlane.xlu0 %3048
    %v3050 = vmul.f32 %v3049, %v2730
    %v3051 = vadd.f32 %v3050, 1e-05
    %v3052 = vrsqrt.pop %v3051
    %v3053 = vmul.f32 %v3052, %v3051
    %v3054 = vmul.f32 %v3053, %v3052
    %v3055 = vmul.f32 0.5, %v3054
    %v3056 = vsub.f32 1.5, %v3055
    %v3057 = vmul.f32 %v3052, %v3056
    %vm3058 = vweird.f32 %v3051
    %vm3059 = vweird.f32 %v3052
    %vm3060 = vmor %vm3058, %vm3059
    %v3061 = vsel %vm3060, %v3052, %v3057
    %v3062 = vmul.f32 %v3046, %v3061
    %v3063 = vld [vmem:[#allocation4 + $0x36] ss:$0 sm:$0xff]
    %v3064 = vmul.f32 %v3062, %v3063
    %v3065 = vld [vmem:[#allocation4 + $0x48] ss:$0 sm:$0xff]
    %v3066 = vadd.f32 %v3064, %v3065
    %v3067 = vld [vmem:[%s5 + $0x180] sm:$0xff]
    %v3068 = vld [vmem:[%s5 + $0x188] sm:$0xf]
    %v3069 = vld [vmem:[%s5 + $0x18c] sm:$0xff]
    %v3070 = vld [vmem:[%s5 + $0x194] sm:$0xf]
    %v3071 = vld [vmem:[%s5 + $0x198] sm:$0xff]
    %v3072 = vld [vmem:[%s5 + $0x1a0] sm:$0xf]
    %v3073 = vld [vmem:[%s5 + $0x1a4] sm:$0xff]
    %v3074 = vld [vmem:[%s5 + $0x1ac] sm:$0xf]
    %v3075 = vld [vmem:[%s5 + $0x1b0] sm:$0xff]
    %v3076 = vld [vmem:[%s5 + $0x1b8] sm:$0xf]
    %v3077 = vld [vmem:[%s5 + $0x1bc] sm:$0xff]
    %v3078 = vld [vmem:[%s5 + $0x1c4] sm:$0xf]
    %v3079 = vld [vmem:[%s5 + $0x1c8] sm:$0xff]
    %v3080 = vld [vmem:[%s5 + $0x1d0] sm:$0xf]
    %v3081 = vld [vmem:[%s5 + $0x1d4] sm:$0xff]
    %v3082 = vld [vmem:[%s5 + $0x1dc] sm:$0xf]
    %v3083 = vld [vmem:[%s5 + $0x1e0] sm:$0xff]
    %v3084 = vld [vmem:[%s5 + $0x1e8] sm:$0xf]
    %v3085 = vld [vmem:[%s5 + $0x1ec] sm:$0xff]
    %v3086 = vld [vmem:[%s5 + $0x1f4] sm:$0xf]
    %v3087 = vld [vmem:[%s5 + $0x1f8] sm:$0xff]
    %v3088 = vld [vmem:[%s5 + $0x200] sm:$0xf]
    %v3089 = vld [vmem:[%s5 + $0x204] sm:$0xff]
    %v3090 = vld [vmem:[%s5 + $0x20c] sm:$0xf]
    %v3091 = vld [vmem:[%s5 + $0x210] sm:$0xff]
    %v3092 = vld [vmem:[%s5 + $0x218] sm:$0xf]
    %v3093 = vld [vmem:[%s5 + $0x21c] sm:$0xff]
    %v3094 = vld [vmem:[%s5 + $0x224] sm:$0xf]
    %v3095 = vld [vmem:[%s5 + $0x228] sm:$0xff]
    %v3096 = vld [vmem:[%s5 + $0x230] sm:$0xf]
    %v3097 = vld [vmem:[%s5 + $0x234] sm:$0xff]
    %v3098 = vld [vmem:[%s5 + $0x23c] sm:$0xf]
    %v3099 = vpack.c.bf16 %v3066, %v3066
    %s3100 = scalar_lea.vmem [#allocation4], 27
    %v3101 = vld [vmem:[%s3100] ss:$8 sm:$0x7]
    %v3103 = vperm.slane %v3101, 0
    %v3104 = vperm.slane %v3101, 1
    %v3105 = vperm.slane %v3101, 2
    %v3141 = vunpack.c.l.b16 %v3067
    %v3142 = vunpack.c.h.b16 %v3067
    %v3143 = vunpack.c.l.b16 %v3068
    %v3144 = vunpack.c.l.b16 %v3069
    %v3145 = vunpack.c.h.b16 %v3069
    %v3146 = vunpack.c.l.b16 %v3070
    %v3147 = vunpack.c.l.b16 %v3071
    %v3148 = vunpack.c.h.b16 %v3071
    %v3149 = vunpack.c.l.b16 %v3072
    %v3150 = vunpack.c.l.b16 %v3073
    %v3151 = vunpack.c.h.b16 %v3073
    %v3152 = vunpack.c.l.b16 %v3074
    %v3153 = vunpack.c.l.b16 %v3075
    %v3154 = vunpack.c.h.b16 %v3075
    %v3155 = vunpack.c.l.b16 %v3076
    %v3156 = vunpack.c.l.b16 %v3077
    %v3157 = vunpack.c.h.b16 %v3077
    %v3158 = vunpack.c.l.b16 %v3078
    %v3159 = vunpack.c.l.b16 %v3079
    %v3160 = vunpack.c.h.b16 %v3079
    %v3161 = vunpack.c.l.b16 %v3080
    %v3162 = vunpack.c.l.b16 %v3081
    %v3163 = vunpack.c.h.b16 %v3081
    %v3164 = vunpack.c.l.b16 %v3082
    %v3165 = vunpack.c.l.b16 %v3083
    %v3166 = vunpack.c.h.b16 %v3083
    %v3167 = vunpack.c.l.b16 %v3084
    %v3168 = vunpack.c.l.b16 %v3085
    %v3169 = vunpack.c.h.b16 %v3085
    %v3170 = vunpack.c.l.b16 %v3086
    %v3171 = vunpack.c.l.b16 %v3087
    %v3172 = vunpack.c.h.b16 %v3087
    %v3173 = vunpack.c.l.b16 %v3088
    %v3174 = vunpack.c.l.b16 %v3089
    %v3175 = vunpack.c.h.b16 %v3089
    %v3176 = vunpack.c.l.b16 %v3090
    %v3177 = vunpack.c.l.b16 %v3091
    %v3178 = vunpack.c.h.b16 %v3091
    %v3179 = vunpack.c.l.b16 %v3092
    %v3180 = vunpack.c.l.b16 %v3093
    %v3181 = vunpack.c.h.b16 %v3093
    %v3182 = vunpack.c.l.b16 %v3094
    %v3183 = vunpack.c.l.b16 %v3095
    %v3184 = vunpack.c.h.b16 %v3095
    %v3185 = vunpack.c.l.b16 %v3096
    %v3186 = vunpack.c.l.b16 %v3097
    %v3187 = vunpack.c.h.b16 %v3097
    %v3188 = vunpack.c.l.b16 %v3098
    %v3189 = vpack.c.b16 %v3144, %v3141
    %v3190 = vpack.c.b16 %v3145, %v3142
    %v3191 = vpack.c.b16 %v3146, %v3143
    %v3192 = vpack.c.b16 %v3150, %v3147
    %v3193 = vpack.c.b16 %v3151, %v3148
    %v3194 = vpack.c.b16 %v3152, %v3149
    %v3195 = vpack.c.b16 %v3156, %v3153
    %v3196 = vpack.c.b16 %v3157, %v3154
    %v3197 = vpack.c.b16 %v3158, %v3155
    %v3198 = vpack.c.b16 %v3162, %v3159
    %v3199 = vpack.c.b16 %v3163, %v3160
    %v3200 = vpack.c.b16 %v3164, %v3161
    %v3201 = vpack.c.b16 %v3168, %v3165
    %v3202 = vpack.c.b16 %v3169, %v3166
    %v3203 = vpack.c.b16 %v3170, %v3167
    %v3204 = vpack.c.b16 %v3174, %v3171
    %v3205 = vpack.c.b16 %v3175, %v3172
    %v3206 = vpack.c.b16 %v3176, %v3173
    %v3207 = vpack.c.b16 %v3180, %v3177
    %v3208 = vpack.c.b16 %v3181, %v3178
    %v3209 = vpack.c.b16 %v3182, %v3179
    %v3210 = vpack.c.b16 %v3186, %v3183
    %v3211 = vpack.c.b16 %v3187, %v3184
    %v3212 = vpack.c.b16 %v3188, %v3185
    %3237 = vmatpush.bf16.msra.mxu0 %v3210
    %3238 = vmatpush.bf16.msra.mxu0 %v3207
    %3239 = vmatpush.bf16.msra.mxu0 %v3204
    %3240 = vmatpush.bf16.msra.mxu0 %v3201
    %3241 = vmatpush.bf16.msra.mxu0 %v3198
    %3242 = vmatpush.bf16.msra.mxu0 %v3195
    %3243 = vmatpush.bf16.msra.mxu0 %v3192
    %3244 = vmatpush.bf16.msra.mxu0 %v3189
    %3245 = vmatmul.bf16.gmra.mxu0 %v3099
    %v3246 = vpop.f32.mrf.mxu0
    %v3247 = vadd.f32 %v3103, %v3246
    %v3248 = vpop.f32.mrf.mxu0
    %3249 = vdwg.mxu0
    %3250 = vmatpush.bf16.msra.mxu0 %v3211
    %3251 = vmatpush.bf16.msra.mxu0 %v3208
    %3252 = vmatpush.bf16.msra.mxu0 %v3205
    %3253 = vmatpush.bf16.msra.mxu0 %v3202
    %3254 = vmatpush.bf16.msra.mxu0 %v3199
    %3255 = vmatpush.bf16.msra.mxu0 %v3196
    %3256 = vmatpush.bf16.msra.mxu0 %v3193
    %3257 = vmatpush.bf16.msra.mxu0 %v3190
    %3258 = vmatmul.bf16.gmra.mxu0 %v3099
    %v3259 = vpop.f32.mrf.mxu0
    %v3260 = vadd.f32 %v3104, %v3259
    %v3261 = vpop.f32.mrf.mxu0
    %3262 = vdwg.mxu0
    %3263 = vmatpush.bf16.msra.mxu0 %v3212
    %3264 = vmatpush.bf16.msra.mxu0 %v3209
    %3265 = vmatpush.bf16.msra.mxu0 %v3206
    %3266 = vmatpush.bf16.msra.mxu0 %v3203
    %3267 = vmatpush.bf16.msra.mxu0 %v3200
    %3268 = vmatpush.bf16.msra.mxu0 %v3197
    %3269 = vmatpush.bf16.msra.mxu0 %v3194
    %3270 = vmatpush.bf16.msra.mxu0 %v3191
    %3271 = vmatmul.bf16.gmra.mxu0 %v3099
    %v3272 = vpop.f32.mrf.mxu0
    %v3273 = vadd.f32 %v3105, %v3272
    %v3274 = vpop.f32.mrf.mxu0
    %3275 = vdwg.mxu0
    %v3276 = vmul.f32 %v3247, 0.17677669
    %v3278 = vrot.slane %v3276, 4
    %v3281 = vrot.slane %v3260, 4
    %v3283 = vpack.c.bf16 %v3276, %v3276
    %v3284 = vpack.c.bf16 %v3278, %v3278
    %v3285 = vpack.c.bf16 %v3260, %v3260
    %v3286 = vpack.c.bf16 %v3281, %v3281
    %v3287 = vld [vmem:[%s3 + $0x2a0] sm:$0xf]
    %v3288 = vld [vmem:[%s3 + $0x2a4] sm:$0xf]
    %v3289 = vld [vmem:[%s3 + $0x2a8] sm:$0xf]
    %v3290 = vld [vmem:[%s3 + $0x2ac] sm:$0xf]
    %v3291 = vpack.c.bf16 %v3273, %v3273
    %v3296 = vunpack.c.l.b16 %v3287
    %v3297 = vunpack.c.l.b16 %v3288
    %v3298 = vunpack.c.l.b16 %v3289
    %v3299 = vunpack.c.l.b16 %v3290
    %v3300 = vpack.c.b16 %v3297, %v3296
    %v3301 = vpack.c.b16 %v3299, %v3298
    %v3305 = vsel %vm803, %v3291, 0
    %3307 = vmatpush.bf16.msra.mxu0 0
    %3308 = vmatpush.bf16.msra.mxu0 0
    %3309 = vmatpush.bf16.msra.mxu0 0
    %3310 = vmatpush.bf16.msra.mxu0 0
    %3311 = vmatpush.bf16.msra.mxu0 0
    %3312 = vmatpush.bf16.msra.mxu0 0
    %3313 = vmatpush.bf16.msra.mxu0 %v3301
    %3314 = vmatpush.bf16.msra.mxu0 %v3300
    %3315 = vmatmul.bf16.gmra.mxu0 %v3305
    %v3316 = vpop.f32.mrf.mxu0
    %v3317 = vadd.f32 0.0, %v3316
    %v3318 = vpop.f32.mrf.mxu0
    %3319 = vdwg.mxu0
    %v3321 = vrot.slane %v3317, 4
    %v3323 = vpack.c.bf16 %v3317, %v3317
    %v3324 = vpack.c.bf16 %v3321, %v3321
    %v3326 = vsel %vm803, %v3283, 0
    %v3329 = vsel %vm803, %v3285, 0
    %3331 = vmatpush.bf16.xpose.msra.mxu0 0
    %3332 = vmatpush.bf16.xpose.msra.mxu0 0
    %3333 = vmatpush.bf16.xpose.msra.mxu0 0
    %3334 = vmatpush.bf16.xpose.msra.mxu0 0
    %3335 = vmatpush.bf16.xpose.msra.mxu0 0
    %3336 = vmatpush.bf16.xpose.msra.mxu0 0
    %3337 = vmatpush.bf16.xpose.msra.mxu0 0
    %3338 = vmatpush.bf16.xpose.msra.mxu0 %v3329
    %3339 = vmatmul.bf16.gmra.mxu0 %v3326
    %v3340 = vpop.f32.mrf.mxu0
    %v3341 = vadd.f32 0.0, %v3340
    %v3342 = vpop.f32.mrf.mxu0
    %3343 = vdwg.mxu0
    %v3345 = vsel %vm803, %v3284, 0
    %v3348 = vsel %vm803, %v3286, 0
    %3350 = vmatpush.bf16.xpose.msra.mxu0 0
    %3351 = vmatpush.bf16.xpose.msra.mxu0 0
    %3352 = vmatpush.bf16.xpose.msra.mxu0 0
    %3353 = vmatpush.bf16.xpose.msra.mxu0 0
    %3354 = vmatpush.bf16.xpose.msra.mxu0 0
    %3355 = vmatpush.bf16.xpose.msra.mxu0 0
    %3356 = vmatpush.bf16.xpose.msra.mxu0 0
    %3357 = vmatpush.bf16.xpose.msra.mxu0 %v3348
    %3358 = vmatmul.bf16.gmra.mxu0 %v3345
    %v3359 = vpop.f32.mrf.mxu0
    %v3360 = vadd.f32 0.0, %v3359
    %v3361 = vpop.f32.mrf.mxu0
    %3362 = vdwg.mxu0
    %v3363 = vsel %vm2185, %v3341, -inf
    %3364 = vmax.xlane.f32.xlu0 %v3363
    %v3365 = vpop.xlane.xlu0 %3364
    %v3366 = vsel %vm2185, %v3360, -inf
    %3367 = vmax.xlane.f32.xlu0 %v3366
    %v3368 = vpop.xlane.xlu0 %3367
    %v3369 = vsub.f32 %v3341, %v3365
    %v3370 = vsub.f32 %v3360, %v3368
    %v3371 = vmul.f32 %v3369, 1.442695
    %v3372 = vpow.pop %v3371
    %v3373 = vmul.f32 %v3370, 1.442695
    %v3374 = vpow.pop %v3373
    %v3375 = vsel %vm2185, %v3372, 0.0
    %3376 = vadd.xlane.f32.xlu0 %v3375
    %v3377 = vpop.xlane.xlu0 %3376
    %v3378 = vsel %vm2185, %v3374, 0.0
    %3379 = vadd.xlane.f32.xlu0 %v3378
    %v3380 = vpop.xlane.xlu0 %3379
    %v3381 = vrcp.pop %v3377
    %v3382 = vrcp.pop %v3380
    %v3383 = vmul.f32 %v3372, %v3381
    %v3384 = vmul.f32 %v3374, %v3382
    %v3385 = vpack.c.bf16 %v3383, %v3383
    %v3386 = vpack.c.bf16 %v3384, %v3384
    %v3387 = vld [vmem:[%s3 + $0x2b0] sm:$0xf]
    %v3388 = vld [vmem:[%s3 + $0x2b4] sm:$0xf]
    %v3389 = vld [vmem:[%s3 + $0x2b8] sm:$0xf]
    %v3390 = vld [vmem:[%s3 + $0x2bc] sm:$0xf]
    %3392 = vrot.lane.b32.xlu0 %v3291, 96
    %v3393 = vpop.permute.xlu0 %3392
    %v3398 = vunpack.c.l.b16 %v3387
    %v3399 = vunpack.c.l.b16 %v3388
    %v3400 = vunpack.c.l.b16 %v3389
    %v3401 = vunpack.c.l.b16 %v3390
    %v3402 = vpack.c.b16 %v3399, %v3398
    %v3403 = vpack.c.b16 %v3401, %v3400
    %v3407 = vsel %vm803, %v3393, 0
    %3409 = vmatpush.bf16.msra.mxu0 0
    %3410 = vmatpush.bf16.msra.mxu0 0
    %3411 = vmatpush.bf16.msra.mxu0 0
    %3412 = vmatpush.bf16.msra.mxu0 0
    %3413 = vmatpush.bf16.msra.mxu0 0
    %3414 = vmatpush.bf16.msra.mxu0 0
    %3415 = vmatpush.bf16.msra.mxu0 %v3403
    %3416 = vmatpush.bf16.msra.mxu0 %v3402
    %3417 = vmatmul.bf16.gmra.mxu0 %v3407
    %v3418 = vpop.f32.mrf.mxu0
    %v3419 = vadd.f32 0.0, %v3418
    %v3420 = vpop.f32.mrf.mxu0
    %3421 = vdwg.mxu0
    %v3423 = vrot.slane %v3419, 4
    %v3425 = vpack.c.bf16 %v3419, %v3419
    %v3426 = vpack.c.bf16 %v3423, %v3423
    %v3428 = vunpack.c.l.b16 %v3283
    %v3429 = vpack.c.b16 %v3428, %v3428
    %3430 = vrot.lane.b32.xlu0 %v3429, 96
    %v3431 = vpop.permute.xlu0 %3430
    %v3433 = vunpack.c.l.b16 %v3285
    %v3434 = vpack.c.b16 %v3433, %v3433
    %3435 = vrot.lane.b32.xlu0 %v3434, 96
    %v3436 = vpop.permute.xlu0 %3435
    %v3438 = vsel %vm803, %v3431, 0
    %v3441 = vsel %vm803, %v3436, 0
    %3443 = vmatpush.bf16.xpose.msra.mxu0 0
    %3444 = vmatpush.bf16.xpose.msra.mxu0 0
    %3445 = vmatpush.bf16.xpose.msra.mxu0 0
    %3446 = vmatpush.bf16.xpose.msra.mxu0 0
    %3447 = vmatpush.bf16.xpose.msra.mxu0 0
    %3448 = vmatpush.bf16.xpose.msra.mxu0 0
    %3449 = vmatpush.bf16.xpose.msra.mxu0 0
    %3450 = vmatpush.bf16.xpose.msra.mxu0 %v3441
    %3451 = vmatmul.bf16.gmra.mxu0 %v3438
    %v3452 = vpop.f32.mrf.mxu0
    %v3453 = vadd.f32 0.0, %v3452
    %v3454 = vpop.f32.mrf.mxu0
    %3455 = vdwg.mxu0
    %v3457 = vunpack.c.l.b16 %v3284
    %v3458 = vpack.c.b16 %v3457, %v3457
    %3459 = vrot.lane.b32.xlu0 %v3458, 96
    %v3460 = vpop.permute.xlu0 %3459
    %v3462 = vunpack.c.l.b16 %v3286
    %v3463 = vpack.c.b16 %v3462, %v3462
    %3464 = vrot.lane.b32.xlu0 %v3463, 96
    %v3465 = vpop.permute.xlu0 %3464
    %v3467 = vsel %vm803, %v3460, 0
    %v3470 = vsel %vm803, %v3465, 0
    %3472 = vmatpush.bf16.xpose.msra.mxu0 0
    %3473 = vmatpush.bf16.xpose.msra.mxu0 0
    %3474 = vmatpush.bf16.xpose.msra.mxu0 0
    %3475 = vmatpush.bf16.xpose.msra.mxu0 0
    %3476 = vmatpush.bf16.xpose.msra.mxu0 0
    %3477 = vmatpush.bf16.xpose.msra.mxu0 0
    %3478 = vmatpush.bf16.xpose.msra.mxu0 0
    %3479 = vmatpush.bf16.xpose.msra.mxu0 %v3470
    %3480 = vmatmul.bf16.gmra.mxu0 %v3467
    %v3481 = vpop.f32.mrf.mxu0
    %v3482 = vadd.f32 0.0, %v3481
    %v3483 = vpop.f32.mrf.mxu0
    %3484 = vdwg.mxu0
    %v3485 = vsel %vm2185, %v3453, -inf
    %3486 = vmax.xlane.f32.xlu0 %v3485
    %v3487 = vpop.xlane.xlu0 %3486
    %v3488 = vsel %vm2185, %v3482, -inf
    %3489 = vmax.xlane.f32.xlu0 %v3488
    %v3490 = vpop.xlane.xlu0 %3489
    %v3491 = vsub.f32 %v3453, %v3487
    %v3492 = vsub.f32 %v3482, %v3490
    %v3493 = vmul.f32 %v3491, 1.442695
    %v3494 = vpow.pop %v3493
    %v3495 = vmul.f32 %v3492, 1.442695
    %v3496 = vpow.pop %v3495
    %v3497 = vsel %vm2185, %v3494, 0.0
    %3498 = vadd.xlane.f32.xlu0 %v3497
    %v3499 = vpop.xlane.xlu0 %3498
    %v3500 = vsel %vm2185, %v3496, 0.0
    %3501 = vadd.xlane.f32.xlu0 %v3500
    %v3502 = vpop.xlane.xlu0 %3501
    %v3503 = vrcp.pop %v3499
    %v3504 = vrcp.pop %v3502
    %v3505 = vmul.f32 %v3494, %v3503
    %v3506 = vmul.f32 %v3496, %v3504
    %v3507 = vpack.c.bf16 %v3505, %v3505
    %v3508 = vpack.c.bf16 %v3506, %v3506
    %v3510 = vsel %vm2332, %v3507, 0
    %v3513 = vsel %vm2336, %v3425, 0
    %3515 = vmatpush.bf16.msra.mxu0 0
    %3516 = vmatpush.bf16.msra.mxu0 0
    %3517 = vmatpush.bf16.msra.mxu0 0
    %3518 = vmatpush.bf16.msra.mxu0 0
    %3519 = vmatpush.bf16.msra.mxu0 0
    %3520 = vmatpush.bf16.msra.mxu0 0
    %3521 = vmatpush.bf16.msra.mxu0 0
    %3522 = vmatpush.bf16.msra.mxu0 %v3513
    %3523 = vmatmul.bf16.gmra.mxu0 %v3510
    %v3524 = vpop.f32.mrf.mxu0
    %v3525 = vadd.f32 0.0, %v3524
    %v3526 = vpop.f32.mrf.mxu0
    %3527 = vdwg.mxu0
    %v3529 = vsel %vm2332, %v3508, 0
    %v3532 = vsel %vm2336, %v3426, 0
    %3534 = vmatpush.bf16.msra.mxu0 0
    %3535 = vmatpush.bf16.msra.mxu0 0
    %3536 = vmatpush.bf16.msra.mxu0 0
    %3537 = vmatpush.bf16.msra.mxu0 0
    %3538 = vmatpush.bf16.msra.mxu0 0
    %3539 = vmatpush.bf16.msra.mxu0 0
    %3540 = vmatpush.bf16.msra.mxu0 0
    %3541 = vmatpush.bf16.msra.mxu0 %v3532
    %3542 = vmatmul.bf16.gmra.mxu0 %v3529
    %v3543 = vpop.f32.mrf.mxu0
    %v3544 = vadd.f32 0.0, %v3543
    %v3545 = vpop.f32.mrf.mxu0
    %3546 = vdwg.mxu0
    %v3548 = vsel %vm2332, %v3385, 0
    %v3551 = vsel %vm2336, %v3323, 0
    %3553 = vmatpush.bf16.msra.mxu0 0
    %3554 = vmatpush.bf16.msra.mxu0 0
    %3555 = vmatpush.bf16.msra.mxu0 0
    %3556 = vmatpush.bf16.msra.mxu0 0
    %3557 = vmatpush.bf16.msra.mxu0 0
    %3558 = vmatpush.bf16.msra.mxu0 0
    %3559 = vmatpush.bf16.msra.mxu0 0
    %3560 = vmatpush.bf16.msra.mxu0 %v3551
    %3561 = vmatmul.bf16.gmra.mxu0 %v3548
    %v3562 = vpop.f32.mrf.mxu0
    %v3563 = vadd.f32 %v3525, %v3562
    %v3564 = vpop.f32.mrf.mxu0
    %3565 = vdwg.mxu0
    %v3567 = vsel %vm2332, %v3386, 0
    %v3570 = vsel %vm2336, %v3324, 0
    %3572 = vmatpush.bf16.msra.mxu0 0
    %3573 = vmatpush.bf16.msra.mxu0 0
    %3574 = vmatpush.bf16.msra.mxu0 0
    %3575 = vmatpush.bf16.msra.mxu0 0
    %3576 = vmatpush.bf16.msra.mxu0 0
    %3577 = vmatpush.bf16.msra.mxu0 0
    %3578 = vmatpush.bf16.msra.mxu0 0
    %3579 = vmatpush.bf16.msra.mxu0 %v3570
    %3580 = vmatmul.bf16.gmra.mxu0 %v3567
    %v3581 = vpop.f32.mrf.mxu0
    %v3582 = vadd.f32 %v3544, %v3581
    %v3583 = vpop.f32.mrf.mxu0
    %3584 = vdwg.mxu0
    %v3585 = vld [vmem:[%s3 + $0x2c0] sm:$0xf]
    %v3586 = vld [vmem:[%s3 + $0x2c4] sm:$0xf]
    %v3587 = vld [vmem:[%s3 + $0x2c8] sm:$0xf]
    %v3588 = vld [vmem:[%s3 + $0x2cc] sm:$0xf]
    %3589 = vrot.lane.b32.xlu0 %v3291, 64
    %v3590 = vpop.permute.xlu0 %3589
    %v3595 = vunpack.c.l.b16 %v3585
    %v3596 = vunpack.c.l.b16 %v3586
    %v3597 = vunpack.c.l.b16 %v3587
    %v3598 = vunpack.c.l.b16 %v3588
    %v3599 = vpack.c.b16 %v3596, %v3595
    %v3600 = vpack.c.b16 %v3598, %v3597
    %v3604 = vsel %vm803, %v3590, 0
    %3606 = vmatpush.bf16.msra.mxu0 0
    %3607 = vmatpush.bf16.msra.mxu0 0
    %3608 = vmatpush.bf16.msra.mxu0 0
    %3609 = vmatpush.bf16.msra.mxu0 0
    %3610 = vmatpush.bf16.msra.mxu0 0
    %3611 = vmatpush.bf16.msra.mxu0 0
    %3612 = vmatpush.bf16.msra.mxu0 %v3600
    %3613 = vmatpush.bf16.msra.mxu0 %v3599
    %3614 = vmatmul.bf16.gmra.mxu0 %v3604
    %v3615 = vpop.f32.mrf.mxu0
    %v3616 = vadd.f32 0.0, %v3615
    %v3617 = vpop.f32.mrf.mxu0
    %3618 = vdwg.mxu0
    %v3620 = vrot.slane %v3616, 4
    %v3622 = vpack.c.bf16 %v3616, %v3616
    %v3623 = vpack.c.bf16 %v3620, %v3620
    %3624 = vrot.lane.b32.xlu0 %v3429, 64
    %v3625 = vpop.permute.xlu0 %3624
    %3626 = vrot.lane.b32.xlu0 %v3434, 64
    %v3627 = vpop.permute.xlu0 %3626
    %v3629 = vsel %vm803, %v3625, 0
    %v3632 = vsel %vm803, %v3627, 0
    %3634 = vmatpush.bf16.xpose.msra.mxu0 0
    %3635 = vmatpush.bf16.xpose.msra.mxu0 0
    %3636 = vmatpush.bf16.xpose.msra.mxu0 0
    %3637 = vmatpush.bf16.xpose.msra.mxu0 0
    %3638 = vmatpush.bf16.xpose.msra.mxu0 0
    %3639 = vmatpush.bf16.xpose.msra.mxu0 0
    %3640 = vmatpush.bf16.xpose.msra.mxu0 0
    %3641 = vmatpush.bf16.xpose.msra.mxu0 %v3632
    %3642 = vmatmul.bf16.gmra.mxu0 %v3629
    %v3643 = vpop.f32.mrf.mxu0
    %v3644 = vadd.f32 0.0, %v3643
    %v3645 = vpop.f32.mrf.mxu0
    %3646 = vdwg.mxu0
    %3647 = vrot.lane.b32.xlu0 %v3458, 64
    %v3648 = vpop.permute.xlu0 %3647
    %3649 = vrot.lane.b32.xlu0 %v3463, 64
    %v3650 = vpop.permute.xlu0 %3649
    %v3652 = vsel %vm803, %v3648, 0
    %v3655 = vsel %vm803, %v3650, 0
    %3657 = vmatpush.bf16.xpose.msra.mxu0 0
    %3658 = vmatpush.bf16.xpose.msra.mxu0 0
    %3659 = vmatpush.bf16.xpose.msra.mxu0 0
    %3660 = vmatpush.bf16.xpose.msra.mxu0 0
    %3661 = vmatpush.bf16.xpose.msra.mxu0 0
    %3662 = vmatpush.bf16.xpose.msra.mxu0 0
    %3663 = vmatpush.bf16.xpose.msra.mxu0 0
    %3664 = vmatpush.bf16.xpose.msra.mxu0 %v3655
    %3665 = vmatmul.bf16.gmra.mxu0 %v3652
    %v3666 = vpop.f32.mrf.mxu0
    %v3667 = vadd.f32 0.0, %v3666
    %v3668 = vpop.f32.mrf.mxu0
    %3669 = vdwg.mxu0
    %v3670 = vsel %vm2185, %v3644, -inf
    %3671 = vmax.xlane.f32.xlu0 %v3670
    %v3672 = vpop.xlane.xlu0 %3671
    %v3673 = vsel %vm2185, %v3667, -inf
    %3674 = vmax.xlane.f32.xlu0 %v3673
    %v3675 = vpop.xlane.xlu0 %3674
    %v3676 = vsub.f32 %v3644, %v3672
    %v3677 = vsub.f32 %v3667, %v3675
    %v3678 = vmul.f32 %v3676, 1.442695
    %v3679 = vpow.pop %v3678
    %v3680 = vmul.f32 %v3677, 1.442695
    %v3681 = vpow.pop %v3680
    %v3682 = vsel %vm2185, %v3679, 0.0
    %3683 = vadd.xlane.f32.xlu0 %v3682
    %v3684 = vpop.xlane.xlu0 %3683
    %v3685 = vsel %vm2185, %v3681, 0.0
    %3686 = vadd.xlane.f32.xlu0 %v3685
    %v3687 = vpop.xlane.xlu0 %3686
    %v3688 = vrcp.pop %v3684
    %v3689 = vrcp.pop %v3687
    %v3690 = vmul.f32 %v3679, %v3688
    %v3691 = vmul.f32 %v3681, %v3689
    %v3692 = vpack.c.bf16 %v3690, %v3690
    %v3693 = vpack.c.bf16 %v3691, %v3691
    %v3695 = vsel %vm2332, %v3692, 0
    %v3698 = vsel %vm2336, %v3622, 0
    %3700 = vmatpush.bf16.msra.mxu0 0
    %3701 = vmatpush.bf16.msra.mxu0 0
    %3702 = vmatpush.bf16.msra.mxu0 0
    %3703 = vmatpush.bf16.msra.mxu0 0
    %3704 = vmatpush.bf16.msra.mxu0 0
    %3705 = vmatpush.bf16.msra.mxu0 0
    %3706 = vmatpush.bf16.msra.mxu0 0
    %3707 = vmatpush.bf16.msra.mxu0 %v3698
    %3708 = vmatmul.bf16.gmra.mxu0 %v3695
    %v3709 = vpop.f32.mrf.mxu0
    %v3710 = vadd.f32 0.0, %v3709
    %v3711 = vpop.f32.mrf.mxu0
    %3712 = vdwg.mxu0
    %v3714 = vsel %vm2332, %v3693, 0
    %v3717 = vsel %vm2336, %v3623, 0
    %3719 = vmatpush.bf16.msra.mxu0 0
    %3720 = vmatpush.bf16.msra.mxu0 0
    %3721 = vmatpush.bf16.msra.mxu0 0
    %3722 = vmatpush.bf16.msra.mxu0 0
    %3723 = vmatpush.bf16.msra.mxu0 0
    %3724 = vmatpush.bf16.msra.mxu0 0
    %3725 = vmatpush.bf16.msra.mxu0 0
    %3726 = vmatpush.bf16.msra.mxu0 %v3717
    %3727 = vmatmul.bf16.gmra.mxu0 %v3714
    %v3728 = vpop.f32.mrf.mxu0
    %v3729 = vadd.f32 0.0, %v3728
    %v3730 = vpop.f32.mrf.mxu0
    %3731 = vdwg.mxu0
    %v3732 = vadd.f32 %v3563, %v3710
    %v3733 = vadd.f32 %v3582, %v3729
    %v3734 = vld [vmem:[%s3 + $0x2d0] sm:$0xf]
    %v3735 = vld [vmem:[%s3 + $0x2d4] sm:$0xf]
    %v3736 = vld [vmem:[%s3 + $0x2d8] sm:$0xf]
    %v3737 = vld [vmem:[%s3 + $0x2dc] sm:$0xf]
    %3738 = vrot.lane.b32.xlu0 %v3291, 32
    %v3739 = vpop.permute.xlu0 %3738
    %v3744 = vunpack.c.l.b16 %v3734
    %v3745 = vunpack.c.l.b16 %v3735
    %v3746 = vunpack.c.l.b16 %v3736
    %v3747 = vunpack.c.l.b16 %v3737
    %v3748 = vpack.c.b16 %v3745, %v3744
    %v3749 = vpack.c.b16 %v3747, %v3746
    %v3753 = vsel %vm803, %v3739, 0
    %3755 = vmatpush.bf16.msra.mxu0 0
    %3756 = vmatpush.bf16.msra.mxu0 0
    %3757 = vmatpush.bf16.msra.mxu0 0
    %3758 = vmatpush.bf16.msra.mxu0 0
    %3759 = vmatpush.bf16.msra.mxu0 0
    %3760 = vmatpush.bf16.msra.mxu0 0
    %3761 = vmatpush.bf16.msra.mxu0 %v3749
    %3762 = vmatpush.bf16.msra.mxu0 %v3748
    %3763 = vmatmul.bf16.gmra.mxu0 %v3753
    %v3764 = vpop.f32.mrf.mxu0
    %v3765 = vadd.f32 0.0, %v3764
    %v3766 = vpop.f32.mrf.mxu0
    %3767 = vdwg.mxu0
    %v3769 = vrot.slane %v3765, 4
    %v3771 = vpack.c.bf16 %v3765, %v3765
    %v3772 = vpack.c.bf16 %v3769, %v3769
    %3773 = vrot.lane.b32.xlu0 %v3429, 32
    %v3774 = vpop.permute.xlu0 %3773
    %3775 = vrot.lane.b32.xlu0 %v3434, 32
    %v3776 = vpop.permute.xlu0 %3775
    %v3778 = vsel %vm803, %v3774, 0
    %v3781 = vsel %vm803, %v3776, 0
    %3783 = vmatpush.bf16.xpose.msra.mxu0 0
    %3784 = vmatpush.bf16.xpose.msra.mxu0 0
    %3785 = vmatpush.bf16.xpose.msra.mxu0 0
    %3786 = vmatpush.bf16.xpose.msra.mxu0 0
    %3787 = vmatpush.bf16.xpose.msra.mxu0 0
    %3788 = vmatpush.bf16.xpose.msra.mxu0 0
    %3789 = vmatpush.bf16.xpose.msra.mxu0 0
    %3790 = vmatpush.bf16.xpose.msra.mxu0 %v3781
    %3791 = vmatmul.bf16.gmra.mxu0 %v3778
    %v3792 = vpop.f32.mrf.mxu0
    %v3793 = vadd.f32 0.0, %v3792
    %v3794 = vpop.f32.mrf.mxu0
    %3795 = vdwg.mxu0
    %3796 = vrot.lane.b32.xlu0 %v3458, 32
    %v3797 = vpop.permute.xlu0 %3796
    %3798 = vrot.lane.b32.xlu0 %v3463, 32
    %v3799 = vpop.permute.xlu0 %3798
    %v3801 = vsel %vm803, %v3797, 0
    %v3804 = vsel %vm803, %v3799, 0
    %3806 = vmatpush.bf16.xpose.msra.mxu0 0
    %3807 = vmatpush.bf16.xpose.msra.mxu0 0
    %3808 = vmatpush.bf16.xpose.msra.mxu0 0
    %3809 = vmatpush.bf16.xpose.msra.mxu0 0
    %3810 = vmatpush.bf16.xpose.msra.mxu0 0
    %3811 = vmatpush.bf16.xpose.msra.mxu0 0
    %3812 = vmatpush.bf16.xpose.msra.mxu0 0
    %3813 = vmatpush.bf16.xpose.msra.mxu0 %v3804
    %3814 = vmatmul.bf16.gmra.mxu0 %v3801
    %v3815 = vpop.f32.mrf.mxu0
    %v3816 = vadd.f32 0.0, %v3815
    %v3817 = vpop.f32.mrf.mxu0
    %3818 = vdwg.mxu0
    %v3819 = vsel %vm2185, %v3793, -inf
    %3820 = vmax.xlane.f32.xlu0 %v3819
    %v3821 = vpop.xlane.xlu0 %3820
    %v3822 = vsel %vm2185, %v3816, -inf
    %3823 = vmax.xlane.f32.xlu0 %v3822
    %v3824 = vpop.xlane.xlu0 %3823
    %v3825 = vsub.f32 %v3793, %v3821
    %v3826 = vsub.f32 %v3816, %v3824
    %v3827 = vmul.f32 %v3825, 1.442695
    %v3828 = vpow.pop %v3827
    %v3829 = vmul.f32 %v3826, 1.442695
    %v3830 = vpow.pop %v3829
    %v3831 = vsel %vm2185, %v3828, 0.0
    %3832 = vadd.xlane.f32.xlu0 %v3831
    %v3833 = vpop.xlane.xlu0 %3832
    %v3834 = vsel %vm2185, %v3830, 0.0
    %3835 = vadd.xlane.f32.xlu0 %v3834
    %v3836 = vpop.xlane.xlu0 %3835
    %v3837 = vrcp.pop %v3833
    %v3838 = vrcp.pop %v3836
    %v3839 = vmul.f32 %v3828, %v3837
    %v3840 = vmul.f32 %v3830, %v3838
    %v3841 = vpack.c.bf16 %v3839, %v3839
    %v3842 = vpack.c.bf16 %v3840, %v3840
    %v3844 = vsel %vm2332, %v3841, 0
    %v3847 = vsel %vm2336, %v3771, 0
    %3849 = vmatpush.bf16.msra.mxu0 0
    %3850 = vmatpush.bf16.msra.mxu0 0
    %3851 = vmatpush.bf16.msra.mxu0 0
    %3852 = vmatpush.bf16.msra.mxu0 0
    %3853 = vmatpush.bf16.msra.mxu0 0
    %3854 = vmatpush.bf16.msra.mxu0 0
    %3855 = vmatpush.bf16.msra.mxu0 0
    %3856 = vmatpush.bf16.msra.mxu0 %v3847
    %3857 = vmatmul.bf16.gmra.mxu0 %v3844
    %v3858 = vpop.f32.mrf.mxu0
    %v3859 = vadd.f32 0.0, %v3858
    %v3860 = vpop.f32.mrf.mxu0
    %3861 = vdwg.mxu0
    %v3863 = vsel %vm2332, %v3842, 0
    %v3866 = vsel %vm2336, %v3772, 0
    %3868 = vmatpush.bf16.msra.mxu0 0
    %3869 = vmatpush.bf16.msra.mxu0 0
    %3870 = vmatpush.bf16.msra.mxu0 0
    %3871 = vmatpush.bf16.msra.mxu0 0
    %3872 = vmatpush.bf16.msra.mxu0 0
    %3873 = vmatpush.bf16.msra.mxu0 0
    %3874 = vmatpush.bf16.msra.mxu0 0
    %3875 = vmatpush.bf16.msra.mxu0 %v3866
    %3876 = vmatmul.bf16.gmra.mxu0 %v3863
    %v3877 = vpop.f32.mrf.mxu0
    %v3878 = vadd.f32 0.0, %v3877
    %v3879 = vpop.f32.mrf.mxu0
    %3880 = vdwg.mxu0
    %v3881 = vadd.f32 %v3732, %v3859
    %v3882 = vadd.f32 %v3733, %v3878
    %v3883 = vld [vmem:[#allocation4 + $0x1d] ss:$0 sm:$0xff]
    %v3885 = vrot.slane %v3883, 4
    %v3887 = vadd.f32 %v3881, %v3883
    %v3888 = vadd.f32 %v3882, %v3885
    %3891 = vst [vmem:[#allocation1] ss:$2 sm:$0xff] %v3887
    %s3892 = scalar_lea.vmem [#allocation1], 1
    %3893 = vst [vmem:[%s3892] ss:$2 sm:$0xff] %v3888
    %v3894 = vld.sshfl [vmem:[#allocation1] sm:$0xff pattern:$0x75316420]
    %v3896 = vadd.f32 %v3066, %v3894
    %3897 = vadd.xlane.f32.xlu0 %v3896
    %v3898 = vpop.xlane.xlu0 %3897
    %v3899 = vmul.f32 %v3898, %v2730
    %v3900 = vsub.f32 %v3896, %v3899
    %v3901 = vmul.f32 %v3900, %v3900
    %3902 = vadd.xlane.f32.xlu0 %v3901
    %v3903 = vpop.xlane.xlu0 %3902
    %v3904 = vmul.f32 %v3903, %v2730
    %v3905 = vadd.f32 %v3904, 1e-05
    %v3906 = vrsqrt.pop %v3905
    %v3907 = vmul.f32 %v3906, %v3905
    %v3908 = vmul.f32 %v3907, %v3906
    %v3909 = vmul.f32 0.5, %v3908
    %v3910 = vsub.f32 1.5, %v3909
    %v3911 = vmul.f32 %v3906, %v3910
    %vm3912 = vweird.f32 %v3905
    %vm3913 = vweird.f32 %v3906
    %vm3914 = vmor %vm3912, %vm3913
    %v3915 = vsel %vm3914, %v3906, %v3911
    %v3916 = vmul.f32 %v3900, %v3915
    %v3917 = vld [vmem:[#allocation4 + $0x33] ss:$0 sm:$0xff]
    %v3918 = vmul.f32 %v3916, %v3917
    %v3919 = vld [vmem:[#allocation4 + $0x35] ss:$0 sm:$0xff]
    %v3920 = vadd.f32 %v3918, %v3919
    %v3921 = vld [vmem:[#allocation2 + $0x80] sm:$0xff]
    %v3922 = vld [vmem:[#allocation2 + $0x88] sm:$0xff]
    %v3923 = vld [vmem:[#allocation2 + $0x90] sm:$0xff]
    %v3924 = vld [vmem:[#allocation2 + $0x98] sm:$0xff]
    %v3925 = vld [vmem:[#allocation2 + $0xa0] sm:$0xff]
    %v3926 = vld [vmem:[#allocation2 + $0xa8] sm:$0xff]
    %v3927 = vld [vmem:[#allocation2 + $0xb0] sm:$0xff]
    %v3928 = vld [vmem:[#allocation2 + $0xb8] sm:$0xff]
    %v3929 = vld [vmem:[#allocation2 + $0xc0] sm:$0xff]
    %v3930 = vld [vmem:[#allocation2 + $0xc8] sm:$0xff]
    %v3931 = vld [vmem:[#allocation2 + $0xd0] sm:$0xff]
    %v3932 = vld [vmem:[#allocation2 + $0xd8] sm:$0xff]
    %v3933 = vld [vmem:[#allocation2 + $0xe0] sm:$0xff]
    %v3934 = vld [vmem:[#allocation2 + $0xe8] sm:$0xff]
    %v3935 = vld [vmem:[#allocation2 + $0xf0] sm:$0xff]
    %v3936 = vld [vmem:[#allocation2 + $0xf8] sm:$0xff]
    %v3937 = vpack.c.bf16 %v3920, %v3920
    %s3938 = scalar_lea.vmem [#allocation4], 31
    %v3939 = vld [vmem:[%s3938] ss:$8 sm:$0x3]
    %v3941 = vperm.slane %v3939, 0
    %v3942 = vperm.slane %v3939, 1
    %v3961 = vunpack.c.l.b16 %v3921
    %v3962 = vunpack.c.h.b16 %v3921
    %v3963 = vunpack.c.l.b16 %v3922
    %v3964 = vunpack.c.h.b16 %v3922
    %v3965 = vunpack.c.l.b16 %v3923
    %v3966 = vunpack.c.h.b16 %v3923
    %v3967 = vunpack.c.l.b16 %v3924
    %v3968 = vunpack.c.h.b16 %v3924
    %v3969 = vunpack.c.l.b16 %v3925
    %v3970 = vunpack.c.h.b16 %v3925
    %v3971 = vunpack.c.l.b16 %v3926
    %v3972 = vunpack.c.h.b16 %v3926
    %v3973 = vunpack.c.l.b16 %v3927
    %v3974 = vunpack.c.h.b16 %v3927
    %v3975 = vunpack.c.l.b16 %v3928
    %v3976 = vunpack.c.h.b16 %v3928
    %v3977 = vunpack.c.l.b16 %v3929
    %v3978 = vunpack.c.h.b16 %v3929
    %v3979 = vunpack.c.l.b16 %v3930
    %v3980 = vunpack.c.h.b16 %v3930
    %v3981 = vunpack.c.l.b16 %v3931
    %v3982 = vunpack.c.h.b16 %v3931
    %v3983 = vunpack.c.l.b16 %v3932
    %v3984 = vunpack.c.h.b16 %v3932
    %v3985 = vunpack.c.l.b16 %v3933
    %v3986 = vunpack.c.h.b16 %v3933
    %v3987 = vunpack.c.l.b16 %v3934
    %v3988 = vunpack.c.h.b16 %v3934
    %v3989 = vunpack.c.l.b16 %v3935
    %v3990 = vunpack.c.h.b16 %v3935
    %v3991 = vunpack.c.l.b16 %v3936
    %v3992 = vunpack.c.h.b16 %v3936
    %v3993 = vpack.c.b16 %v3963, %v3961
    %v3994 = vpack.c.b16 %v3964, %v3962
    %v3995 = vpack.c.b16 %v3967, %v3965
    %v3996 = vpack.c.b16 %v3968, %v3966
    %v3997 = vpack.c.b16 %v3971, %v3969
    %v3998 = vpack.c.b16 %v3972, %v3970
    %v3999 = vpack.c.b16 %v3975, %v3973
    %v4000 = vpack.c.b16 %v3976, %v3974
    %v4001 = vpack.c.b16 %v3979, %v3977
    %v4002 = vpack.c.b16 %v3980, %v3978
    %v4003 = vpack.c.b16 %v3983, %v3981
    %v4004 = vpack.c.b16 %v3984, %v3982
    %v4005 = vpack.c.b16 %v3987, %v3985
    %v4006 = vpack.c.b16 %v3988, %v3986
    %v4007 = vpack.c.b16 %v3991, %v3989
    %v4008 = vpack.c.b16 %v3992, %v3990
    %4025 = vmatpush.bf16.msra.mxu0 %v4007
    %4026 = vmatpush.bf16.msra.mxu0 %v4005
    %4027 = vmatpush.bf16.msra.mxu0 %v4003
    %4028 = vmatpush.bf16.msra.mxu0 %v4001
    %4029 = vmatpush.bf16.msra.mxu0 %v3999
    %4030 = vmatpush.bf16.msra.mxu0 %v3997
    %4031 = vmatpush.bf16.msra.mxu0 %v3995
    %4032 = vmatpush.bf16.msra.mxu0 %v3993
    %4033 = vmatmul.bf16.gmra.mxu0 %v3937
    %v4034 = vpop.f32.mrf.mxu0
    %v4035 = vadd.f32 %v3941, %v4034
    %v4036 = vpop.f32.mrf.mxu0
    %4037 = vdwg.mxu0
    %4038 = vmatpush.bf16.msra.mxu0 %v4008
    %4039 = vmatpush.bf16.msra.mxu0 %v4006
    %4040 = vmatpush.bf16.msra.mxu0 %v4004
    %4041 = vmatpush.bf16.msra.mxu0 %v4002
    %4042 = vmatpush.bf16.msra.mxu0 %v4000
    %4043 = vmatpush.bf16.msra.mxu0 %v3998
    %4044 = vmatpush.bf16.msra.mxu0 %v3996
    %4045 = vmatpush.bf16.msra.mxu0 %v3994
    %4046 = vmatmul.bf16.gmra.mxu0 %v3937
    %v4047 = vpop.f32.mrf.mxu0
    %v4048 = vadd.f32 %v3942, %v4047
    %v4049 = vpop.f32.mrf.mxu0
    %4050 = vdwg.mxu0
    %v4051 = vmax.f32 %v4035, 0.0
    %v4052 = vmax.f32 %v4048, 0.0
    %v4053 = vld [vmem:[%s3 + $0x360] sm:$0xf]
    %v4054 = vld [vmem:[%s3 + $0x364] sm:$0xf]
    %v4055 = vld [vmem:[%s3 + $0x368] sm:$0xf]
    %v4056 = vld [vmem:[%s3 + $0x36c] sm:$0xf]
    %v4057 = vld [vmem:[%s3 + $0x370] sm:$0xf]
    %v4058 = vld [vmem:[%s3 + $0x374] sm:$0xf]
    %v4059 = vld [vmem:[%s3 + $0x378] sm:$0xf]
    %v4060 = vld [vmem:[%s3 + $0x37c] sm:$0xf]
    %v4061 = vld [vmem:[%s3 + $0x380] sm:$0xf]
    %v4062 = vld [vmem:[%s3 + $0x384] sm:$0xf]
    %v4063 = vld [vmem:[%s3 + $0x388] sm:$0xf]
    %v4064 = vld [vmem:[%s3 + $0x38c] sm:$0xf]
    %v4065 = vld [vmem:[%s3 + $0x390] sm:$0xf]
    %v4066 = vld [vmem:[%s3 + $0x394] sm:$0xf]
    %v4067 = vld [vmem:[%s3 + $0x398] sm:$0xf]
    %v4068 = vld [vmem:[%s3 + $0x39c] sm:$0xf]
    %v4069 = vld [vmem:[%s3 + $0x3a0] sm:$0xf]
    %v4070 = vld [vmem:[%s3 + $0x3a4] sm:$0xf]
    %v4071 = vld [vmem:[%s3 + $0x3a8] sm:$0xf]
    %v4072 = vld [vmem:[%s3 + $0x3ac] sm:$0xf]
    %v4073 = vld [vmem:[%s3 + $0x3b0] sm:$0xf]
    %v4074 = vld [vmem:[%s3 + $0x3b4] sm:$0xf]
    %v4075 = vld [vmem:[%s3 + $0x3b8] sm:$0xf]
    %v4076 = vld [vmem:[%s3 + $0x3bc] sm:$0xf]
    %v4077 = vld [vmem:[%s3 + $0x3c0] sm:$0xf]
    %v4078 = vld [vmem:[%s3 + $0x3c4] sm:$0xf]
    %v4079 = vld [vmem:[%s3 + $0x3c8] sm:$0xf]
    %v4080 = vld [vmem:[%s3 + $0x3cc] sm:$0xf]
    %v4081 = vld [vmem:[%s3 + $0x3d0] sm:$0xf]
    %v4082 = vld [vmem:[%s3 + $0x3d4] sm:$0xf]
    %v4083 = vld [vmem:[%s3 + $0x3d8] sm:$0xf]
    %v4084 = vld [vmem:[%s3 + $0x3dc] sm:$0xf]
    %v4085 = vpack.c.bf16 %v4051, %v4051
    %v4086 = vpack.c.bf16 %v4052, %v4052
    %v4087 = vld [vmem:[#allocation4 + $0x31] ss:$0 sm:$0xff]
    %v4120 = vunpack.c.l.b16 %v4053
    %v4121 = vunpack.c.l.b16 %v4054
    %v4122 = vunpack.c.l.b16 %v4055
    %v4123 = vunpack.c.l.b16 %v4056
    %v4124 = vunpack.c.l.b16 %v4057
    %v4125 = vunpack.c.l.b16 %v4058
    %v4126 = vunpack.c.l.b16 %v4059
    %v4127 = vunpack.c.l.b16 %v4060
    %v4128 = vunpack.c.l.b16 %v4061
    %v4129 = vunpack.c.l.b16 %v4062
    %v4130 = vunpack.c.l.b16 %v4063
    %v4131 = vunpack.c.l.b16 %v4064
    %v4132 = vunpack.c.l.b16 %v4065
    %v4133 = vunpack.c.l.b16 %v4066
    %v4134 = vunpack.c.l.b16 %v4067
    %v4135 = vunpack.c.l.b16 %v4068
    %v4136 = vunpack.c.l.b16 %v4069
    %v4137 = vunpack.c.l.b16 %v4070
    %v4138 = vunpack.c.l.b16 %v4071
    %v4139 = vunpack.c.l.b16 %v4072
    %v4140 = vunpack.c.l.b16 %v4073
    %v4141 = vunpack.c.l.b16 %v4074
    %v4142 = vunpack.c.l.b16 %v4075
    %v4143 = vunpack.c.l.b16 %v4076
    %v4144 = vunpack.c.l.b16 %v4077
    %v4145 = vunpack.c.l.b16 %v4078
    %v4146 = vunpack.c.l.b16 %v4079
    %v4147 = vunpack.c.l.b16 %v4080
    %v4148 = vunpack.c.l.b16 %v4081
    %v4149 = vunpack.c.l.b16 %v4082
    %v4150 = vunpack.c.l.b16 %v4083
    %v4151 = vunpack.c.l.b16 %v4084
    %v4152 = vpack.c.b16 %v4121, %v4120
    %v4153 = vpack.c.b16 %v4123, %v4122
    %v4154 = vpack.c.b16 %v4125, %v4124
    %v4155 = vpack.c.b16 %v4127, %v4126
    %v4156 = vpack.c.b16 %v4129, %v4128
    %v4157 = vpack.c.b16 %v4131, %v4130
    %v4158 = vpack.c.b16 %v4133, %v4132
    %v4159 = vpack.c.b16 %v4135, %v4134
    %v4160 = vpack.c.b16 %v4137, %v4136
    %v4161 = vpack.c.b16 %v4139, %v4138
    %v4162 = vpack.c.b16 %v4141, %v4140
    %v4163 = vpack.c.b16 %v4143, %v4142
    %v4164 = vpack.c.b16 %v4145, %v4144
    %v4165 = vpack.c.b16 %v4147, %v4146
    %v4166 = vpack.c.b16 %v4149, %v4148
    %v4167 = vpack.c.b16 %v4151, %v4150
    %4184 = vmatpush.bf16.msra.mxu0 %v4159
    %4185 = vmatpush.bf16.msra.mxu0 %v4158
    %4186 = vmatpush.bf16.msra.mxu0 %v4157
    %4187 = vmatpush.bf16.msra.mxu0 %v4156
    %4188 = vmatpush.bf16.msra.mxu0 %v4155
    %4189 = vmatpush.bf16.msra.mxu0 %v4154
    %4190 = vmatpush.bf16.msra.mxu0 %v4153
    %4191 = vmatpush.bf16.msra.mxu0 %v4152
    %4192 = vmatmul.bf16.gmra.mxu0 %v4085
    %v4193 = vpop.f32.mrf.mxu0
    %v4194 = vadd.f32 %v4087, %v4193
    %v4195 = vpop.f32.mrf.mxu0
    %4196 = vdwg.mxu0
    %4197 = vmatpush.bf16.msra.mxu0 %v4167
    %4198 = vmatpush.bf16.msra.mxu0 %v4166
    %4199 = vmatpush.bf16.msra.mxu0 %v4165
    %4200 = vmatpush.bf16.msra.mxu0 %v4164
    %4201 = vmatpush.bf16.msra.mxu0 %v4163
    %4202 = vmatpush.bf16.msra.mxu0 %v4162
    %4203 = vmatpush.bf16.msra.mxu0 %v4161
    %4204 = vmatpush.bf16.msra.mxu0 %v4160
    %4205 = vmatmul.bf16.gmra.mxu0 %v4086
    %v4206 = vpop.f32.mrf.mxu0
    %v4207 = vadd.f32 %v4194, %v4206
    %v4208 = vpop.f32.mrf.mxu0
    %4209 = vdwg.mxu0
    %v4210 = vadd.f32 %v3920, %v4207
    %4211 = vadd.xlane.f32.xlu0 %v4210
    %v4212 = vpop.xlane.xlu0 %4211
    %v4213 = vmul.f32 %v4212, %v2730
    %v4214 = vsub.f32 %v4210, %v4213
    %v4215 = vmul.f32 %v4214, %v4214
    %4216 = vadd.xlane.f32.xlu0 %v4215
    %v4217 = vpop.xlane.xlu0 %4216
    %v4218 = vmul.f32 %v4217, %v2730
    %v4219 = vadd.f32 %v4218, 1e-05
    %v4220 = vrsqrt.pop %v4219
    %v4221 = vmul.f32 %v4220, %v4219
    %v4222 = vmul.f32 %v4221, %v4220
    %v4223 = vmul.f32 0.5, %v4222
    %v4224 = vsub.f32 1.5, %v4223
    %v4225 = vmul.f32 %v4220, %v4224
    %vm4226 = vweird.f32 %v4219
    %vm4227 = vweird.f32 %v4220
    %vm4228 = vmor %vm4226, %vm4227
    %v4229 = vsel %vm4228, %v4220, %v4225
    %v4230 = vmul.f32 %v4214, %v4229
    %v4231 = vld [vmem:[#allocation4 + $0x37] ss:$0 sm:$0xff]
    %v4232 = vmul.f32 %v4230, %v4231
    %v4233 = vld [vmem:[#allocation4 + $0x49] ss:$0 sm:$0xff]
    %v4234 = vadd.f32 %v4232, %v4233
    %4235 = vst [vmem:[%s7] sm:$0xff] %v4234
    %v4237 = vrot.slane %v4234, 4
    %s4239 = scalar_lea.vmem [#allocation4], 74
    %v4240 = vld [vmem:[%s4239] ss:$8 sm:$0x3]
    %v4241 = vld [vmem:[#allocation2 + $0x100] sm:$0xff]
    %v4242 = vld [vmem:[#allocation2 + $0x108] sm:$0xff]
    %v4243 = vld [vmem:[#allocation2 + $0x110] sm:$0xff]
    %v4244 = vld [vmem:[#allocation2 + $0x118] sm:$0xff]
    %v4245 = vld [vmem:[#allocation2 + $0x120] sm:$0xff]
    %v4246 = vld [vmem:[#allocation2 + $0x128] sm:$0xff]
    %v4247 = vld [vmem:[#allocation2 + $0x130] sm:$0xff]
    %v4248 = vld [vmem:[#allocation2 + $0x138] sm:$0xff]
    %v4249 = vld [vmem:[#allocation2 + $0x140] sm:$0xff]
    %v4250 = vld [vmem:[#allocation2 + $0x148] sm:$0xff]
    %v4251 = vld [vmem:[#allocation2 + $0x150] sm:$0xff]
    %v4252 = vld [vmem:[#allocation2 + $0x158] sm:$0xff]
    %v4253 = vld [vmem:[#allocation2 + $0x160] sm:$0xff]
    %v4254 = vld [vmem:[#allocation2 + $0x168] sm:$0xff]
    %v4255 = vld [vmem:[#allocation2 + $0x170] sm:$0xff]
    %v4256 = vld [vmem:[#allocation2 + $0x178] sm:$0xff]
    %v4257 = vpack.c.bf16 %v4234, %v4234
    %v4258 = vpack.c.bf16 %v4237, %v4237
    %v4261 = vunpack.c.l.b16 %v4257
    %v4262 = vunpack.c.l.b16 %v4258
    %v4263 = vrot.slane %v4262, 7
    %v4264 = vsel %vm1424, %v4263, %v4261
    %v4265 = vpack.c.b16 %v4264, %v4264
    %v4283 = vunpack.c.l.b16 %v4241
    %v4284 = vunpack.c.h.b16 %v4241
    %v4285 = vunpack.c.l.b16 %v4242
    %v4286 = vunpack.c.h.b16 %v4242
    %v4287 = vunpack.c.l.b16 %v4243
    %v4288 = vunpack.c.h.b16 %v4243
    %v4289 = vunpack.c.l.b16 %v4244
    %v4290 = vunpack.c.h.b16 %v4244
    %v4291 = vunpack.c.l.b16 %v4245
    %v4292 = vunpack.c.h.b16 %v4245
    %v4293 = vunpack.c.l.b16 %v4246
    %v4294 = vunpack.c.h.b16 %v4246
    %v4295 = vunpack.c.l.b16 %v4247
    %v4296 = vunpack.c.h.b16 %v4247
    %v4297 = vunpack.c.l.b16 %v4248
    %v4298 = vunpack.c.h.b16 %v4248
    %v4299 = vunpack.c.l.b16 %v4249
    %v4300 = vunpack.c.h.b16 %v4249
    %v4301 = vunpack.c.l.b16 %v4250
    %v4302 = vunpack.c.h.b16 %v4250
    %v4303 = vunpack.c.l.b16 %v4251
    %v4304 = vunpack.c.h.b16 %v4251
    %v4305 = vunpack.c.l.b16 %v4252
    %v4306 = vunpack.c.h.b16 %v4252
    %v4307 = vunpack.c.l.b16 %v4253
    %v4308 = vunpack.c.h.b16 %v4253
    %v4309 = vunpack.c.l.b16 %v4254
    %v4310 = vunpack.c.h.b16 %v4254
    %v4311 = vunpack.c.l.b16 %v4255
    %v4312 = vunpack.c.h.b16 %v4255
    %v4313 = vunpack.c.l.b16 %v4256
    %v4314 = vunpack.c.h.b16 %v4256
    %v4315 = vpack.c.b16 %v4285, %v4283
    %v4316 = vpack.c.b16 %v4286, %v4284
    %v4317 = vpack.c.b16 %v4289, %v4287
    %v4318 = vpack.c.b16 %v4290, %v4288
    %v4319 = vpack.c.b16 %v4293, %v4291
    %v4320 = vpack.c.b16 %v4294, %v4292
    %v4321 = vpack.c.b16 %v4297, %v4295
    %v4322 = vpack.c.b16 %v4298, %v4296
    %v4323 = vpack.c.b16 %v4301, %v4299
    %v4324 = vpack.c.b16 %v4302, %v4300
    %v4325 = vpack.c.b16 %v4305, %v4303
    %v4326 = vpack.c.b16 %v4306, %v4304
    %v4327 = vpack.c.b16 %v4309, %v4307
    %v4328 = vpack.c.b16 %v4310, %v4308
    %v4329 = vpack.c.b16 %v4313, %v4311
    %v4330 = vpack.c.b16 %v4314, %v4312
    %4347 = vmatpush.bf16.msra.mxu0 %v4329
    %4348 = vmatpush.bf16.msra.mxu0 %v4327
    %4349 = vmatpush.bf16.msra.mxu0 %v4325
    %4350 = vmatpush.bf16.msra.mxu0 %v4323
    %4351 = vmatpush.bf16.msra.mxu0 %v4321
    %4352 = vmatpush.bf16.msra.mxu0 %v4319
    %4353 = vmatpush.bf16.msra.mxu0 %v4317
    %4354 = vmatpush.bf16.msra.mxu0 %v4315
    %4355 = vmatmul.bf16.gmra.mxu0 %v4265
    %v4356 = vpop.f32.mrf.mxu0
    %v4357 = vadd.f32 0.0, %v4356
    %v4358 = vpop.f32.mrf.mxu0
    %4359 = vdwg.mxu0
    %4360 = vmatpush.bf16.msra.mxu0 %v4330
    %4361 = vmatpush.bf16.msra.mxu0 %v4328
    %4362 = vmatpush.bf16.msra.mxu0 %v4326
    %4363 = vmatpush.bf16.msra.mxu0 %v4324
    %4364 = vmatpush.bf16.msra.mxu0 %v4322
    %4365 = vmatpush.bf16.msra.mxu0 %v4320
    %4366 = vmatpush.bf16.msra.mxu0 %v4318
    %4367 = vmatpush.bf16.msra.mxu0 %v4316
    %4368 = vmatmul.bf16.gmra.mxu0 %v4265
    %v4369 = vpop.f32.mrf.mxu0
    %v4370 = vadd.f32 0.0, %v4369
    %v4371 = vpop.f32.mrf.mxu0
    %4372 = vdwg.mxu0
    %v4374 = vperm.slane %v4240, 0
    %v4375 = vperm.slane %v4240, 1
    %v4378 = vadd.f32 %v4374, %v4357
    %v4379 = vadd.f32 %v4375, %v4370
    %v4380 = vld [vmem:[#allocation2 + $0x180] sm:$0xff]
    %v4381 = vld [vmem:[#allocation2 + $0x188] sm:$0xff]
    %v4382 = vld [vmem:[#allocation2 + $0x190] sm:$0xff]
    %v4383 = vld [vmem:[#allocation2 + $0x198] sm:$0xff]
    %v4384 = vld [vmem:[#allocation2 + $0x1a0] sm:$0xff]
    %v4385 = vld [vmem:[#allocation2 + $0x1a8] sm:$0xff]
    %v4386 = vld [vmem:[#allocation2 + $0x1b0] sm:$0xff]
    %v4387 = vld [vmem:[#allocation2 + $0x1b8] sm:$0xff]
    %v4388 = vld [vmem:[#allocation2 + $0x1c0] sm:$0xff]
    %v4389 = vld [vmem:[#allocation2 + $0x1c8] sm:$0xff]
    %v4390 = vld [vmem:[#allocation2 + $0x1d0] sm:$0xff]
    %v4391 = vld [vmem:[#allocation2 + $0x1d8] sm:$0xff]
    %v4392 = vld [vmem:[#allocation2 + $0x1e0] sm:$0xff]
    %v4393 = vld [vmem:[#allocation2 + $0x1e8] sm:$0xff]
    %v4394 = vld [vmem:[#allocation2 + $0x1f0] sm:$0xff]
    %v4395 = vld [vmem:[#allocation2 + $0x1f8] sm:$0xff]
    %v4396 = vrot.slane %v4261, 1
    %v4397 = vsel %vm1424, %v4262, %v4396
    %v4398 = vpack.c.b16 %v4397, %v4397
    %v4416 = vunpack.c.l.b16 %v4380
    %v4417 = vunpack.c.h.b16 %v4380
    %v4418 = vunpack.c.l.b16 %v4381
    %v4419 = vunpack.c.h.b16 %v4381
    %v4420 = vunpack.c.l.b16 %v4382
    %v4421 = vunpack.c.h.b16 %v4382
    %v4422 = vunpack.c.l.b16 %v4383
    %v4423 = vunpack.c.h.b16 %v4383
    %v4424 = vunpack.c.l.b16 %v4384
    %v4425 = vunpack.c.h.b16 %v4384
    %v4426 = vunpack.c.l.b16 %v4385
    %v4427 = vunpack.c.h.b16 %v4385
    %v4428 = vunpack.c.l.b16 %v4386
    %v4429 = vunpack.c.h.b16 %v4386
    %v4430 = vunpack.c.l.b16 %v4387
    %v4431 = vunpack.c.h.b16 %v4387
    %v4432 = vunpack.c.l.b16 %v4388
    %v4433 = vunpack.c.h.b16 %v4388
    %v4434 = vunpack.c.l.b16 %v4389
    %v4435 = vunpack.c.h.b16 %v4389
    %v4436 = vunpack.c.l.b16 %v4390
    %v4437 = vunpack.c.h.b16 %v4390
    %v4438 = vunpack.c.l.b16 %v4391
    %v4439 = vunpack.c.h.b16 %v4391
    %v4440 = vunpack.c.l.b16 %v4392
    %v4441 = vunpack.c.h.b16 %v4392
    %v4442 = vunpack.c.l.b16 %v4393
    %v4443 = vunpack.c.h.b16 %v4393
    %v4444 = vunpack.c.l.b16 %v4394
    %v4445 = vunpack.c.h.b16 %v4394
    %v4446 = vunpack.c.l.b16 %v4395
    %v4447 = vunpack.c.h.b16 %v4395
    %v4448 = vpack.c.b16 %v4418, %v4416
    %v4449 = vpack.c.b16 %v4419, %v4417
    %v4450 = vpack.c.b16 %v4422, %v4420
    %v4451 = vpack.c.b16 %v4423, %v4421
    %v4452 = vpack.c.b16 %v4426, %v4424
    %v4453 = vpack.c.b16 %v4427, %v4425
    %v4454 = vpack.c.b16 %v4430, %v4428
    %v4455 = vpack.c.b16 %v4431, %v4429
    %v4456 = vpack.c.b16 %v4434, %v4432
    %v4457 = vpack.c.b16 %v4435, %v4433
    %v4458 = vpack.c.b16 %v4438, %v4436
    %v4459 = vpack.c.b16 %v4439, %v4437
    %v4460 = vpack.c.b16 %v4442, %v4440
    %v4461 = vpack.c.b16 %v4443, %v4441
    %v4462 = vpack.c.b16 %v4446, %v4444
    %v4463 = vpack.c.b16 %v4447, %v4445
    %4480 = vmatpush.bf16.msra.mxu0 %v4462
    %4481 = vmatpush.bf16.msra.mxu0 %v4460
    %4482 = vmatpush.bf16.msra.mxu0 %v4458
    %4483 = vmatpush.bf16.msra.mxu0 %v4456
    %4484 = vmatpush.bf16.msra.mxu0 %v4454
    %4485 = vmatpush.bf16.msra.mxu0 %v4452
    %4486 = vmatpush.bf16.msra.mxu0 %v4450
    %4487 = vmatpush.bf16.msra.mxu0 %v4448
    %4488 = vmatmul.bf16.gmra.mxu0 %v4398
    %v4489 = vpop.f32.mrf.mxu0
    %v4490 = vadd.f32 0.0, %v4489
    %v4491 = vpop.f32.mrf.mxu0
    %4492 = vdwg.mxu0
    %4493 = vmatpush.bf16.msra.mxu0 %v4463
    %4494 = vmatpush.bf16.msra.mxu0 %v4461
    %4495 = vmatpush.bf16.msra.mxu0 %v4459
    %4496 = vmatpush.bf16.msra.mxu0 %v4457
    %4497 = vmatpush.bf16.msra.mxu0 %v4455
    %4498 = vmatpush.bf16.msra.mxu0 %v4453
    %4499 = vmatpush.bf16.msra.mxu0 %v4451
    %4500 = vmatpush.bf16.msra.mxu0 %v4449
    %4501 = vmatmul.bf16.gmra.mxu0 %v4398
    %v4502 = vpop.f32.mrf.mxu0
    %v4503 = vadd.f32 0.0, %v4502
    %v4504 = vpop.f32.mrf.mxu0
    %4505 = vdwg.mxu0
    %v4506 = vadd.f32 %v4378, %v4490
    %v4507 = vadd.f32 %v4379, %v4503
    %v4508 = vld [vmem:[#allocation2 + $0x200] sm:$0xff]
    %v4509 = vld [vmem:[#allocation2 + $0x208] sm:$0xff]
    %v4510 = vld [vmem:[#allocation2 + $0x210] sm:$0xff]
    %v4511 = vld [vmem:[#allocation2 + $0x218] sm:$0xff]
    %v4512 = vld [vmem:[#allocation2 + $0x220] sm:$0xff]
    %v4513 = vld [vmem:[#allocation2 + $0x228] sm:$0xff]
    %v4514 = vld [vmem:[#allocation2 + $0x230] sm:$0xff]
    %v4515 = vld [vmem:[#allocation2 + $0x238] sm:$0xff]
    %v4516 = vld [vmem:[#allocation2 + $0x240] sm:$0xff]
    %v4517 = vld [vmem:[#allocation2 + $0x248] sm:$0xff]
    %v4518 = vld [vmem:[#allocation2 + $0x250] sm:$0xff]
    %v4519 = vld [vmem:[#allocation2 + $0x258] sm:$0xff]
    %v4520 = vld [vmem:[#allocation2 + $0x260] sm:$0xff]
    %v4521 = vld [vmem:[#allocation2 + $0x268] sm:$0xff]
    %v4522 = vld [vmem:[#allocation2 + $0x270] sm:$0xff]
    %v4523 = vld [vmem:[#allocation2 + $0x278] sm:$0xff]
    %v4524 = vrot.slane %v4261, 2
    %v4525 = vrot.slane %v4262, 1
    %v4526 = vsel %vm1424, %v4525, %v4524
    %v4527 = vpack.c.b16 %v4526, %v4526
    %v4545 = vunpack.c.l.b16 %v4508
    %v4546 = vunpack.c.h.b16 %v4508
    %v4547 = vunpack.c.l.b16 %v4509
    %v4548 = vunpack.c.h.b16 %v4509
    %v4549 = vunpack.c.l.b16 %v4510
    %v4550 = vunpack.c.h.b16 %v4510
    %v4551 = vunpack.c.l.b16 %v4511
    %v4552 = vunpack.c.h.b16 %v4511
    %v4553 = vunpack.c.l.b16 %v4512
    %v4554 = vunpack.c.h.b16 %v4512
    %v4555 = vunpack.c.l.b16 %v4513
    %v4556 = vunpack.c.h.b16 %v4513
    %v4557 = vunpack.c.l.b16 %v4514
    %v4558 = vunpack.c.h.b16 %v4514
    %v4559 = vunpack.c.l.b16 %v4515
    %v4560 = vunpack.c.h.b16 %v4515
    %v4561 = vunpack.c.l.b16 %v4516
    %v4562 = vunpack.c.h.b16 %v4516
    %v4563 = vunpack.c.l.b16 %v4517
    %v4564 = vunpack.c.h.b16 %v4517
    %v4565 = vunpack.c.l.b16 %v4518
    %v4566 = vunpack.c.h.b16 %v4518
    %v4567 = vunpack.c.l.b16 %v4519
    %v4568 = vunpack.c.h.b16 %v4519
    %v4569 = vunpack.c.l.b16 %v4520
    %v4570 = vunpack.c.h.b16 %v4520
    %v4571 = vunpack.c.l.b16 %v4521
    %v4572 = vunpack.c.h.b16 %v4521
    %v4573 = vunpack.c.l.b16 %v4522
    %v4574 = vunpack.c.h.b16 %v4522
    %v4575 = vunpack.c.l.b16 %v4523
    %v4576 = vunpack.c.h.b16 %v4523
    %v4577 = vpack.c.b16 %v4547, %v4545
    %v4578 = vpack.c.b16 %v4548, %v4546
    %v4579 = vpack.c.b16 %v4551, %v4549
    %v4580 = vpack.c.b16 %v4552, %v4550
    %v4581 = vpack.c.b16 %v4555, %v4553
    %v4582 = vpack.c.b16 %v4556, %v4554
    %v4583 = vpack.c.b16 %v4559, %v4557
    %v4584 = vpack.c.b16 %v4560, %v4558
    %v4585 = vpack.c.b16 %v4563, %v4561
    %v4586 = vpack.c.b16 %v4564, %v4562
    %v4587 = vpack.c.b16 %v4567, %v4565
    %v4588 = vpack.c.b16 %v4568, %v4566
    %v4589 = vpack.c.b16 %v4571, %v4569
    %v4590 = vpack.c.b16 %v4572, %v4570
    %v4591 = vpack.c.b16 %v4575, %v4573
    %v4592 = vpack.c.b16 %v4576, %v4574
    %4609 = vmatpush.bf16.msra.mxu0 %v4591
    %4610 = vmatpush.bf16.msra.mxu0 %v4589
    %4611 = vmatpush.bf16.msra.mxu0 %v4587
    %4612 = vmatpush.bf16.msra.mxu0 %v4585
    %4613 = vmatpush.bf16.msra.mxu0 %v4583
    %4614 = vmatpush.bf16.msra.mxu0 %v4581
    %4615 = vmatpush.bf16.msra.mxu0 %v4579
    %4616 = vmatpush.bf16.msra.mxu0 %v4577
    %4617 = vmatmul.bf16.gmra.mxu0 %v4527
    %v4618 = vpop.f32.mrf.mxu0
    %v4619 = vadd.f32 0.0, %v4618
    %v4620 = vpop.f32.mrf.mxu0
    %4621 = vdwg.mxu0
    %4622 = vmatpush.bf16.msra.mxu0 %v4592
    %4623 = vmatpush.bf16.msra.mxu0 %v4590
    %4624 = vmatpush.bf16.msra.mxu0 %v4588
    %4625 = vmatpush.bf16.msra.mxu0 %v4586
    %4626 = vmatpush.bf16.msra.mxu0 %v4584
    %4627 = vmatpush.bf16.msra.mxu0 %v4582
    %4628 = vmatpush.bf16.msra.mxu0 %v4580
    %4629 = vmatpush.bf16.msra.mxu0 %v4578
    %4630 = vmatmul.bf16.gmra.mxu0 %v4527
    %v4631 = vpop.f32.mrf.mxu0
    %v4632 = vadd.f32 0.0, %v4631
    %v4633 = vpop.f32.mrf.mxu0
    %4634 = vdwg.mxu0
    %v4635 = vadd.f32 %v4506, %v4619
    %v4636 = vadd.f32 %v4507, %v4632
    %v4637 = vld [vmem:[#allocation2 + $0x280] sm:$0xff]
    %v4638 = vld [vmem:[#allocation2 + $0x288] sm:$0xff]
    %v4639 = vld [vmem:[#allocation2 + $0x290] sm:$0xff]
    %v4640 = vld [vmem:[#allocation2 + $0x298] sm:$0xff]
    %v4641 = vld [vmem:[#allocation2 + $0x2a0] sm:$0xff]
    %v4642 = vld [vmem:[#allocation2 + $0x2a8] sm:$0xff]
    %v4643 = vld [vmem:[#allocation2 + $0x2b0] sm:$0xff]
    %v4644 = vld [vmem:[#allocation2 + $0x2b8] sm:$0xff]
    %v4645 = vld [vmem:[#allocation2 + $0x2c0] sm:$0xff]
    %v4646 = vld [vmem:[#allocation2 + $0x2c8] sm:$0xff]
    %v4647 = vld [vmem:[#allocation2 + $0x2d0] sm:$0xff]
    %v4648 = vld [vmem:[#allocation2 + $0x2d8] sm:$0xff]
    %v4649 = vld [vmem:[#allocation2 + $0x2e0] sm:$0xff]
    %v4650 = vld [vmem:[#allocation2 + $0x2e8] sm:$0xff]
    %v4651 = vld [vmem:[#allocation2 + $0x2f0] sm:$0xff]
    %v4652 = vld [vmem:[#allocation2 + $0x2f8] sm:$0xff]
    %v4653 = vrot.slane %v4261, 3
    %v4654 = vrot.slane %v4262, 2
    %v4655 = vsel %vm1424, %v4654, %v4653
    %v4656 = vpack.c.b16 %v4655, %v4655
    %v4674 = vunpack.c.l.b16 %v4637
    %v4675 = vunpack.c.h.b16 %v4637
    %v4676 = vunpack.c.l.b16 %v4638
    %v4677 = vunpack.c.h.b16 %v4638
    %v4678 = vunpack.c.l.b16 %v4639
    %v4679 = vunpack.c.h.b16 %v4639
    %v4680 = vunpack.c.l.b16 %v4640
    %v4681 = vunpack.c.h.b16 %v4640
    %v4682 = vunpack.c.l.b16 %v4641
    %v4683 = vunpack.c.h.b16 %v4641
    %v4684 = vunpack.c.l.b16 %v4642
    %v4685 = vunpack.c.h.b16 %v4642
    %v4686 = vunpack.c.l.b16 %v4643
    %v4687 = vunpack.c.h.b16 %v4643
    %v4688 = vunpack.c.l.b16 %v4644
    %v4689 = vunpack.c.h.b16 %v4644
    %v4690 = vunpack.c.l.b16 %v4645
    %v4691 = vunpack.c.h.b16 %v4645
    %v4692 = vunpack.c.l.b16 %v4646
    %v4693 = vunpack.c.h.b16 %v4646
    %v4694 = vunpack.c.l.b16 %v4647
    %v4695 = vunpack.c.h.b16 %v4647
    %v4696 = vunpack.c.l.b16 %v4648
    %v4697 = vunpack.c.h.b16 %v4648
    %v4698 = vunpack.c.l.b16 %v4649
    %v4699 = vunpack.c.h.b16 %v4649
    %v4700 = vunpack.c.l.b16 %v4650
    %v4701 = vunpack.c.h.b16 %v4650
    %v4702 = vunpack.c.l.b16 %v4651
    %v4703 = vunpack.c.h.b16 %v4651
    %v4704 = vunpack.c.l.b16 %v4652
    %v4705 = vunpack.c.h.b16 %v4652
    %v4706 = vpack.c.b16 %v4676, %v4674
    %v4707 = vpack.c.b16 %v4677, %v4675
    %v4708 = vpack.c.b16 %v4680, %v4678
    %v4709 = vpack.c.b16 %v4681, %v4679
    %v4710 = vpack.c.b16 %v4684, %v4682
    %v4711 = vpack.c.b16 %v4685, %v4683
    %v4712 = vpack.c.b16 %v4688, %v4686
    %v4713 = vpack.c.b16 %v4689, %v4687
    %v4714 = vpack.c.b16 %v4692, %v4690
    %v4715 = vpack.c.b16 %v4693, %v4691
    %v4716 = vpack.c.b16 %v4696, %v4694
    %v4717 = vpack.c.b16 %v4697, %v4695
    %v4718 = vpack.c.b16 %v4700, %v4698
    %v4719 = vpack.c.b16 %v4701, %v4699
    %v4720 = vpack.c.b16 %v4704, %v4702
    %v4721 = vpack.c.b16 %v4705, %v4703
    %4738 = vmatpush.bf16.msra.mxu0 %v4720
    %4739 = vmatpush.bf16.msra.mxu0 %v4718
    %4740 = vmatpush.bf16.msra.mxu0 %v4716
    %4741 = vmatpush.bf16.msra.mxu0 %v4714
    %4742 = vmatpush.bf16.msra.mxu0 %v4712
    %4743 = vmatpush.bf16.msra.mxu0 %v4710
    %4744 = vmatpush.bf16.msra.mxu0 %v4708
    %4745 = vmatpush.bf16.msra.mxu0 %v4706
    %4746 = vmatmul.bf16.gmra.mxu0 %v4656
    %v4747 = vpop.f32.mrf.mxu0
    %v4748 = vadd.f32 0.0, %v4747
    %v4749 = vpop.f32.mrf.mxu0
    %4750 = vdwg.mxu0
    %4751 = vmatpush.bf16.msra.mxu0 %v4721
    %4752 = vmatpush.bf16.msra.mxu0 %v4719
    %4753 = vmatpush.bf16.msra.mxu0 %v4717
    %4754 = vmatpush.bf16.msra.mxu0 %v4715
    %4755 = vmatpush.bf16.msra.mxu0 %v4713
    %4756 = vmatpush.bf16.msra.mxu0 %v4711
    %4757 = vmatpush.bf16.msra.mxu0 %v4709
    %4758 = vmatpush.bf16.msra.mxu0 %v4707
    %4759 = vmatmul.bf16.gmra.mxu0 %v4656
    %v4760 = vpop.f32.mrf.mxu0
    %v4761 = vadd.f32 0.0, %v4760
    %v4762 = vpop.f32.mrf.mxu0
    %4763 = vdwg.mxu0
    %v4764 = vadd.f32 %v4635, %v4748
    %v4765 = vadd.f32 %v4636, %v4761
    %v4766 = vmax.f32 %v4764, 0.0
    %v4767 = vmax.f32 %v4765, 0.0
    %v4768 = vld [vmem:[%s3 + $0x3e0] sm:$0xf]
    %v4769 = vld [vmem:[%s3 + $0x3e4] sm:$0xf]
    %v4770 = vld [vmem:[%s3 + $0x3e8] sm:$0xf]
    %v4771 = vld [vmem:[%s3 + $0x3ec] sm:$0xf]
    %v4772 = vld [vmem:[%s3 + $0x3f0] sm:$0xf]
    %v4773 = vld [vmem:[%s3 + $0x3f4] sm:$0xf]
    %v4774 = vld [vmem:[%s3 + $0x3f8] sm:$0xf]
    %v4775 = vld [vmem:[%s3 + $0x3fc] sm:$0xf]
    %v4776 = vld [vmem:[%s3 + $0x400] sm:$0xf]
    %v4777 = vld [vmem:[%s3 + $0x404] sm:$0xf]
    %v4778 = vld [vmem:[%s3 + $0x408] sm:$0xf]
    %v4779 = vld [vmem:[%s3 + $0x40c] sm:$0xf]
    %v4780 = vld [vmem:[%s3 + $0x410] sm:$0xf]
    %v4781 = vld [vmem:[%s3 + $0x414] sm:$0xf]
    %v4782 = vld [vmem:[%s3 + $0x418] sm:$0xf]
    %v4783 = vld [vmem:[%s3 + $0x41c] sm:$0xf]
    %v4784 = vld [vmem:[%s3 + $0x420] sm:$0xf]
    %v4785 = vld [vmem:[%s3 + $0x424] sm:$0xf]
    %v4786 = vld [vmem:[%s3 + $0x428] sm:$0xf]
    %v4787 = vld [vmem:[%s3 + $0x42c] sm:$0xf]
    %v4788 = vld [vmem:[%s3 + $0x430] sm:$0xf]
    %v4789 = vld [vmem:[%s3 + $0x434] sm:$0xf]
    %v4790 = vld [vmem:[%s3 + $0x438] sm:$0xf]
    %v4791 = vld [vmem:[%s3 + $0x43c] sm:$0xf]
    %v4792 = vld [vmem:[%s3 + $0x440] sm:$0xf]
    %v4793 = vld [vmem:[%s3 + $0x444] sm:$0xf]
    %v4794 = vld [vmem:[%s3 + $0x448] sm:$0xf]
    %v4795 = vld [vmem:[%s3 + $0x44c] sm:$0xf]
    %v4796 = vld [vmem:[%s3 + $0x450] sm:$0xf]
    %v4797 = vld [vmem:[%s3 + $0x454] sm:$0xf]
    %v4798 = vld [vmem:[%s3 + $0x458] sm:$0xf]
    %v4799 = vld [vmem:[%s3 + $0x45c] sm:$0xf]
    %v4800 = vpack.c.bf16 %v4766, %v4766
    %v4801 = vpack.c.bf16 %v4767, %v4767
    %v4802 = vld [vmem:[#allocation4 + $0x4b] ss:$0 sm:$0xff]
    %v4835 = vunpack.c.l.b16 %v4768
    %v4836 = vunpack.c.l.b16 %v4769
    %v4837 = vunpack.c.l.b16 %v4770
    %v4838 = vunpack.c.l.b16 %v4771
    %v4839 = vunpack.c.l.b16 %v4772
    %v4840 = vunpack.c.l.b16 %v4773
    %v4841 = vunpack.c.l.b16 %v4774
    %v4842 = vunpack.c.l.b16 %v4775
    %v4843 = vunpack.c.l.b16 %v4776
    %v4844 = vunpack.c.l.b16 %v4777
    %v4845 = vunpack.c.l.b16 %v4778
    %v4846 = vunpack.c.l.b16 %v4779
    %v4847 = vunpack.c.l.b16 %v4780
    %v4848 = vunpack.c.l.b16 %v4781
    %v4849 = vunpack.c.l.b16 %v4782
    %v4850 = vunpack.c.l.b16 %v4783
    %v4851 = vunpack.c.l.b16 %v4784
    %v4852 = vunpack.c.l.b16 %v4785
    %v4853 = vunpack.c.l.b16 %v4786
    %v4854 = vunpack.c.l.b16 %v4787
    %v4855 = vunpack.c.l.b16 %v4788
    %v4856 = vunpack.c.l.b16 %v4789
    %v4857 = vunpack.c.l.b16 %v4790
    %v4858 = vunpack.c.l.b16 %v4791
    %v4859 = vunpack.c.l.b16 %v4792
    %v4860 = vunpack.c.l.b16 %v4793
    %v4861 = vunpack.c.l.b16 %v4794
    %v4862 = vunpack.c.l.b16 %v4795
    %v4863 = vunpack.c.l.b16 %v4796
    %v4864 = vunpack.c.l.b16 %v4797
    %v4865 = vunpack.c.l.b16 %v4798
    %v4866 = vunpack.c.l.b16 %v4799
    %v4867 = vpack.c.b16 %v4836, %v4835
    %v4868 = vpack.c.b16 %v4838, %v4837
    %v4869 = vpack.c.b16 %v4840, %v4839
    %v4870 = vpack.c.b16 %v4842, %v4841
    %v4871 = vpack.c.b16 %v4844, %v4843
    %v4872 = vpack.c.b16 %v4846, %v4845
    %v4873 = vpack.c.b16 %v4848, %v4847
    %v4874 = vpack.c.b16 %v4850, %v4849
    %v4875 = vpack.c.b16 %v4852, %v4851
    %v4876 = vpack.c.b16 %v4854, %v4853
    %v4877 = vpack.c.b16 %v4856, %v4855
    %v4878 = vpack.c.b16 %v4858, %v4857
    %v4879 = vpack.c.b16 %v4860, %v4859
    %v4880 = vpack.c.b16 %v4862, %v4861
    %v4881 = vpack.c.b16 %v4864, %v4863
    %v4882 = vpack.c.b16 %v4866, %v4865
    %4899 = vmatpush.bf16.msra.mxu0 %v4874
    %4900 = vmatpush.bf16.msra.mxu0 %v4873
    %4901 = vmatpush.bf16.msra.mxu0 %v4872
    %4902 = vmatpush.bf16.msra.mxu0 %v4871
    %4903 = vmatpush.bf16.msra.mxu0 %v4870
    %4904 = vmatpush.bf16.msra.mxu0 %v4869
    %4905 = vmatpush.bf16.msra.mxu0 %v4868
    %4906 = vmatpush.bf16.msra.mxu0 %v4867
    %4907 = vmatmul.bf16.gmra.mxu0 %v4800
    %v4908 = vpop.f32.mrf.mxu0
    %v4909 = vadd.f32 %v4802, %v4908
    %v4910 = vpop.f32.mrf.mxu0
    %4911 = vdwg.mxu0
    %4912 = vmatpush.bf16.msra.mxu0 %v4882
    %4913 = vmatpush.bf16.msra.mxu0 %v4881
    %4914 = vmatpush.bf16.msra.mxu0 %v4880
    %4915 = vmatpush.bf16.msra.mxu0 %v4879
    %4916 = vmatpush.bf16.msra.mxu0 %v4878
    %4917 = vmatpush.bf16.msra.mxu0 %v4877
    %4918 = vmatpush.bf16.msra.mxu0 %v4876
    %4919 = vmatpush.bf16.msra.mxu0 %v4875
    %4920 = vmatmul.bf16.gmra.mxu0 %v4801
    %v4921 = vpop.f32.mrf.mxu0
    %v4922 = vadd.f32 %v4909, %v4921
    %v4923 = vpop.f32.mrf.mxu0
    %4924 = vdwg.mxu0
    %v4925 = vlaneseq
    %v4926 = vand.u32 %v4925, 127
    %vm4927 = vcmp.ge.s32.totalorder %v4926, 3
    %vm4928 = vcmp.lt.s32.totalorder %v4926, 6
    %vm4929 = vmand %vm4927, %vm4928
    %v4930 = vxor.u32 %v4922, 2147483648
    %v4931 = vmul.f32 %v4930, 1.442695
    %v4932 = vpow.pop %v4931
    %v4933 = vadd.f32 %v4932, 1.0
    %v4934 = vrcp.pop %v4933
    %v4935 = vmul.f32 %v4933, %v4934
    %v4936 = vsub.f32 1.0, %v4935
    %v4937 = vmul.f32 %v4934, %v4936
    %v4938 = vadd.f32 %v4934, %v4937
    %vm4939 = vweird.f32 %v4933
    %vm4940 = vweird.f32 %v4934
    %vm4941 = vmor %vm4939, %vm4940
    %v4942 = vsel %vm4941, %v4934, %v4938
    %v4943 = vand.u32 2147483647, %v4933
    %vm4944 = vcmp.eq.f32.partialorder %v4943, 8.507059e+37
    %v4945 = vand.u32 %v4933, 2147483648
    %v4946 = vor.u32 1.1754944e-38, %v4945
    %v4947 = vsel %vm4944, %v4946, %v4942
    %v4948 = vmul.f32 1.0, %v4947
    %v4949 = vsel %vm4929, %v4948, %v4922
    %4950 = vst [vmem:[%s8] sm:$0x3] %v4949
    // Predicated region
    $region38: #{forward.1} parent=1 // pred_check
      _
    $region39: #{forward.1} parent=1 // pred_check_branch
      %4952 = sbr.rel (0) target = $region41
    $region40: #{forward.1} parent=1 // pred_region
      _
    $region41: #{forward.1} parent=1 // pred_fallthru
      _
    // Predicated region
    $region42: #{forward.1} parent=1 // pred_check
      _
    $region43: #{forward.1} parent=1 // pred_check_branch
      %4954 = sbr.rel (0) target = $region45
    $region44: #{forward.1} parent=1 // pred_region
      _
    $region45: #{forward.1} parent=1 // pred_fallthru
      _
    // Predicated region
    $region46: #{forward.1} parent=1 // pred_check
      _
    $region47: #{forward.1} parent=1 // pred_check_branch
      %4956 = sbr.rel (0) target = $region49
    $region48: #{forward.1} parent=1 // pred_region
      _
    $region49: #{forward.1} parent=1 // pred_fallthru
      _
    // Predicated region
    $region50: #{forward.1} parent=1 // pred_check
      _
    $region51: #{forward.1} parent=1 // pred_check_branch
      %4958 = sbr.rel (0) target = $region53
    $region52: #{forward.1} parent=1 // pred_region
      _
    $region53: #{forward.1} parent=1 // pred_fallthru
      _
    %4959 = vsyncpa [#allocation3], 1
    %4960 = vsyncpa [#allocation5], 1

</llo_original>
